<compile_context>
chip_gen: v7x
topology: tpu7x:2x2x1
jax: 0.10.0
libtpu: 0.0.40
codegen_flags: <defaults>
</compile_context>

<pallas_src>
import functools

import jax
import jax.numpy as jnp
from jax import lax
from jax.experimental import pallas as pl
from jax.experimental.pallas import tpu as pltpu

HIDDEN = 256
NUM_LAYERS = 1
INPUT_LEN = 16


# ----------------------- fused LSTM + attention kernel ----------------------
def _fused_kernel(x_ref, wih_ref, whh_ref, b_ref, wqkv_hbm, wo_hbm,   # inputs
                  o_ref,                                               # output
                  wqkv_vmem, wo_vmem, dma_sem,                         # scratch
                  *, T, B_pad, B_real, H):
    # ---- kick off attention-weight DMAs; they overlap the recurrence ----
    qkv_cp = pltpu.make_async_copy(wqkv_hbm, wqkv_vmem, dma_sem.at[0])
    wo_cp = pltpu.make_async_copy(wo_hbm, wo_vmem, dma_sem.at[1])
    qkv_cp.start()
    wo_cp.start()

    # ---- hoisted input projection for all timesteps, fused bias, f32 acc ----
    # x_ref: (T*B_pad, I) bf16, wih_ref: (I, 4H) bf16, b_ref: (1, 4H) f32
    xw = (jnp.dot(x_ref[...], wih_ref[...],
                  preferred_element_type=jnp.float32)
          + b_ref[...])                                   # (T*B_pad, 4H) f32
    whh = whh_ref[...]                                    # (H, 4H) bf16

    h = jnp.zeros((B_pad, H), jnp.float32)
    c = jnp.zeros((B_pad, H), jnp.float32)

    # ---- LSTM recurrence, statically unrolled (T is small & static) ----
    # bf16 only on MXU inputs; gate activations and c/h updates stay f32.
    for t in range(T):
        gates = xw[t * B_pad:(t + 1) * B_pad, :] + jnp.dot(
            h.astype(jnp.bfloat16), whh,
            preferred_element_type=jnp.float32)           # (B_pad, 4H) f32
        # PyTorch gate order: input, forget, cell(g), output
        i_g = jax.nn.sigmoid(gates[:, 0 * H:1 * H])
        f_g = jax.nn.sigmoid(gates[:, 1 * H:2 * H])
        g_g = jnp.tanh(gates[:, 2 * H:3 * H])
        o_g = jax.nn.sigmoid(gates[:, 3 * H:4 * H])
        c = f_g * c + i_g * g_g
        h = o_g * jnp.tanh(c)

    # ---- attention epilogue on hn = h  (seq = B, channels = H, 1 head) ----
    qkv_cp.wait()
    wo_cp.wait()

    qkv = jnp.dot(h.astype(jnp.bfloat16), wqkv_vmem[...],
                  preferred_element_type=jnp.float32)     # (B_pad, 3H) f32
    q = qkv[:, 0 * H:1 * H]
    k = qkv[:, 1 * H:2 * H]
    v = qkv[:, 2 * H:3 * H]

    scale = 1.0 / jnp.sqrt(jnp.float32(H))
    # contract feature axes directly (trans_b semantics, no explicit transpose)
    s = lax.dot_general(q, k, (((1,), (1,)), ((), ())),
                        preferred_element_type=jnp.float32) * scale   # (B_pad, B_pad)

    # mask out padded batch rows so they never receive softmax weight
    col = lax.broadcasted_iota(jnp.int32, (B_pad, B_pad), 1)
    s = jnp.where(col < B_real, s, jnp.float32(-1e30))

    m = jnp.max(s, axis=-1, keepdims=True)
    p = jnp.exp(s - m)
    p = p / jnp.sum(p, axis=-1, keepdims=True)            # exact division

    ctx = jnp.dot(p, v, preferred_element_type=jnp.float32)           # (B_pad, H)
    o_ref[...] = jnp.dot(ctx.astype(jnp.bfloat16), wo_vmem[...],
                         preferred_element_type=jnp.float32)          # (B_pad, H)


# ------------------------- one-time weight preparation -----------------------
def prepare_params(params):
    """Hoisted, call ONCE: transpose / fuse / concat / bf16-cast the weights."""
    H = HIDDEN
    dt = jnp.bfloat16
    return {
        "wih_t": jnp.transpose(params["w_ih"]).astype(dt),            # (I, 4H)
        "whh_t": jnp.transpose(params["w_hh"]).astype(dt),            # (H, 4H)
        "b": (params["b_ih"] + params["b_hh"]).reshape(1, 4 * H)
             .astype(jnp.float32),                                    # (1, 4H)
        "wqkv": jnp.concatenate(
            [params["wq"], params["wk"], params["wv"]], axis=1).astype(dt),  # (H, 3H)
        "wo": params["wo"].astype(dt),                                 # (H, H)
    }


# ------------------------------ module wrapper ------------------------------
@jax.jit
def lstmmodule1_forward(x, prep):
    """x: (B, T, I) float32, prep: prepare_params(...) output.
    Returns attention(hn) of shape (1, B, HIDDEN)."""
    B, T, I = x.shape
    H = HIDDEN
    B_pad = max(8, ((B + 7) // 8) * 8)   # full sublane tile

    # (B, T, I) -> time-major, batch padded to B_pad, flattened to (T*B_pad, I)
    x_tm = jnp.transpose(x, (1, 0, 2))                       # (T, B, I)
    x_tm = jnp.pad(x_tm, ((0, 0), (0, B_pad - B), (0, 0)))   # (T, B_pad, I)
    x_flat = x_tm.reshape(T * B_pad, I).astype(jnp.bfloat16)

    kernel = functools.partial(_fused_kernel, T=T, B_pad=B_pad, B_real=B, H=H)
    vmem = pltpu.MemorySpace.VMEM

    out = pl.pallas_call(
        kernel,
        out_shape=jax.ShapeDtypeStruct((B_pad, H), jnp.float32),
        in_specs=[
            pl.BlockSpec(memory_space=vmem),     # x_flat
            pl.BlockSpec(memory_space=vmem),     # wih_t
            pl.BlockSpec(memory_space=vmem),     # whh_t
            pl.BlockSpec(memory_space=vmem),     # fused bias
            pl.BlockSpec(memory_space=pl.ANY),   # wqkv  (manual DMA, overlapped)
            pl.BlockSpec(memory_space=pl.ANY),   # wo    (manual DMA, overlapped)
        ],
        out_specs=pl.BlockSpec(memory_space=vmem),
        scratch_shapes=[
            pltpu.VMEM((H, 3 * H), jnp.bfloat16),   # wqkv landing buffer
            pltpu.VMEM((H, H), jnp.bfloat16),       # wo landing buffer
            pltpu.SemaphoreType.DMA((2,)),
        ],
    )(x_flat, prep["wih_t"], prep["whh_t"], prep["b"], prep["wqkv"], prep["wo"])

    # hn in PyTorch is (num_layers, B, H); attention is applied to that tensor.
    return out[:B].reshape(NUM_LAYERS, B, H)


if __name__ == "__main__":
    B, T, I, H = 2, 8, INPUT_LEN, HIDDEN
    key = jax.random.PRNGKey(0)
    keys = jax.random.split(key, 9)

    x = jax.random.normal(keys[0], (B, T, I), jnp.float32)

    # nn.LSTM default init: U(-1/sqrt(H), 1/sqrt(H))
    s_in = 1.0 / jnp.sqrt(jnp.float32(H))
    params = {
        "w_ih": jax.random.uniform(keys[1], (4 * H, I), jnp.float32, -s_in, s_in),
        "w_hh": jax.random.uniform(keys[2], (4 * H, H), jnp.float32, -s_in, s_in),
        "b_ih": jax.random.uniform(keys[3], (4 * H,), jnp.float32, -s_in, s_in),
        "b_hh": jax.random.uniform(keys[4], (4 * H,), jnp.float32, -s_in, s_in),
        # attention (n_channels=256, n_head=1) projection weights
        "wq": jax.random.normal(keys[5], (H, H), jnp.float32) * 0.02,
        "wk": jax.random.normal(keys[6], (H, H), jnp.float32) * 0.02,
        "wv": jax.random.normal(keys[7], (H, H), jnp.float32) * 0.02,
        "wo": jax.random.normal(keys[8], (H, H), jnp.float32) * 0.02,
    }

    prep = prepare_params(params)              # one-time weight preprocessing
    out = lstmmodule1_forward(x, prep)         # (1, B, 256)
    jax.block_until_ready(out)
    assert out.shape == (NUM_LAYERS, B, H)
    assert bool(jnp.all(jnp.isfinite(out)))
    print("KERNEL_OK")
</pallas_src>

<mosaic_0001>
module attributes {stable_mosaic.version = 11 : i64} {
  func.func @_fused_kernel(%arg0: memref<64x16xbf16, #tpu.memory_space<vmem>>, %arg1: memref<16x1024xbf16, #tpu.memory_space<vmem>>, %arg2: memref<256x1024xbf16, #tpu.memory_space<vmem>>, %arg3: memref<1x1024xf32, #tpu.memory_space<vmem>>, %arg4: memref<256x768xbf16, #tpu.memory_space<any>>, %arg5: memref<256x256xbf16, #tpu.memory_space<any>>, %arg6: memref<8x256xf32, #tpu.memory_space<vmem>>, %arg7: memref<256x768xbf16, #tpu.memory_space<vmem>>, %arg8: memref<256x256xbf16, #tpu.memory_space<vmem>>, %arg9: memref<2x!tpu.dma_semaphore, #tpu.memory_space<semaphore_mem>>) attributes {dimension_semantics = [], scalar_prefetch = 0 : i64, scratch_operands = 3 : i64, tpu.core_type = #tpu.core_type<tc>} {
    %c0_i32 = arith.constant 0 : i32
    %0 = tpu.memref_slice %arg9[%c0_i32] : memref<2x!tpu.dma_semaphore, #tpu.memory_space<semaphore_mem>> -> memref<1x!tpu.dma_semaphore, #tpu.memory_space<semaphore_mem>>
    %1 = tpu.memref_squeeze %0 : memref<1x!tpu.dma_semaphore, #tpu.memory_space<semaphore_mem>> -> memref<!tpu.dma_semaphore, #tpu.memory_space<semaphore_mem>>
    tpu.enqueue_dma source(%arg4 : memref<256x768xbf16, #tpu.memory_space<any>>) target(%arg7 : memref<256x768xbf16, #tpu.memory_space<vmem>>) target_semaphore(%1 : memref<!tpu.dma_semaphore, #tpu.memory_space<semaphore_mem>>)
    %c1_i32 = arith.constant 1 : i32
    %2 = tpu.memref_slice %arg9[%c1_i32] : memref<2x!tpu.dma_semaphore, #tpu.memory_space<semaphore_mem>> -> memref<1x!tpu.dma_semaphore, #tpu.memory_space<semaphore_mem>>
    %3 = tpu.memref_squeeze %2 : memref<1x!tpu.dma_semaphore, #tpu.memory_space<semaphore_mem>> -> memref<!tpu.dma_semaphore, #tpu.memory_space<semaphore_mem>>
    tpu.enqueue_dma source(%arg5 : memref<256x256xbf16, #tpu.memory_space<any>>) target(%arg8 : memref<256x256xbf16, #tpu.memory_space<vmem>>) target_semaphore(%3 : memref<!tpu.dma_semaphore, #tpu.memory_space<semaphore_mem>>)
    %c0 = arith.constant 0 : index
    %c0_0 = arith.constant 0 : index
    %4 = vector.load %arg0[%c0, %c0_0] : memref<64x16xbf16, #tpu.memory_space<vmem>>, vector<64x16xbf16>
    %c0_1 = arith.constant 0 : index
    %c0_2 = arith.constant 0 : index
    %5 = vector.load %arg1[%c0_1, %c0_2] : memref<16x1024xbf16, #tpu.memory_space<vmem>>, vector<16x1024xbf16>
    %cst = arith.constant dense<0.000000e+00> : vector<64x1024xf32>
    %6 = tpu.matmul %4, %5, %cst {dimension_numbers = #tpu.dot_dimension_numbers<[1], [0], [0], [1], [0, 0, 1, 1], [], []>} : vector<64x16xbf16>, vector<16x1024xbf16>, vector<64x1024xf32> -> vector<64x1024xf32>
    %c0_3 = arith.constant 0 : index
    %c0_4 = arith.constant 0 : index
    %7 = vector.load %arg3[%c0_3, %c0_4] : memref<1x1024xf32, #tpu.memory_space<vmem>>, vector<1x1024xf32>
    %8 = vector.broadcast %7 : vector<1x1024xf32> to vector<64x1024xf32>
    %9 = arith.addf %6, %8 : vector<64x1024xf32>
    %c0_5 = arith.constant 0 : index
    %c0_6 = arith.constant 0 : index
    %10 = vector.load %arg2[%c0_5, %c0_6] : memref<256x1024xbf16, #tpu.memory_space<vmem>>, vector<256x1024xbf16>
    %cst_7 = arith.constant 0.000000e+00 : f32
    %11 = vector.broadcast %cst_7 : f32 to vector<8x256xf32>
    %cst_8 = arith.constant 0.000000e+00 : f32
    %12 = vector.broadcast %cst_8 : f32 to vector<8x256xf32>
    %13 = vector.extract_strided_slice %9 {offsets = [0, 0], sizes = [8, 1024], strides = [1, 1]} : vector<64x1024xf32> to vector<8x1024xf32>
    %14 = arith.truncf %11 : vector<8x256xf32> to vector<8x256xbf16>
    %cst_9 = arith.constant dense<0.000000e+00> : vector<8x1024xf32>
    %15 = tpu.matmul %14, %10, %cst_9 {dimension_numbers = #tpu.dot_dimension_numbers<[1], [0], [0], [1], [0, 0, 1, 1], [], []>} : vector<8x256xbf16>, vector<256x1024xbf16>, vector<8x1024xf32> -> vector<8x1024xf32>
    %16 = arith.addf %13, %15 : vector<8x1024xf32>
    %17 = vector.extract_strided_slice %16 {offsets = [0, 0], sizes = [8, 256], strides = [1, 1]} : vector<8x1024xf32> to vector<8x256xf32>
    %18 = arith.negf %17 : vector<8x256xf32>
    %19 = math.exp %18 : vector<8x256xf32>
    %cst_10 = arith.constant 1.000000e+00 : f32
    %20 = vector.broadcast %cst_10 : f32 to vector<8x256xf32>
    %21 = arith.addf %20, %19 : vector<8x256xf32>
    %22 = arith.divf %20, %21 : vector<8x256xf32>
    %23 = vector.extract_strided_slice %16 {offsets = [0, 256], sizes = [8, 256], strides = [1, 1]} : vector<8x1024xf32> to vector<8x256xf32>
    %24 = arith.negf %23 : vector<8x256xf32>
    %25 = math.exp %24 : vector<8x256xf32>
    %cst_11 = arith.constant 1.000000e+00 : f32
    %26 = vector.broadcast %cst_11 : f32 to vector<8x256xf32>
    %27 = arith.addf %26, %25 : vector<8x256xf32>
    %28 = arith.divf %26, %27 : vector<8x256xf32>
    %29 = vector.extract_strided_slice %16 {offsets = [0, 512], sizes = [8, 256], strides = [1, 1]} : vector<8x1024xf32> to vector<8x256xf32>
    %30 = math.tanh %29 : vector<8x256xf32>
    %31 = vector.extract_strided_slice %16 {offsets = [0, 768], sizes = [8, 256], strides = [1, 1]} : vector<8x1024xf32> to vector<8x256xf32>
    %32 = arith.negf %31 : vector<8x256xf32>
    %33 = math.exp %32 : vector<8x256xf32>
    %cst_12 = arith.constant 1.000000e+00 : f32
    %34 = vector.broadcast %cst_12 : f32 to vector<8x256xf32>
    %35 = arith.addf %34, %33 : vector<8x256xf32>
    %36 = arith.divf %34, %35 : vector<8x256xf32>
    %37 = arith.mulf %28, %12 : vector<8x256xf32>
    %38 = arith.mulf %22, %30 : vector<8x256xf32>
    %39 = arith.addf %37, %38 : vector<8x256xf32>
    %40 = math.tanh %39 : vector<8x256xf32>
    %41 = arith.mulf %36, %40 : vector<8x256xf32>
    %42 = vector.extract_strided_slice %9 {offsets = [8, 0], sizes = [8, 1024], strides = [1, 1]} : vector<64x1024xf32> to vector<8x1024xf32>
    %43 = arith.truncf %41 : vector<8x256xf32> to vector<8x256xbf16>
    %cst_13 = arith.constant dense<0.000000e+00> : vector<8x1024xf32>
    %44 = tpu.matmul %43, %10, %cst_13 {dimension_numbers = #tpu.dot_dimension_numbers<[1], [0], [0], [1], [0, 0, 1, 1], [], []>} : vector<8x256xbf16>, vector<256x1024xbf16>, vector<8x1024xf32> -> vector<8x1024xf32>
    %45 = arith.addf %42, %44 : vector<8x1024xf32>
    %46 = vector.extract_strided_slice %45 {offsets = [0, 0], sizes = [8, 256], strides = [1, 1]} : vector<8x1024xf32> to vector<8x256xf32>
    %47 = arith.negf %46 : vector<8x256xf32>
    %48 = math.exp %47 : vector<8x256xf32>
    %cst_14 = arith.constant 1.000000e+00 : f32
    %49 = vector.broadcast %cst_14 : f32 to vector<8x256xf32>
    %50 = arith.addf %49, %48 : vector<8x256xf32>
    %51 = arith.divf %49, %50 : vector<8x256xf32>
    %52 = vector.extract_strided_slice %45 {offsets = [0, 256], sizes = [8, 256], strides = [1, 1]} : vector<8x1024xf32> to vector<8x256xf32>
    %53 = arith.negf %52 : vector<8x256xf32>
    %54 = math.exp %53 : vector<8x256xf32>
    %cst_15 = arith.constant 1.000000e+00 : f32
    %55 = vector.broadcast %cst_15 : f32 to vector<8x256xf32>
    %56 = arith.addf %55, %54 : vector<8x256xf32>
    %57 = arith.divf %55, %56 : vector<8x256xf32>
    %58 = vector.extract_strided_slice %45 {offsets = [0, 512], sizes = [8, 256], strides = [1, 1]} : vector<8x1024xf32> to vector<8x256xf32>
    %59 = math.tanh %58 : vector<8x256xf32>
    %60 = vector.extract_strided_slice %45 {offsets = [0, 768], sizes = [8, 256], strides = [1, 1]} : vector<8x1024xf32> to vector<8x256xf32>
    %61 = arith.negf %60 : vector<8x256xf32>
    %62 = math.exp %61 : vector<8x256xf32>
    %cst_16 = arith.constant 1.000000e+00 : f32
    %63 = vector.broadcast %cst_16 : f32 to vector<8x256xf32>
    %64 = arith.addf %63, %62 : vector<8x256xf32>
    %65 = arith.divf %63, %64 : vector<8x256xf32>
    %66 = arith.mulf %57, %39 : vector<8x256xf32>
    %67 = arith.mulf %51, %59 : vector<8x256xf32>
    %68 = arith.addf %66, %67 : vector<8x256xf32>
    %69 = math.tanh %68 : vector<8x256xf32>
    %70 = arith.mulf %65, %69 : vector<8x256xf32>
    %71 = vector.extract_strided_slice %9 {offsets = [16, 0], sizes = [8, 1024], strides = [1, 1]} : vector<64x1024xf32> to vector<8x1024xf32>
    %72 = arith.truncf %70 : vector<8x256xf32> to vector<8x256xbf16>
    %cst_17 = arith.constant dense<0.000000e+00> : vector<8x1024xf32>
    %73 = tpu.matmul %72, %10, %cst_17 {dimension_numbers = #tpu.dot_dimension_numbers<[1], [0], [0], [1], [0, 0, 1, 1], [], []>} : vector<8x256xbf16>, vector<256x1024xbf16>, vector<8x1024xf32> -> vector<8x1024xf32>
    %74 = arith.addf %71, %73 : vector<8x1024xf32>
    %75 = vector.extract_strided_slice %74 {offsets = [0, 0], sizes = [8, 256], strides = [1, 1]} : vector<8x1024xf32> to vector<8x256xf32>
    %76 = arith.negf %75 : vector<8x256xf32>
    %77 = math.exp %76 : vector<8x256xf32>
    %cst_18 = arith.constant 1.000000e+00 : f32
    %78 = vector.broadcast %cst_18 : f32 to vector<8x256xf32>
    %79 = arith.addf %78, %77 : vector<8x256xf32>
    %80 = arith.divf %78, %79 : vector<8x256xf32>
    %81 = vector.extract_strided_slice %74 {offsets = [0, 256], sizes = [8, 256], strides = [1, 1]} : vector<8x1024xf32> to vector<8x256xf32>
    %82 = arith.negf %81 : vector<8x256xf32>
    %83 = math.exp %82 : vector<8x256xf32>
    %cst_19 = arith.constant 1.000000e+00 : f32
    %84 = vector.broadcast %cst_19 : f32 to vector<8x256xf32>
    %85 = arith.addf %84, %83 : vector<8x256xf32>
    %86 = arith.divf %84, %85 : vector<8x256xf32>
    %87 = vector.extract_strided_slice %74 {offsets = [0, 512], sizes = [8, 256], strides = [1, 1]} : vector<8x1024xf32> to vector<8x256xf32>
    %88 = math.tanh %87 : vector<8x256xf32>
    %89 = vector.extract_strided_slice %74 {offsets = [0, 768], sizes = [8, 256], strides = [1, 1]} : vector<8x1024xf32> to vector<8x256xf32>
    %90 = arith.negf %89 : vector<8x256xf32>
    %91 = math.exp %90 : vector<8x256xf32>
    %cst_20 = arith.constant 1.000000e+00 : f32
    %92 = vector.broadcast %cst_20 : f32 to vector<8x256xf32>
    %93 = arith.addf %92, %91 : vector<8x256xf32>
    %94 = arith.divf %92, %93 : vector<8x256xf32>
    %95 = arith.mulf %86, %68 : vector<8x256xf32>
    %96 = arith.mulf %80, %88 : vector<8x256xf32>
    %97 = arith.addf %95, %96 : vector<8x256xf32>
    %98 = math.tanh %97 : vector<8x256xf32>
    %99 = arith.mulf %94, %98 : vector<8x256xf32>
    %100 = vector.extract_strided_slice %9 {offsets = [24, 0], sizes = [8, 1024], strides = [1, 1]} : vector<64x1024xf32> to vector<8x1024xf32>
    %101 = arith.truncf %99 : vector<8x256xf32> to vector<8x256xbf16>
    %cst_21 = arith.constant dense<0.000000e+00> : vector<8x1024xf32>
    %102 = tpu.matmul %101, %10, %cst_21 {dimension_numbers = #tpu.dot_dimension_numbers<[1], [0], [0], [1], [0, 0, 1, 1], [], []>} : vector<8x256xbf16>, vector<256x1024xbf16>, vector<8x1024xf32> -> vector<8x1024xf32>
    %103 = arith.addf %100, %102 : vector<8x1024xf32>
    %104 = vector.extract_strided_slice %103 {offsets = [0, 0], sizes = [8, 256], strides = [1, 1]} : vector<8x1024xf32> to vector<8x256xf32>
    %105 = arith.negf %104 : vector<8x256xf32>
    %106 = math.exp %105 : vector<8x256xf32>
    %cst_22 = arith.constant 1.000000e+00 : f32
    %107 = vector.broadcast %cst_22 : f32 to vector<8x256xf32>
    %108 = arith.addf %107, %106 : vector<8x256xf32>
    %109 = arith.divf %107, %108 : vector<8x256xf32>
    %110 = vector.extract_strided_slice %103 {offsets = [0, 256], sizes = [8, 256], strides = [1, 1]} : vector<8x1024xf32> to vector<8x256xf32>
    %111 = arith.negf %110 : vector<8x256xf32>
    %112 = math.exp %111 : vector<8x256xf32>
    %cst_23 = arith.constant 1.000000e+00 : f32
    %113 = vector.broadcast %cst_23 : f32 to vector<8x256xf32>
    %114 = arith.addf %113, %112 : vector<8x256xf32>
    %115 = arith.divf %113, %114 : vector<8x256xf32>
    %116 = vector.extract_strided_slice %103 {offsets = [0, 512], sizes = [8, 256], strides = [1, 1]} : vector<8x1024xf32> to vector<8x256xf32>
    %117 = math.tanh %116 : vector<8x256xf32>
    %118 = vector.extract_strided_slice %103 {offsets = [0, 768], sizes = [8, 256], strides = [1, 1]} : vector<8x1024xf32> to vector<8x256xf32>
    %119 = arith.negf %118 : vector<8x256xf32>
    %120 = math.exp %119 : vector<8x256xf32>
    %cst_24 = arith.constant 1.000000e+00 : f32
    %121 = vector.broadcast %cst_24 : f32 to vector<8x256xf32>
    %122 = arith.addf %121, %120 : vector<8x256xf32>
    %123 = arith.divf %121, %122 : vector<8x256xf32>
    %124 = arith.mulf %115, %97 : vector<8x256xf32>
    %125 = arith.mulf %109, %117 : vector<8x256xf32>
    %126 = arith.addf %124, %125 : vector<8x256xf32>
    %127 = math.tanh %126 : vector<8x256xf32>
    %128 = arith.mulf %123, %127 : vector<8x256xf32>
    %129 = vector.extract_strided_slice %9 {offsets = [32, 0], sizes = [8, 1024], strides = [1, 1]} : vector<64x1024xf32> to vector<8x1024xf32>
    %130 = arith.truncf %128 : vector<8x256xf32> to vector<8x256xbf16>
    %cst_25 = arith.constant dense<0.000000e+00> : vector<8x1024xf32>
    %131 = tpu.matmul %130, %10, %cst_25 {dimension_numbers = #tpu.dot_dimension_numbers<[1], [0], [0], [1], [0, 0, 1, 1], [], []>} : vector<8x256xbf16>, vector<256x1024xbf16>, vector<8x1024xf32> -> vector<8x1024xf32>
    %132 = arith.addf %129, %131 : vector<8x1024xf32>
    %133 = vector.extract_strided_slice %132 {offsets = [0, 0], sizes = [8, 256], strides = [1, 1]} : vector<8x1024xf32> to vector<8x256xf32>
    %134 = arith.negf %133 : vector<8x256xf32>
    %135 = math.exp %134 : vector<8x256xf32>
    %cst_26 = arith.constant 1.000000e+00 : f32
    %136 = vector.broadcast %cst_26 : f32 to vector<8x256xf32>
    %137 = arith.addf %136, %135 : vector<8x256xf32>
    %138 = arith.divf %136, %137 : vector<8x256xf32>
    %139 = vector.extract_strided_slice %132 {offsets = [0, 256], sizes = [8, 256], strides = [1, 1]} : vector<8x1024xf32> to vector<8x256xf32>
    %140 = arith.negf %139 : vector<8x256xf32>
    %141 = math.exp %140 : vector<8x256xf32>
    %cst_27 = arith.constant 1.000000e+00 : f32
    %142 = vector.broadcast %cst_27 : f32 to vector<8x256xf32>
    %143 = arith.addf %142, %141 : vector<8x256xf32>
    %144 = arith.divf %142, %143 : vector<8x256xf32>
    %145 = vector.extract_strided_slice %132 {offsets = [0, 512], sizes = [8, 256], strides = [1, 1]} : vector<8x1024xf32> to vector<8x256xf32>
    %146 = math.tanh %145 : vector<8x256xf32>
    %147 = vector.extract_strided_slice %132 {offsets = [0, 768], sizes = [8, 256], strides = [1, 1]} : vector<8x1024xf32> to vector<8x256xf32>
    %148 = arith.negf %147 : vector<8x256xf32>
    %149 = math.exp %148 : vector<8x256xf32>
    %cst_28 = arith.constant 1.000000e+00 : f32
    %150 = vector.broadcast %cst_28 : f32 to vector<8x256xf32>
    %151 = arith.addf %150, %149 : vector<8x256xf32>
    %152 = arith.divf %150, %151 : vector<8x256xf32>
    %153 = arith.mulf %144, %126 : vector<8x256xf32>
    %154 = arith.mulf %138, %146 : vector<8x256xf32>
    %155 = arith.addf %153, %154 : vector<8x256xf32>
    %156 = math.tanh %155 : vector<8x256xf32>
    %157 = arith.mulf %152, %156 : vector<8x256xf32>
    %158 = vector.extract_strided_slice %9 {offsets = [40, 0], sizes = [8, 1024], strides = [1, 1]} : vector<64x1024xf32> to vector<8x1024xf32>
    %159 = arith.truncf %157 : vector<8x256xf32> to vector<8x256xbf16>
    %cst_29 = arith.constant dense<0.000000e+00> : vector<8x1024xf32>
    %160 = tpu.matmul %159, %10, %cst_29 {dimension_numbers = #tpu.dot_dimension_numbers<[1], [0], [0], [1], [0, 0, 1, 1], [], []>} : vector<8x256xbf16>, vector<256x1024xbf16>, vector<8x1024xf32> -> vector<8x1024xf32>
    %161 = arith.addf %158, %160 : vector<8x1024xf32>
    %162 = vector.extract_strided_slice %161 {offsets = [0, 0], sizes = [8, 256], strides = [1, 1]} : vector<8x1024xf32> to vector<8x256xf32>
    %163 = arith.negf %162 : vector<8x256xf32>
    %164 = math.exp %163 : vector<8x256xf32>
    %cst_30 = arith.constant 1.000000e+00 : f32
    %165 = vector.broadcast %cst_30 : f32 to vector<8x256xf32>
    %166 = arith.addf %165, %164 : vector<8x256xf32>
    %167 = arith.divf %165, %166 : vector<8x256xf32>
    %168 = vector.extract_strided_slice %161 {offsets = [0, 256], sizes = [8, 256], strides = [1, 1]} : vector<8x1024xf32> to vector<8x256xf32>
    %169 = arith.negf %168 : vector<8x256xf32>
    %170 = math.exp %169 : vector<8x256xf32>
    %cst_31 = arith.constant 1.000000e+00 : f32
    %171 = vector.broadcast %cst_31 : f32 to vector<8x256xf32>
    %172 = arith.addf %171, %170 : vector<8x256xf32>
    %173 = arith.divf %171, %172 : vector<8x256xf32>
    %174 = vector.extract_strided_slice %161 {offsets = [0, 512], sizes = [8, 256], strides = [1, 1]} : vector<8x1024xf32> to vector<8x256xf32>
    %175 = math.tanh %174 : vector<8x256xf32>
    %176 = vector.extract_strided_slice %161 {offsets = [0, 768], sizes = [8, 256], strides = [1, 1]} : vector<8x1024xf32> to vector<8x256xf32>
    %177 = arith.negf %176 : vector<8x256xf32>
    %178 = math.exp %177 : vector<8x256xf32>
    %cst_32 = arith.constant 1.000000e+00 : f32
    %179 = vector.broadcast %cst_32 : f32 to vector<8x256xf32>
    %180 = arith.addf %179, %178 : vector<8x256xf32>
    %181 = arith.divf %179, %180 : vector<8x256xf32>
    %182 = arith.mulf %173, %155 : vector<8x256xf32>
    %183 = arith.mulf %167, %175 : vector<8x256xf32>
    %184 = arith.addf %182, %183 : vector<8x256xf32>
    %185 = math.tanh %184 : vector<8x256xf32>
    %186 = arith.mulf %181, %185 : vector<8x256xf32>
    %187 = vector.extract_strided_slice %9 {offsets = [48, 0], sizes = [8, 1024], strides = [1, 1]} : vector<64x1024xf32> to vector<8x1024xf32>
    %188 = arith.truncf %186 : vector<8x256xf32> to vector<8x256xbf16>
    %cst_33 = arith.constant dense<0.000000e+00> : vector<8x1024xf32>
    %189 = tpu.matmul %188, %10, %cst_33 {dimension_numbers = #tpu.dot_dimension_numbers<[1], [0], [0], [1], [0, 0, 1, 1], [], []>} : vector<8x256xbf16>, vector<256x1024xbf16>, vector<8x1024xf32> -> vector<8x1024xf32>
    %190 = arith.addf %187, %189 : vector<8x1024xf32>
    %191 = vector.extract_strided_slice %190 {offsets = [0, 0], sizes = [8, 256], strides = [1, 1]} : vector<8x1024xf32> to vector<8x256xf32>
    %192 = arith.negf %191 : vector<8x256xf32>
    %193 = math.exp %192 : vector<8x256xf32>
    %cst_34 = arith.constant 1.000000e+00 : f32
    %194 = vector.broadcast %cst_34 : f32 to vector<8x256xf32>
    %195 = arith.addf %194, %193 : vector<8x256xf32>
    %196 = arith.divf %194, %195 : vector<8x256xf32>
    %197 = vector.extract_strided_slice %190 {offsets = [0, 256], sizes = [8, 256], strides = [1, 1]} : vector<8x1024xf32> to vector<8x256xf32>
    %198 = arith.negf %197 : vector<8x256xf32>
    %199 = math.exp %198 : vector<8x256xf32>
    %cst_35 = arith.constant 1.000000e+00 : f32
    %200 = vector.broadcast %cst_35 : f32 to vector<8x256xf32>
    %201 = arith.addf %200, %199 : vector<8x256xf32>
    %202 = arith.divf %200, %201 : vector<8x256xf32>
    %203 = vector.extract_strided_slice %190 {offsets = [0, 512], sizes = [8, 256], strides = [1, 1]} : vector<8x1024xf32> to vector<8x256xf32>
    %204 = math.tanh %203 : vector<8x256xf32>
    %205 = vector.extract_strided_slice %190 {offsets = [0, 768], sizes = [8, 256], strides = [1, 1]} : vector<8x1024xf32> to vector<8x256xf32>
    %206 = arith.negf %205 : vector<8x256xf32>
    %207 = math.exp %206 : vector<8x256xf32>
    %cst_36 = arith.constant 1.000000e+00 : f32
    %208 = vector.broadcast %cst_36 : f32 to vector<8x256xf32>
    %209 = arith.addf %208, %207 : vector<8x256xf32>
    %210 = arith.divf %208, %209 : vector<8x256xf32>
    %211 = arith.mulf %202, %184 : vector<8x256xf32>
    %212 = arith.mulf %196, %204 : vector<8x256xf32>
    %213 = arith.addf %211, %212 : vector<8x256xf32>
    %214 = math.tanh %213 : vector<8x256xf32>
    %215 = arith.mulf %210, %214 : vector<8x256xf32>
    %216 = vector.extract_strided_slice %9 {offsets = [56, 0], sizes = [8, 1024], strides = [1, 1]} : vector<64x1024xf32> to vector<8x1024xf32>
    %217 = arith.truncf %215 : vector<8x256xf32> to vector<8x256xbf16>
    %cst_37 = arith.constant dense<0.000000e+00> : vector<8x1024xf32>
    %218 = tpu.matmul %217, %10, %cst_37 {dimension_numbers = #tpu.dot_dimension_numbers<[1], [0], [0], [1], [0, 0, 1, 1], [], []>} : vector<8x256xbf16>, vector<256x1024xbf16>, vector<8x1024xf32> -> vector<8x1024xf32>
    %219 = arith.addf %216, %218 : vector<8x1024xf32>
    %220 = vector.extract_strided_slice %219 {offsets = [0, 0], sizes = [8, 256], strides = [1, 1]} : vector<8x1024xf32> to vector<8x256xf32>
    %221 = arith.negf %220 : vector<8x256xf32>
    %222 = math.exp %221 : vector<8x256xf32>
    %cst_38 = arith.constant 1.000000e+00 : f32
    %223 = vector.broadcast %cst_38 : f32 to vector<8x256xf32>
    %224 = arith.addf %223, %222 : vector<8x256xf32>
    %225 = arith.divf %223, %224 : vector<8x256xf32>
    %226 = vector.extract_strided_slice %219 {offsets = [0, 256], sizes = [8, 256], strides = [1, 1]} : vector<8x1024xf32> to vector<8x256xf32>
    %227 = arith.negf %226 : vector<8x256xf32>
    %228 = math.exp %227 : vector<8x256xf32>
    %cst_39 = arith.constant 1.000000e+00 : f32
    %229 = vector.broadcast %cst_39 : f32 to vector<8x256xf32>
    %230 = arith.addf %229, %228 : vector<8x256xf32>
    %231 = arith.divf %229, %230 : vector<8x256xf32>
    %232 = vector.extract_strided_slice %219 {offsets = [0, 512], sizes = [8, 256], strides = [1, 1]} : vector<8x1024xf32> to vector<8x256xf32>
    %233 = math.tanh %232 : vector<8x256xf32>
    %234 = vector.extract_strided_slice %219 {offsets = [0, 768], sizes = [8, 256], strides = [1, 1]} : vector<8x1024xf32> to vector<8x256xf32>
    %235 = arith.negf %234 : vector<8x256xf32>
    %236 = math.exp %235 : vector<8x256xf32>
    %cst_40 = arith.constant 1.000000e+00 : f32
    %237 = vector.broadcast %cst_40 : f32 to vector<8x256xf32>
    %238 = arith.addf %237, %236 : vector<8x256xf32>
    %239 = arith.divf %237, %238 : vector<8x256xf32>
    %240 = arith.mulf %231, %213 : vector<8x256xf32>
    %241 = arith.mulf %225, %233 : vector<8x256xf32>
    %242 = arith.addf %240, %241 : vector<8x256xf32>
    %243 = math.tanh %242 : vector<8x256xf32>
    %244 = arith.mulf %239, %243 : vector<8x256xf32>
    %c0_i32_41 = arith.constant 0 : i32
    %245 = tpu.memref_slice %arg9[%c0_i32_41] : memref<2x!tpu.dma_semaphore, #tpu.memory_space<semaphore_mem>> -> memref<1x!tpu.dma_semaphore, #tpu.memory_space<semaphore_mem>>
    %246 = tpu.memref_squeeze %245 : memref<1x!tpu.dma_semaphore, #tpu.memory_space<semaphore_mem>> -> memref<!tpu.dma_semaphore, #tpu.memory_space<semaphore_mem>>
    tpu.wait_dma2 semaphore(%246 : memref<!tpu.dma_semaphore, #tpu.memory_space<semaphore_mem>>) src(%arg4 : memref<256x768xbf16, #tpu.memory_space<any>>) dst(%arg7 : memref<256x768xbf16, #tpu.memory_space<vmem>>)
    %c1_i32_42 = arith.constant 1 : i32
    %247 = tpu.memref_slice %arg9[%c1_i32_42] : memref<2x!tpu.dma_semaphore, #tpu.memory_space<semaphore_mem>> -> memref<1x!tpu.dma_semaphore, #tpu.memory_space<semaphore_mem>>
    %248 = tpu.memref_squeeze %247 : memref<1x!tpu.dma_semaphore, #tpu.memory_space<semaphore_mem>> -> memref<!tpu.dma_semaphore, #tpu.memory_space<semaphore_mem>>
    tpu.wait_dma2 semaphore(%248 : memref<!tpu.dma_semaphore, #tpu.memory_space<semaphore_mem>>) src(%arg5 : memref<256x256xbf16, #tpu.memory_space<any>>) dst(%arg8 : memref<256x256xbf16, #tpu.memory_space<vmem>>)
    %249 = arith.truncf %244 : vector<8x256xf32> to vector<8x256xbf16>
    %c0_43 = arith.constant 0 : index
    %c0_44 = arith.constant 0 : index
    %250 = vector.load %arg7[%c0_43, %c0_44] : memref<256x768xbf16, #tpu.memory_space<vmem>>, vector<256x768xbf16>
    %cst_45 = arith.constant dense<0.000000e+00> : vector<8x768xf32>
    %251 = tpu.matmul %249, %250, %cst_45 {dimension_numbers = #tpu.dot_dimension_numbers<[1], [0], [0], [1], [0, 0, 1, 1], [], []>} : vector<8x256xbf16>, vector<256x768xbf16>, vector<8x768xf32> -> vector<8x768xf32>
    %252 = vector.extract_strided_slice %251 {offsets = [0, 0], sizes = [8, 256], strides = [1, 1]} : vector<8x768xf32> to vector<8x256xf32>
    %253 = vector.extract_strided_slice %251 {offsets = [0, 256], sizes = [8, 256], strides = [1, 1]} : vector<8x768xf32> to vector<8x256xf32>
    %254 = vector.extract_strided_slice %251 {offsets = [0, 512], sizes = [8, 256], strides = [1, 1]} : vector<8x768xf32> to vector<8x256xf32>
    %cst_46 = arith.constant 2.560000e+02 : f32
    %255 = math.sqrt %cst_46 : f32
    %cst_47 = arith.constant 1.000000e+00 : f32
    %256 = arith.divf %cst_47, %255 : f32
    %cst_48 = arith.constant dense<0.000000e+00> : vector<8x8xf32>
    %257 = tpu.matmul %252, %253, %cst_48 {dimension_numbers = #tpu.dot_dimension_numbers<[1], [1], [0], [0], [0, 0, 1, 0], [], []>} : vector<8x256xf32>, vector<8x256xf32>, vector<8x8xf32> -> vector<8x8xf32>
    %258 = vector.broadcast %256 : f32 to vector<8x8xf32>
    %259 = arith.mulf %257, %258 : vector<8x8xf32>
    %260 = tpu.iota {dimensions = array<i32: 1>} : vector<8x8xi32>
    %c2_i32 = arith.constant 2 : i32
    %261 = vector.broadcast %c2_i32 : i32 to vector<8x8xi32>
    %262 = arith.cmpi slt, %260, %261 : vector<8x8xi32>
    %cst_49 = arith.constant -1.000000e+30 : f32
    %263 = vector.broadcast %cst_49 : f32 to vector<8x8xf32>
    %264 = arith.select %262, %259, %263 : vector<8x8xi1>, vector<8x8xf32>
    %cst_50 = arith.constant dense<0xFF800000> : vector<8xf32>
    %265 = vector.multi_reduction <maximumf>, %264, %cst_50 [1] : vector<8x8xf32> to vector<8xf32>
    %266 = vector.shape_cast %265 : vector<8xf32> to vector<8x1xf32>
    %267 = vector.broadcast %266 : vector<8x1xf32> to vector<8x8xf32>
    %268 = arith.subf %264, %267 : vector<8x8xf32>
    %269 = math.exp %268 : vector<8x8xf32>
    %cst_51 = arith.constant dense<0.000000e+00> : vector<8xf32>
    %270 = vector.multi_reduction <add>, %269, %cst_51 [1] : vector<8x8xf32> to vector<8xf32>
    %271 = vector.shape_cast %270 : vector<8xf32> to vector<8x1xf32>
    %272 = vector.broadcast %271 : vector<8x1xf32> to vector<8x8xf32>
    %273 = arith.divf %269, %272 : vector<8x8xf32>
    %cst_52 = arith.constant dense<0.000000e+00> : vector<8x256xf32>
    %274 = tpu.matmul %273, %254, %cst_52 {dimension_numbers = #tpu.dot_dimension_numbers<[1], [0], [0], [1], [0, 0, 1, 1], [], []>} : vector<8x8xf32>, vector<8x256xf32>, vector<8x256xf32> -> vector<8x256xf32>
    %275 = arith.truncf %274 : vector<8x256xf32> to vector<8x256xbf16>
    %c0_53 = arith.constant 0 : index
    %c0_54 = arith.constant 0 : index
    %276 = vector.load %arg8[%c0_53, %c0_54] : memref<256x256xbf16, #tpu.memory_space<vmem>>, vector<256x256xbf16>
    %cst_55 = arith.constant dense<0.000000e+00> : vector<8x256xf32>
    %277 = tpu.matmul %275, %276, %cst_55 {dimension_numbers = #tpu.dot_dimension_numbers<[1], [0], [0], [1], [0, 0, 1, 1], [], []>} : vector<8x256xbf16>, vector<256x256xbf16>, vector<8x256xf32> -> vector<8x256xf32>
    %c0_56 = arith.constant 0 : index
    %c0_57 = arith.constant 0 : index
    %278 = vector.load %arg6[%c0_56, %c0_57] : memref<8x256xf32, #tpu.memory_space<vmem>>, vector<8x256xf32>
    tpu.vector_store %arg6[%c0_56, %c0_57], %277 {strides = array<i32>} : memref<8x256xf32, #tpu.memory_space<vmem>>, vector<8x256xf32>,
    return
  }
}

</mosaic_0001>

<llo_original>
// kernel: lstmmodule1_forward.1
$region0: #{lstmmodule1_forward.1}
  #allocation0 [shape = 'u32[]', space=smem, size = 0x4, offset = 0x4, fixed_abs, tag = 'smem constant byte address 0x4 - core index']
  #allocation1 [shape = 'u32[144,128]{1,0:T(1,128)}', space=vmem, size = 0x12000, scoped, tag = 'internal scratch']
  #allocation2 [shape = 'bf16[256,768]{1,0:T(16,128)(2,1)}', space=vmem, size = 0x60000, scoped, tag = 'scratch operand']
  #allocation3 [shape = 'bf16[256,256]{1,0:T(16,128)(2,1)}', space=vmem, size = 0x20000, scoped, tag = 'scratch operand']
  #allocation4 [shape = 's32[2]{0}', space=sflag, size = 0x8, scoped, tag = 'scratch operand']
  #allocation7 [shape = 's32[]', space=sflag, size = 0x4, offset = 0, fixed_abs, tag = 'sflag constant byte address 0x0 - dummy sync flag']
  #allocation9 [shape = 's32[]', space=sflag, size = 0x4, offset = 0, fixed_abs, tag = 'sflag constant byte address 0x0 - dummy sync flag']
  %s0 = inlined_call_operand.vmem [shape: bf16[64,16], index: 0, kind: input, shape index: {}]
  %s1 = inlined_call_operand.vmem [shape: bf16[16,1024], index: 1, kind: input, shape index: {}]
  %s2 = inlined_call_operand.hbm [shape: bf16[256,1024], index: 2, kind: input, shape index: {}]
  %s3 = inlined_call_operand.vmem [shape: f32[1,1024], index: 3, kind: input, shape index: {}]
  %s4 = inlined_call_operand.hbm [shape: bf16[256,768], index: 4, kind: input, shape index: {}]
  %s5 = inlined_call_operand.hbm [shape: bf16[256,256], index: 5, kind: input, shape index: {}]
  %s6 = inlined_call_operand.vmem [shape: f32[8,256], index: 6, kind: output, shape index: {}]
  %s7 = sld [smem:[#allocation0]]
  $region30: #{lstmmodule1_forward.1} parent=0
    _
  %s9 = ssub.s32 1, %s7
  %s10 = scalar_select 0, %s9, %s7
  $region1: #{lstmmodule1_forward.1} parent=0
    #allocation5 [shape = 'u8[524288]{0}', space=vmem, size = 0x80000, scoped, tag = 'input window, operand 2, single buffered']
    #allocation6 [shape = 's32[1]{0}', space=sflag, size = 0x4, scoped, tag = 'scoped memory for lstmmodule1_forward.1']
    #allocation8 [shape = 'u32[9]{0}', space=smem, size = 0x24, scoped, tag = 'DMA stride descriptor']
    #allocation10 [shape = 'u32[9]{0}', space=smem, size = 0x24, scoped, tag = 'DMA stride descriptor']
    %11 = vsyncpa [#allocation6], 0
    // Predicated region
    $region2: #{lstmmodule1_forward.1} parent=1 // pred_check
      _
    $region3: #{lstmmodule1_forward.1} parent=1 // pred_check_branch
      %13 = sbr.rel (0) target = $region5
    $region4: #{lstmmodule1_forward.1} parent=1 // pred_region
      _
    $region5: #{lstmmodule1_forward.1} parent=1 // pred_fallthru
      _
    // Predicated region
    $region6: #{lstmmodule1_forward.1} parent=1 // pred_check
      _
    $region7: #{lstmmodule1_forward.1} parent=1 // pred_check_branch
      %15 = sbr.rel (0) target = $region9
    $region8: #{lstmmodule1_forward.1} parent=1 // pred_region
      _
    $region9: #{lstmmodule1_forward.1} parent=1 // pred_fallthru
      _
    // Predicated region
    $region10: #{lstmmodule1_forward.1} parent=1 // pred_check
      _
    $region11: #{lstmmodule1_forward.1} parent=1 // pred_check_branch
      %17 = sbr.rel (0) target = $region13
    $region12: #{lstmmodule1_forward.1} parent=1 // pred_region
      %s19 = ssub.s32 16384, 16384
      %20 = vsyncadd [#allocation6], %s19
      %s21 = sshll.u32 [#allocation5], 4
      %s22 = int_to_ptr.vmem [resolvable:$true] %s21
      %27 = dma.hbm_to_vmem [thread:$0]  %s2, 16384, %s22, [#allocation6], 512, 512, 32
    $region13: #{lstmmodule1_forward.1} parent=1 // pred_fallthru
      _
    // Predicated region
    $region14: #{lstmmodule1_forward.1} parent=1 // pred_check
      _
    $region15: #{lstmmodule1_forward.1} parent=1 // pred_check_branch
      %29 = sbr.rel (0) target = $region17
    $region16: #{lstmmodule1_forward.1} parent=1 // pred_region
      _
    $region17: #{lstmmodule1_forward.1} parent=1 // pred_fallthru
      _
    // Predicated region
    $region18: #{lstmmodule1_forward.1} parent=1 // pred_check
      _
    $region19: #{lstmmodule1_forward.1} parent=1 // pred_check_branch
      %31 = sbr.rel (0) target = $region21
    $region20: #{lstmmodule1_forward.1} parent=1 // pred_region
      %32 = dma.done [#allocation6], 16384
    $region21: #{lstmmodule1_forward.1} parent=1 // pred_fallthru
      _
    %s35 = sshll.u32 1, 14
    %s36 = sxor.u32 4294967295, %s35
    %s38 = sld [smem:[#allocation0]]
    %s39 = sadd.s32 2, %s38
    %s41 = sshll.u32 7, 26
    %s42 = sxor.u32 4294967295, %s41
    %s43 = sand.u32 0, %s42
    %s44 = sshll.u32 %s39, 26
    %s45 = sor.u32 %s43, %s44
    %s46 = sshll.u32 [#allocation2], 4
    %s47 = int_to_ptr.vmem [resolvable:$true] %s46
    %50 = sst [smem:[#allocation8]] 768
    %s51 = scalar_lea.smem [#allocation8], 1
    %52 = sst [smem:[%s51]] 768
    %s53 = scalar_lea.smem [#allocation8], 2
    %54 = sst [smem:[%s53]] 6
    %s55 = scalar_lea.smem [#allocation8], 3
    %56 = sst [smem:[%s55]] 64
    %s57 = scalar_lea.smem [#allocation8], 4
    %58 = sst [smem:[%s57]] 128
    %s59 = scalar_lea.smem [#allocation8], 5
    %60 = sst [smem:[%s59]] 2
    %s61 = scalar_lea.smem [#allocation8], 6
    %62 = sst [smem:[%s61]] 384
    %s63 = scalar_lea.smem [#allocation8], 7
    %64 = sst [smem:[%s63]] 64
    %s65 = scalar_lea.smem [#allocation8], 8
    %66 = sst [smem:[%s65]] 4
    %68 = dma.general %s4, 12288, %s47, [#allocation4], [#allocation7], [#allocation8], %s45, 0
    %s69 = scalar_lea.sflag [#allocation4], 1
    %s71 = sshll.u32 1, 14
    %s72 = sxor.u32 4294967295, %s71
    %s74 = sadd.s32 2, %s38
    %s76 = sshll.u32 7, 26
    %s77 = sxor.u32 4294967295, %s76
    %s78 = sand.u32 0, %s77
    %s79 = sshll.u32 %s74, 26
    %s80 = sor.u32 %s78, %s79
    %s81 = sshll.u32 [#allocation3], 4
    %s82 = int_to_ptr.vmem [resolvable:$true] %s81
    %85 = sst [smem:[#allocation10]] 256
    %s86 = scalar_lea.smem [#allocation10], 1
    %87 = sst [smem:[%s86]] 256
    %s88 = scalar_lea.smem [#allocation10], 2
    %89 = sst [smem:[%s88]] 2
    %s90 = scalar_lea.smem [#allocation10], 3
    %91 = sst [smem:[%s90]] 64
    %s92 = scalar_lea.smem [#allocation10], 4
    %93 = sst [smem:[%s92]] 128
    %s94 = scalar_lea.smem [#allocation10], 5
    %95 = sst [smem:[%s94]] 2
    %s96 = scalar_lea.smem [#allocation10], 6
    %97 = sst [smem:[%s96]] 128
    %s98 = scalar_lea.smem [#allocation10], 7
    %99 = sst [smem:[%s98]] 64
    %s100 = scalar_lea.smem [#allocation10], 8
    %101 = sst [smem:[%s100]] 4
    %103 = dma.general %s5, 4096, %s82, %s69, [#allocation9], [#allocation10], %s80, 0
    %v104 = vld [vmem:[%s0] sm:$0xf]
    %v105 = vld [vmem:[%s0 + $0x4] sm:$0xf]
    %v106 = vld [vmem:[%s0 + $0x8] sm:$0xf]
    %v107 = vld [vmem:[%s0 + $0xc] sm:$0xf]
    %v108 = vld [vmem:[%s0 + $0x10] sm:$0xf]
    %v109 = vld [vmem:[%s0 + $0x14] sm:$0xf]
    %v110 = vld [vmem:[%s0 + $0x18] sm:$0xf]
    %v111 = vld [vmem:[%s0 + $0x1c] sm:$0xf]
    %v112 = vld [vmem:[%s1] sm:$0xff]
    %v113 = vld [vmem:[%s1 + $0x8] sm:$0xff]
    %v114 = vld [vmem:[%s1 + $0x10] sm:$0xff]
    %v115 = vld [vmem:[%s1 + $0x18] sm:$0xff]
    %v116 = vld [vmem:[%s1 + $0x20] sm:$0xff]
    %v117 = vld [vmem:[%s1 + $0x28] sm:$0xff]
    %v118 = vld [vmem:[%s1 + $0x30] sm:$0xff]
    %v119 = vld [vmem:[%s1 + $0x38] sm:$0xff]
    %v120 = vld [vmem:[%s3] sm:$0xff]
    %v122 = vlaneseq
    %v123 = vshrl.u32 %v122, 7
    %v124 = vsub.s32 0, %v123
    %v125 = vrot.slane %v120, %v124
    %v126 = vlaneseq
    %v127 = vshrl.u32 %v126, 7
    %v128 = vsub.s32 1, %v127
    %v129 = vrot.slane %v120, %v128
    %v130 = vlaneseq
    %v131 = vshrl.u32 %v130, 7
    %v132 = vsub.s32 2, %v131
    %v133 = vrot.slane %v120, %v132
    %v134 = vlaneseq
    %v135 = vshrl.u32 %v134, 7
    %v136 = vsub.s32 3, %v135
    %v137 = vrot.slane %v120, %v136
    %v138 = vlaneseq
    %v139 = vshrl.u32 %v138, 7
    %v140 = vsub.s32 4, %v139
    %v141 = vrot.slane %v120, %v140
    %v142 = vlaneseq
    %v143 = vshrl.u32 %v142, 7
    %v144 = vsub.s32 5, %v143
    %v145 = vrot.slane %v120, %v144
    %v146 = vlaneseq
    %v147 = vshrl.u32 %v146, 7
    %v148 = vsub.s32 6, %v147
    %v149 = vrot.slane %v120, %v148
    %v150 = vlaneseq
    %v151 = vshrl.u32 %v150, 7
    %v152 = vsub.s32 7, %v151
    %v153 = vrot.slane %v120, %v152
    %v170 = vunpack.c.l.b16 %v104
    %v171 = vunpack.c.l.b16 %v105
    %v172 = vunpack.c.l.b16 %v106
    %v173 = vunpack.c.l.b16 %v107
    %v174 = vunpack.c.l.b16 %v108
    %v175 = vunpack.c.l.b16 %v109
    %v176 = vunpack.c.l.b16 %v110
    %v177 = vunpack.c.l.b16 %v111
    %v178 = vpack.c.b16 %v171, %v170
    %v179 = vpack.c.b16 %v173, %v172
    %v180 = vpack.c.b16 %v175, %v174
    %v181 = vpack.c.b16 %v177, %v176
    %v190 = vunpack.c.l.b16 %v112
    %v191 = vunpack.c.h.b16 %v112
    %v192 = vunpack.c.l.b16 %v113
    %v193 = vunpack.c.h.b16 %v113
    %v194 = vunpack.c.l.b16 %v114
    %v195 = vunpack.c.h.b16 %v114
    %v196 = vunpack.c.l.b16 %v115
    %v197 = vunpack.c.h.b16 %v115
    %v198 = vunpack.c.l.b16 %v116
    %v199 = vunpack.c.h.b16 %v116
    %v200 = vunpack.c.l.b16 %v117
    %v201 = vunpack.c.h.b16 %v117
    %v202 = vunpack.c.l.b16 %v118
    %v203 = vunpack.c.h.b16 %v118
    %v204 = vunpack.c.l.b16 %v119
    %v205 = vunpack.c.h.b16 %v119
    %v206 = vpack.c.b16 %v198, %v190
    %v207 = vpack.c.b16 %v199, %v191
    %v208 = vpack.c.b16 %v200, %v192
    %v209 = vpack.c.b16 %v201, %v193
    %v210 = vpack.c.b16 %v202, %v194
    %v211 = vpack.c.b16 %v203, %v195
    %v212 = vpack.c.b16 %v204, %v196
    %v213 = vpack.c.b16 %v205, %v197
    %vm222 = vcmask 130048
    %v224 = vsel %vm222, %v178, 0
    %v227 = vsel %vm222, %v179, 0
    %v230 = vsel %vm222, %v180, 0
    %v233 = vsel %vm222, %v181, 0
    %235 = vmatprep.subr.bf16.mxu0 %v207
    %236 = vmatpush1.bf16.msra.mxu0 %v206
    %237 = vmatprep.subr.bf16.mxu0 0
    %238 = vmatpush1.bf16.msra.mxu0 0
    %239 = vmatprep.subr.bf16.mxu0 0
    %240 = vmatpush1.bf16.msra.mxu0 0
    %241 = vmatprep.subr.bf16.mxu0 0
    %242 = vmatpush1.bf16.msra.mxu0 0
    %243 = vmatprep.subr.bf16.mxu0 0
    %244 = vmatpush1.bf16.msra.mxu0 0
    %245 = vmatprep.subr.bf16.mxu0 0
    %246 = vmatpush1.bf16.msra.mxu0 0
    %247 = vmatprep.subr.bf16.mxu0 0
    %248 = vmatpush1.bf16.msra.mxu0 0
    %249 = vmatprep.subr.bf16.mxu0 0
    %250 = vmatpush1.bf16.msra.mxu0 0
    %251 = vmatprep.subr.bf16.mxu0 0
    %252 = vmatpush1.bf16.msra.mxu0 0
    %253 = vmatprep.subr.bf16.mxu0 0
    %254 = vmatpush1.bf16.msra.mxu0 0
    %255 = vmatprep.subr.bf16.mxu0 0
    %256 = vmatpush1.bf16.msra.mxu0 0
    %257 = vmatprep.subr.bf16.mxu0 0
    %258 = vmatpush1.bf16.msra.mxu0 0
    %259 = vmatprep.subr.bf16.mxu0 0
    %260 = vmatpush1.bf16.msra.mxu0 0
    %261 = vmatprep.subr.bf16.mxu0 0
    %262 = vmatpush1.bf16.msra.mxu0 0
    %263 = vmatprep.subr.bf16.mxu0 0
    %264 = vmatpush1.bf16.msra.mxu0 0
    %265 = vmatprep.subr.bf16.mxu0 0
    %266 = vmatpush1.bf16.msra.mxu0 0
    %267 = vmatprep.mubr.bf16.mxu0 0
    %268 = vmatmul.mubr.bf16.gmra.mrb[0].mxu0 %v224
    %v269 = vpop.f32.mrb[0].mxu0
    %v270 = vadd.f32 %v125, %v269
    %v271 = vpop.f32.mrb[0].mxu0
    %v272 = vadd.f32 %v129, %v271
    %v273 = vpop.f32.mrb[0].mxu0
    %v274 = vadd.f32 %v125, %v273
    %v275 = vpop.f32.mrb[0].mxu0
    %v276 = vadd.f32 %v129, %v275
    %277 = vmatprep.mubr.bf16.mxu0 0
    %278 = vmatmul.mubr.bf16.gmra.mrb[0].mxu0 %v227
    %v279 = vpop.f32.mrb[0].mxu0
    %v280 = vadd.f32 %v125, %v279
    %v281 = vpop.f32.mrb[0].mxu0
    %v282 = vadd.f32 %v129, %v281
    %v283 = vpop.f32.mrb[0].mxu0
    %v284 = vadd.f32 %v125, %v283
    %v285 = vpop.f32.mrb[0].mxu0
    %v286 = vadd.f32 %v129, %v285
    %287 = vmatprep.mubr.bf16.mxu0 0
    %288 = vmatmul.mubr.bf16.gmra.mrb[0].mxu0 %v230
    %v289 = vpop.f32.mrb[0].mxu0
    %v290 = vadd.f32 %v125, %v289
    %v291 = vpop.f32.mrb[0].mxu0
    %v292 = vadd.f32 %v129, %v291
    %v293 = vpop.f32.mrb[0].mxu0
    %v294 = vadd.f32 %v125, %v293
    %v295 = vpop.f32.mrb[0].mxu0
    %v296 = vadd.f32 %v129, %v295
    %297 = vmatprep.mubr.bf16.mxu0 0
    %298 = vmatmul.mubr.bf16.gmra.mrb[0].mxu0 %v233
    %v299 = vpop.f32.mrb[0].mxu0
    %v300 = vadd.f32 %v125, %v299
    %v301 = vpop.f32.mrb[0].mxu0
    %v302 = vadd.f32 %v129, %v301
    %v303 = vpop.f32.mrb[0].mxu0
    %v304 = vadd.f32 %v125, %v303
    %v305 = vpop.f32.mrb[0].mxu0
    %v306 = vadd.f32 %v129, %v305
    %307 = vdwg.mxu0
    %308 = vmatprep.subr.bf16.mxu0 %v209
    %309 = vmatpush1.bf16.msra.mxu0 %v208
    %310 = vmatprep.subr.bf16.mxu0 0
    %311 = vmatpush1.bf16.msra.mxu0 0
    %312 = vmatprep.subr.bf16.mxu0 0
    %313 = vmatpush1.bf16.msra.mxu0 0
    %314 = vmatprep.subr.bf16.mxu0 0
    %315 = vmatpush1.bf16.msra.mxu0 0
    %316 = vmatprep.subr.bf16.mxu0 0
    %317 = vmatpush1.bf16.msra.mxu0 0
    %318 = vmatprep.subr.bf16.mxu0 0
    %319 = vmatpush1.bf16.msra.mxu0 0
    %320 = vmatprep.subr.bf16.mxu0 0
    %321 = vmatpush1.bf16.msra.mxu0 0
    %322 = vmatprep.subr.bf16.mxu0 0
    %323 = vmatpush1.bf16.msra.mxu0 0
    %324 = vmatprep.subr.bf16.mxu0 0
    %325 = vmatpush1.bf16.msra.mxu0 0
    %326 = vmatprep.subr.bf16.mxu0 0
    %327 = vmatpush1.bf16.msra.mxu0 0
    %328 = vmatprep.subr.bf16.mxu0 0
    %329 = vmatpush1.bf16.msra.mxu0 0
    %330 = vmatprep.subr.bf16.mxu0 0
    %331 = vmatpush1.bf16.msra.mxu0 0
    %332 = vmatprep.subr.bf16.mxu0 0
    %333 = vmatpush1.bf16.msra.mxu0 0
    %334 = vmatprep.subr.bf16.mxu0 0
    %335 = vmatpush1.bf16.msra.mxu0 0
    %336 = vmatprep.subr.bf16.mxu0 0
    %337 = vmatpush1.bf16.msra.mxu0 0
    %338 = vmatprep.subr.bf16.mxu0 0
    %339 = vmatpush1.bf16.msra.mxu0 0
    %340 = vmatprep.mubr.bf16.mxu0 0
    %341 = vmatmul.mubr.bf16.gmra.mrb[0].mxu0 %v224
    %v342 = vpop.f32.mrb[0].mxu0
    %v343 = vadd.f32 %v133, %v342
    %v344 = vpop.f32.mrb[0].mxu0
    %v345 = vadd.f32 %v137, %v344
    %v346 = vpop.f32.mrb[0].mxu0
    %v347 = vadd.f32 %v133, %v346
    %v348 = vpop.f32.mrb[0].mxu0
    %v349 = vadd.f32 %v137, %v348
    %350 = vmatprep.mubr.bf16.mxu0 0
    %351 = vmatmul.mubr.bf16.gmra.mrb[0].mxu0 %v227
    %v352 = vpop.f32.mrb[0].mxu0
    %v353 = vadd.f32 %v133, %v352
    %v354 = vpop.f32.mrb[0].mxu0
    %v355 = vadd.f32 %v137, %v354
    %v356 = vpop.f32.mrb[0].mxu0
    %v357 = vadd.f32 %v133, %v356
    %v358 = vpop.f32.mrb[0].mxu0
    %v359 = vadd.f32 %v137, %v358
    %360 = vmatprep.mubr.bf16.mxu0 0
    %361 = vmatmul.mubr.bf16.gmra.mrb[0].mxu0 %v230
    %v362 = vpop.f32.mrb[0].mxu0
    %v363 = vadd.f32 %v133, %v362
    %v364 = vpop.f32.mrb[0].mxu0
    %v365 = vadd.f32 %v137, %v364
    %v366 = vpop.f32.mrb[0].mxu0
    %v367 = vadd.f32 %v133, %v366
    %v368 = vpop.f32.mrb[0].mxu0
    %v369 = vadd.f32 %v137, %v368
    %370 = vmatprep.mubr.bf16.mxu0 0
    %371 = vmatmul.mubr.bf16.gmra.mrb[0].mxu0 %v233
    %v372 = vpop.f32.mrb[0].mxu0
    %v373 = vadd.f32 %v133, %v372
    %v374 = vpop.f32.mrb[0].mxu0
    %v375 = vadd.f32 %v137, %v374
    %v376 = vpop.f32.mrb[0].mxu0
    %v377 = vadd.f32 %v133, %v376
    %v378 = vpop.f32.mrb[0].mxu0
    %v379 = vadd.f32 %v137, %v378
    %380 = vdwg.mxu0
    %381 = vmatprep.subr.bf16.mxu0 %v211
    %382 = vmatpush1.bf16.msra.mxu0 %v210
    %383 = vmatprep.subr.bf16.mxu0 0
    %384 = vmatpush1.bf16.msra.mxu0 0
    %385 = vmatprep.subr.bf16.mxu0 0
    %386 = vmatpush1.bf16.msra.mxu0 0
    %387 = vmatprep.subr.bf16.mxu0 0
    %388 = vmatpush1.bf16.msra.mxu0 0
    %389 = vmatprep.subr.bf16.mxu0 0
    %390 = vmatpush1.bf16.msra.mxu0 0
    %391 = vmatprep.subr.bf16.mxu0 0
    %392 = vmatpush1.bf16.msra.mxu0 0
    %393 = vmatprep.subr.bf16.mxu0 0
    %394 = vmatpush1.bf16.msra.mxu0 0
    %395 = vmatprep.subr.bf16.mxu0 0
    %396 = vmatpush1.bf16.msra.mxu0 0
    %397 = vmatprep.subr.bf16.mxu0 0
    %398 = vmatpush1.bf16.msra.mxu0 0
    %399 = vmatprep.subr.bf16.mxu0 0
    %400 = vmatpush1.bf16.msra.mxu0 0
    %401 = vmatprep.subr.bf16.mxu0 0
    %402 = vmatpush1.bf16.msra.mxu0 0
    %403 = vmatprep.subr.bf16.mxu0 0
    %404 = vmatpush1.bf16.msra.mxu0 0
    %405 = vmatprep.subr.bf16.mxu0 0
    %406 = vmatpush1.bf16.msra.mxu0 0
    %407 = vmatprep.subr.bf16.mxu0 0
    %408 = vmatpush1.bf16.msra.mxu0 0
    %409 = vmatprep.subr.bf16.mxu0 0
    %410 = vmatpush1.bf16.msra.mxu0 0
    %411 = vmatprep.subr.bf16.mxu0 0
    %412 = vmatpush1.bf16.msra.mxu0 0
    %413 = vmatprep.mubr.bf16.mxu0 0
    %414 = vmatmul.mubr.bf16.gmra.mrb[0].mxu0 %v224
    %v415 = vpop.f32.mrb[0].mxu0
    %v416 = vadd.f32 %v141, %v415
    %v417 = vpop.f32.mrb[0].mxu0
    %v418 = vadd.f32 %v145, %v417
    %v419 = vpop.f32.mrb[0].mxu0
    %v420 = vadd.f32 %v141, %v419
    %v421 = vpop.f32.mrb[0].mxu0
    %v422 = vadd.f32 %v145, %v421
    %423 = vmatprep.mubr.bf16.mxu0 0
    %424 = vmatmul.mubr.bf16.gmra.mrb[0].mxu0 %v227
    %v425 = vpop.f32.mrb[0].mxu0
    %v426 = vadd.f32 %v141, %v425
    %v427 = vpop.f32.mrb[0].mxu0
    %v428 = vadd.f32 %v145, %v427
    %v429 = vpop.f32.mrb[0].mxu0
    %v430 = vadd.f32 %v141, %v429
    %v431 = vpop.f32.mrb[0].mxu0
    %v432 = vadd.f32 %v145, %v431
    %433 = vmatprep.mubr.bf16.mxu0 0
    %434 = vmatmul.mubr.bf16.gmra.mrb[0].mxu0 %v230
    %v435 = vpop.f32.mrb[0].mxu0
    %v436 = vadd.f32 %v141, %v435
    %v437 = vpop.f32.mrb[0].mxu0
    %v438 = vadd.f32 %v145, %v437
    %v439 = vpop.f32.mrb[0].mxu0
    %v440 = vadd.f32 %v141, %v439
    %v441 = vpop.f32.mrb[0].mxu0
    %v442 = vadd.f32 %v145, %v441
    %443 = vmatprep.mubr.bf16.mxu0 0
    %444 = vmatmul.mubr.bf16.gmra.mrb[0].mxu0 %v233
    %v445 = vpop.f32.mrb[0].mxu0
    %v446 = vadd.f32 %v141, %v445
    %v447 = vpop.f32.mrb[0].mxu0
    %v448 = vadd.f32 %v145, %v447
    %v449 = vpop.f32.mrb[0].mxu0
    %v450 = vadd.f32 %v141, %v449
    %v451 = vpop.f32.mrb[0].mxu0
    %v452 = vadd.f32 %v145, %v451
    %453 = vdwg.mxu0
    %454 = vmatprep.subr.bf16.mxu0 %v213
    %455 = vmatpush1.bf16.msra.mxu0 %v212
    %456 = vmatprep.subr.bf16.mxu0 0
    %457 = vmatpush1.bf16.msra.mxu0 0
    %458 = vmatprep.subr.bf16.mxu0 0
    %459 = vmatpush1.bf16.msra.mxu0 0
    %460 = vmatprep.subr.bf16.mxu0 0
    %461 = vmatpush1.bf16.msra.mxu0 0
    %462 = vmatprep.subr.bf16.mxu0 0
    %463 = vmatpush1.bf16.msra.mxu0 0
    %464 = vmatprep.subr.bf16.mxu0 0
    %465 = vmatpush1.bf16.msra.mxu0 0
    %466 = vmatprep.subr.bf16.mxu0 0
    %467 = vmatpush1.bf16.msra.mxu0 0
    %468 = vmatprep.subr.bf16.mxu0 0
    %469 = vmatpush1.bf16.msra.mxu0 0
    %470 = vmatprep.subr.bf16.mxu0 0
    %471 = vmatpush1.bf16.msra.mxu0 0
    %472 = vmatprep.subr.bf16.mxu0 0
    %473 = vmatpush1.bf16.msra.mxu0 0
    %474 = vmatprep.subr.bf16.mxu0 0
    %475 = vmatpush1.bf16.msra.mxu0 0
    %476 = vmatprep.subr.bf16.mxu0 0
    %477 = vmatpush1.bf16.msra.mxu0 0
    %478 = vmatprep.subr.bf16.mxu0 0
    %479 = vmatpush1.bf16.msra.mxu0 0
    %480 = vmatprep.subr.bf16.mxu0 0
    %481 = vmatpush1.bf16.msra.mxu0 0
    %482 = vmatprep.subr.bf16.mxu0 0
    %483 = vmatpush1.bf16.msra.mxu0 0
    %484 = vmatprep.subr.bf16.mxu0 0
    %485 = vmatpush1.bf16.msra.mxu0 0
    %486 = vmatprep.mubr.bf16.mxu0 0
    %487 = vmatmul.mubr.bf16.gmra.mrb[0].mxu0 %v224
    %v488 = vpop.f32.mrb[0].mxu0
    %v489 = vadd.f32 %v149, %v488
    %v490 = vpop.f32.mrb[0].mxu0
    %v491 = vadd.f32 %v153, %v490
    %v492 = vpop.f32.mrb[0].mxu0
    %v493 = vadd.f32 %v149, %v492
    %v494 = vpop.f32.mrb[0].mxu0
    %v495 = vadd.f32 %v153, %v494
    %496 = vmatprep.mubr.bf16.mxu0 0
    %497 = vmatmul.mubr.bf16.gmra.mrb[0].mxu0 %v227
    %v498 = vpop.f32.mrb[0].mxu0
    %v499 = vadd.f32 %v149, %v498
    %v500 = vpop.f32.mrb[0].mxu0
    %v501 = vadd.f32 %v153, %v500
    %v502 = vpop.f32.mrb[0].mxu0
    %v503 = vadd.f32 %v149, %v502
    %v504 = vpop.f32.mrb[0].mxu0
    %v505 = vadd.f32 %v153, %v504
    %506 = vmatprep.mubr.bf16.mxu0 0
    %507 = vmatmul.mubr.bf16.gmra.mrb[0].mxu0 %v230
    %v508 = vpop.f32.mrb[0].mxu0
    %v509 = vadd.f32 %v149, %v508
    %v510 = vpop.f32.mrb[0].mxu0
    %v511 = vadd.f32 %v153, %v510
    %v512 = vpop.f32.mrb[0].mxu0
    %v513 = vadd.f32 %v149, %v512
    %v514 = vpop.f32.mrb[0].mxu0
    %v515 = vadd.f32 %v153, %v514
    %516 = vmatprep.mubr.bf16.mxu0 0
    %517 = vmatmul.mubr.bf16.gmra.mrb[0].mxu0 %v233
    %v518 = vpop.f32.mrb[0].mxu0
    %v519 = vadd.f32 %v149, %v518
    %v520 = vpop.f32.mrb[0].mxu0
    %v521 = vadd.f32 %v153, %v520
    %v522 = vpop.f32.mrb[0].mxu0
    %v523 = vadd.f32 %v149, %v522
    %v524 = vpop.f32.mrb[0].mxu0
    %v525 = vadd.f32 %v153, %v524
    %526 = vdwg.mxu0
    %v527 = vld [vmem:[#allocation5] sm:$0xff]
    %v528 = vld [vmem:[#allocation5 + $0x8] sm:$0xff]
    %v529 = vld [vmem:[#allocation5 + $0x10] sm:$0xff]
    %v530 = vld [vmem:[#allocation5 + $0x18] sm:$0xff]
    %v531 = vld [vmem:[#allocation5 + $0x20] sm:$0xff]
    %v532 = vld [vmem:[#allocation5 + $0x28] sm:$0xff]
    %v533 = vld [vmem:[#allocation5 + $0x30] sm:$0xff]
    %v534 = vld [vmem:[#allocation5 + $0x38] sm:$0xff]
    %v535 = vld [vmem:[#allocation5 + $0x40] sm:$0xff]
    %v536 = vld [vmem:[#allocation5 + $0x48] sm:$0xff]
    %v537 = vld [vmem:[#allocation5 + $0x50] sm:$0xff]
    %v538 = vld [vmem:[#allocation5 + $0x58] sm:$0xff]
    %v539 = vld [vmem:[#allocation5 + $0x60] sm:$0xff]
    %v540 = vld [vmem:[#allocation5 + $0x68] sm:$0xff]
    %v541 = vld [vmem:[#allocation5 + $0x70] sm:$0xff]
    %v542 = vld [vmem:[#allocation5 + $0x78] sm:$0xff]
    %v543 = vld [vmem:[#allocation5 + $0x80] sm:$0xff]
    %v544 = vld [vmem:[#allocation5 + $0x88] sm:$0xff]
    %v545 = vld [vmem:[#allocation5 + $0x90] sm:$0xff]
    %v546 = vld [vmem:[#allocation5 + $0x98] sm:$0xff]
    %v547 = vld [vmem:[#allocation5 + $0xa0] sm:$0xff]
    %v548 = vld [vmem:[#allocation5 + $0xa8] sm:$0xff]
    %v549 = vld [vmem:[#allocation5 + $0xb0] sm:$0xff]
    %v550 = vld [vmem:[#allocation5 + $0xb8] sm:$0xff]
    %v551 = vld [vmem:[#allocation5 + $0xc0] sm:$0xff]
    %v552 = vld [vmem:[#allocation5 + $0xc8] sm:$0xff]
    %v553 = vld [vmem:[#allocation5 + $0xd0] sm:$0xff]
    %v554 = vld [vmem:[#allocation5 + $0xd8] sm:$0xff]
    %v555 = vld [vmem:[#allocation5 + $0xe0] sm:$0xff]
    %v556 = vld [vmem:[#allocation5 + $0xe8] sm:$0xff]
    %v557 = vld [vmem:[#allocation5 + $0xf0] sm:$0xff]
    %v558 = vld [vmem:[#allocation5 + $0xf8] sm:$0xff]
    %v559 = vld [vmem:[#allocation5 + $0x100] sm:$0xff]
    %v560 = vld [vmem:[#allocation5 + $0x108] sm:$0xff]
    %v561 = vld [vmem:[#allocation5 + $0x110] sm:$0xff]
    %v562 = vld [vmem:[#allocation5 + $0x118] sm:$0xff]
    %v563 = vld [vmem:[#allocation5 + $0x120] sm:$0xff]
    %v564 = vld [vmem:[#allocation5 + $0x128] sm:$0xff]
    %v565 = vld [vmem:[#allocation5 + $0x130] sm:$0xff]
    %v566 = vld [vmem:[#allocation5 + $0x138] sm:$0xff]
    %v567 = vld [vmem:[#allocation5 + $0x140] sm:$0xff]
    %v568 = vld [vmem:[#allocation5 + $0x148] sm:$0xff]
    %v569 = vld [vmem:[#allocation5 + $0x150] sm:$0xff]
    %v570 = vld [vmem:[#allocation5 + $0x158] sm:$0xff]
    %v571 = vld [vmem:[#allocation5 + $0x160] sm:$0xff]
    %v572 = vld [vmem:[#allocation5 + $0x168] sm:$0xff]
    %v573 = vld [vmem:[#allocation5 + $0x170] sm:$0xff]
    %v574 = vld [vmem:[#allocation5 + $0x178] sm:$0xff]
    %v575 = vld [vmem:[#allocation5 + $0x180] sm:$0xff]
    %v576 = vld [vmem:[#allocation5 + $0x188] sm:$0xff]
    %v577 = vld [vmem:[#allocation5 + $0x190] sm:$0xff]
    %v578 = vld [vmem:[#allocation5 + $0x198] sm:$0xff]
    %v579 = vld [vmem:[#allocation5 + $0x1a0] sm:$0xff]
    %v580 = vld [vmem:[#allocation5 + $0x1a8] sm:$0xff]
    %v581 = vld [vmem:[#allocation5 + $0x1b0] sm:$0xff]
    %v582 = vld [vmem:[#allocation5 + $0x1b8] sm:$0xff]
    %v583 = vld [vmem:[#allocation5 + $0x1c0] sm:$0xff]
    %v584 = vld [vmem:[#allocation5 + $0x1c8] sm:$0xff]
    %v585 = vld [vmem:[#allocation5 + $0x1d0] sm:$0xff]
    %v586 = vld [vmem:[#allocation5 + $0x1d8] sm:$0xff]
    %v587 = vld [vmem:[#allocation5 + $0x1e0] sm:$0xff]
    %v588 = vld [vmem:[#allocation5 + $0x1e8] sm:$0xff]
    %v589 = vld [vmem:[#allocation5 + $0x1f0] sm:$0xff]
    %v590 = vld [vmem:[#allocation5 + $0x1f8] sm:$0xff]
    %v591 = vld [vmem:[#allocation5 + $0x200] sm:$0xff]
    %v592 = vld [vmem:[#allocation5 + $0x208] sm:$0xff]
    %v593 = vld [vmem:[#allocation5 + $0x210] sm:$0xff]
    %v594 = vld [vmem:[#allocation5 + $0x218] sm:$0xff]
    %v595 = vld [vmem:[#allocation5 + $0x220] sm:$0xff]
    %v596 = vld [vmem:[#allocation5 + $0x228] sm:$0xff]
    %v597 = vld [vmem:[#allocation5 + $0x230] sm:$0xff]
    %v598 = vld [vmem:[#allocation5 + $0x238] sm:$0xff]
    %v599 = vld [vmem:[#allocation5 + $0x240] sm:$0xff]
    %v600 = vld [vmem:[#allocation5 + $0x248] sm:$0xff]
    %v601 = vld [vmem:[#allocation5 + $0x250] sm:$0xff]
    %v602 = vld [vmem:[#allocation5 + $0x258] sm:$0xff]
    %v603 = vld [vmem:[#allocation5 + $0x260] sm:$0xff]
    %v604 = vld [vmem:[#allocation5 + $0x268] sm:$0xff]
    %v605 = vld [vmem:[#allocation5 + $0x270] sm:$0xff]
    %v606 = vld [vmem:[#allocation5 + $0x278] sm:$0xff]
    %v607 = vld [vmem:[#allocation5 + $0x280] sm:$0xff]
    %v608 = vld [vmem:[#allocation5 + $0x288] sm:$0xff]
    %v609 = vld [vmem:[#allocation5 + $0x290] sm:$0xff]
    %v610 = vld [vmem:[#allocation5 + $0x298] sm:$0xff]
    %v611 = vld [vmem:[#allocation5 + $0x2a0] sm:$0xff]
    %v612 = vld [vmem:[#allocation5 + $0x2a8] sm:$0xff]
    %v613 = vld [vmem:[#allocation5 + $0x2b0] sm:$0xff]
    %v614 = vld [vmem:[#allocation5 + $0x2b8] sm:$0xff]
    %v615 = vld [vmem:[#allocation5 + $0x2c0] sm:$0xff]
    %v616 = vld [vmem:[#allocation5 + $0x2c8] sm:$0xff]
    %v617 = vld [vmem:[#allocation5 + $0x2d0] sm:$0xff]
    %v618 = vld [vmem:[#allocation5 + $0x2d8] sm:$0xff]
    %v619 = vld [vmem:[#allocation5 + $0x2e0] sm:$0xff]
    %v620 = vld [vmem:[#allocation5 + $0x2e8] sm:$0xff]
    %v621 = vld [vmem:[#allocation5 + $0x2f0] sm:$0xff]
    %v622 = vld [vmem:[#allocation5 + $0x2f8] sm:$0xff]
    %v623 = vld [vmem:[#allocation5 + $0x300] sm:$0xff]
    %v624 = vld [vmem:[#allocation5 + $0x308] sm:$0xff]
    %v625 = vld [vmem:[#allocation5 + $0x310] sm:$0xff]
    %v626 = vld [vmem:[#allocation5 + $0x318] sm:$0xff]
    %v627 = vld [vmem:[#allocation5 + $0x320] sm:$0xff]
    %v628 = vld [vmem:[#allocation5 + $0x328] sm:$0xff]
    %v629 = vld [vmem:[#allocation5 + $0x330] sm:$0xff]
    %v630 = vld [vmem:[#allocation5 + $0x338] sm:$0xff]
    %v631 = vld [vmem:[#allocation5 + $0x340] sm:$0xff]
    %v632 = vld [vmem:[#allocation5 + $0x348] sm:$0xff]
    %v633 = vld [vmem:[#allocation5 + $0x350] sm:$0xff]
    %v634 = vld [vmem:[#allocation5 + $0x358] sm:$0xff]
    %v635 = vld [vmem:[#allocation5 + $0x360] sm:$0xff]
    %v636 = vld [vmem:[#allocation5 + $0x368] sm:$0xff]
    %v637 = vld [vmem:[#allocation5 + $0x370] sm:$0xff]
    %v638 = vld [vmem:[#allocation5 + $0x378] sm:$0xff]
    %v639 = vld [vmem:[#allocation5 + $0x380] sm:$0xff]
    %v640 = vld [vmem:[#allocation5 + $0x388] sm:$0xff]
    %v641 = vld [vmem:[#allocation5 + $0x390] sm:$0xff]
    %v642 = vld [vmem:[#allocation5 + $0x398] sm:$0xff]
    %v643 = vld [vmem:[#allocation5 + $0x3a0] sm:$0xff]
    %v644 = vld [vmem:[#allocation5 + $0x3a8] sm:$0xff]
    %v645 = vld [vmem:[#allocation5 + $0x3b0] sm:$0xff]
    %v646 = vld [vmem:[#allocation5 + $0x3b8] sm:$0xff]
    %v647 = vld [vmem:[#allocation5 + $0x3c0] sm:$0xff]
    %v648 = vld [vmem:[#allocation5 + $0x3c8] sm:$0xff]
    %v649 = vld [vmem:[#allocation5 + $0x3d0] sm:$0xff]
    %v650 = vld [vmem:[#allocation5 + $0x3d8] sm:$0xff]
    %v651 = vld [vmem:[#allocation5 + $0x3e0] sm:$0xff]
    %v652 = vld [vmem:[#allocation5 + $0x3e8] sm:$0xff]
    %v653 = vld [vmem:[#allocation5 + $0x3f0] sm:$0xff]
    %v654 = vld [vmem:[#allocation5 + $0x3f8] sm:$0xff]
    %v783 = vunpack.c.l.b16 %v527
    %v784 = vunpack.c.h.b16 %v527
    %v785 = vunpack.c.l.b16 %v528
    %v786 = vunpack.c.h.b16 %v528
    %v787 = vunpack.c.l.b16 %v529
    %v788 = vunpack.c.h.b16 %v529
    %v789 = vunpack.c.l.b16 %v530
    %v790 = vunpack.c.h.b16 %v530
    %v791 = vunpack.c.l.b16 %v531
    %v792 = vunpack.c.h.b16 %v531
    %v793 = vunpack.c.l.b16 %v532
    %v794 = vunpack.c.h.b16 %v532
    %v795 = vunpack.c.l.b16 %v533
    %v796 = vunpack.c.h.b16 %v533
    %v797 = vunpack.c.l.b16 %v534
    %v798 = vunpack.c.h.b16 %v534
    %v799 = vunpack.c.l.b16 %v535
    %v800 = vunpack.c.h.b16 %v535
    %v801 = vunpack.c.l.b16 %v536
    %v802 = vunpack.c.h.b16 %v536
    %v803 = vunpack.c.l.b16 %v537
    %v804 = vunpack.c.h.b16 %v537
    %v805 = vunpack.c.l.b16 %v538
    %v806 = vunpack.c.h.b16 %v538
    %v807 = vunpack.c.l.b16 %v539
    %v808 = vunpack.c.h.b16 %v539
    %v809 = vunpack.c.l.b16 %v540
    %v810 = vunpack.c.h.b16 %v540
    %v811 = vunpack.c.l.b16 %v541
    %v812 = vunpack.c.h.b16 %v541
    %v813 = vunpack.c.l.b16 %v542
    %v814 = vunpack.c.h.b16 %v542
    %v815 = vunpack.c.l.b16 %v543
    %v816 = vunpack.c.h.b16 %v543
    %v817 = vunpack.c.l.b16 %v544
    %v818 = vunpack.c.h.b16 %v544
    %v819 = vunpack.c.l.b16 %v545
    %v820 = vunpack.c.h.b16 %v545
    %v821 = vunpack.c.l.b16 %v546
    %v822 = vunpack.c.h.b16 %v546
    %v823 = vunpack.c.l.b16 %v547
    %v824 = vunpack.c.h.b16 %v547
    %v825 = vunpack.c.l.b16 %v548
    %v826 = vunpack.c.h.b16 %v548
    %v827 = vunpack.c.l.b16 %v549
    %v828 = vunpack.c.h.b16 %v549
    %v829 = vunpack.c.l.b16 %v550
    %v830 = vunpack.c.h.b16 %v550
    %v831 = vunpack.c.l.b16 %v551
    %v832 = vunpack.c.h.b16 %v551
    %v833 = vunpack.c.l.b16 %v552
    %v834 = vunpack.c.h.b16 %v552
    %v835 = vunpack.c.l.b16 %v553
    %v836 = vunpack.c.h.b16 %v553
    %v837 = vunpack.c.l.b16 %v554
    %v838 = vunpack.c.h.b16 %v554
    %v839 = vunpack.c.l.b16 %v555
    %v840 = vunpack.c.h.b16 %v555
    %v841 = vunpack.c.l.b16 %v556
    %v842 = vunpack.c.h.b16 %v556
    %v843 = vunpack.c.l.b16 %v557
    %v844 = vunpack.c.h.b16 %v557
    %v845 = vunpack.c.l.b16 %v558
    %v846 = vunpack.c.h.b16 %v558
    %v847 = vunpack.c.l.b16 %v559
    %v848 = vunpack.c.h.b16 %v559
    %v849 = vunpack.c.l.b16 %v560
    %v850 = vunpack.c.h.b16 %v560
    %v851 = vunpack.c.l.b16 %v561
    %v852 = vunpack.c.h.b16 %v561
    %v853 = vunpack.c.l.b16 %v562
    %v854 = vunpack.c.h.b16 %v562
    %v855 = vunpack.c.l.b16 %v563
    %v856 = vunpack.c.h.b16 %v563
    %v857 = vunpack.c.l.b16 %v564
    %v858 = vunpack.c.h.b16 %v564
    %v859 = vunpack.c.l.b16 %v565
    %v860 = vunpack.c.h.b16 %v565
    %v861 = vunpack.c.l.b16 %v566
    %v862 = vunpack.c.h.b16 %v566
    %v863 = vunpack.c.l.b16 %v567
    %v864 = vunpack.c.h.b16 %v567
    %v865 = vunpack.c.l.b16 %v568
    %v866 = vunpack.c.h.b16 %v568
    %v867 = vunpack.c.l.b16 %v569
    %v868 = vunpack.c.h.b16 %v569
    %v869 = vunpack.c.l.b16 %v570
    %v870 = vunpack.c.h.b16 %v570
    %v871 = vunpack.c.l.b16 %v571
    %v872 = vunpack.c.h.b16 %v571
    %v873 = vunpack.c.l.b16 %v572
    %v874 = vunpack.c.h.b16 %v572
    %v875 = vunpack.c.l.b16 %v573
    %v876 = vunpack.c.h.b16 %v573
    %v877 = vunpack.c.l.b16 %v574
    %v878 = vunpack.c.h.b16 %v574
    %v879 = vunpack.c.l.b16 %v575
    %v880 = vunpack.c.h.b16 %v575
    %v881 = vunpack.c.l.b16 %v576
    %v882 = vunpack.c.h.b16 %v576
    %v883 = vunpack.c.l.b16 %v577
    %v884 = vunpack.c.h.b16 %v577
    %v885 = vunpack.c.l.b16 %v578
    %v886 = vunpack.c.h.b16 %v578
    %v887 = vunpack.c.l.b16 %v579
    %v888 = vunpack.c.h.b16 %v579
    %v889 = vunpack.c.l.b16 %v580
    %v890 = vunpack.c.h.b16 %v580
    %v891 = vunpack.c.l.b16 %v581
    %v892 = vunpack.c.h.b16 %v581
    %v893 = vunpack.c.l.b16 %v582
    %v894 = vunpack.c.h.b16 %v582
    %v895 = vunpack.c.l.b16 %v583
    %v896 = vunpack.c.h.b16 %v583
    %v897 = vunpack.c.l.b16 %v584
    %v898 = vunpack.c.h.b16 %v584
    %v899 = vunpack.c.l.b16 %v585
    %v900 = vunpack.c.h.b16 %v585
    %v901 = vunpack.c.l.b16 %v586
    %v902 = vunpack.c.h.b16 %v586
    %v903 = vunpack.c.l.b16 %v587
    %v904 = vunpack.c.h.b16 %v587
    %v905 = vunpack.c.l.b16 %v588
    %v906 = vunpack.c.h.b16 %v588
    %v907 = vunpack.c.l.b16 %v589
    %v908 = vunpack.c.h.b16 %v589
    %v909 = vunpack.c.l.b16 %v590
    %v910 = vunpack.c.h.b16 %v590
    %v911 = vunpack.c.l.b16 %v591
    %v912 = vunpack.c.h.b16 %v591
    %v913 = vunpack.c.l.b16 %v592
    %v914 = vunpack.c.h.b16 %v592
    %v915 = vunpack.c.l.b16 %v593
    %v916 = vunpack.c.h.b16 %v593
    %v917 = vunpack.c.l.b16 %v594
    %v918 = vunpack.c.h.b16 %v594
    %v919 = vunpack.c.l.b16 %v595
    %v920 = vunpack.c.h.b16 %v595
    %v921 = vunpack.c.l.b16 %v596
    %v922 = vunpack.c.h.b16 %v596
    %v923 = vunpack.c.l.b16 %v597
    %v924 = vunpack.c.h.b16 %v597
    %v925 = vunpack.c.l.b16 %v598
    %v926 = vunpack.c.h.b16 %v598
    %v927 = vunpack.c.l.b16 %v599
    %v928 = vunpack.c.h.b16 %v599
    %v929 = vunpack.c.l.b16 %v600
    %v930 = vunpack.c.h.b16 %v600
    %v931 = vunpack.c.l.b16 %v601
    %v932 = vunpack.c.h.b16 %v601
    %v933 = vunpack.c.l.b16 %v602
    %v934 = vunpack.c.h.b16 %v602
    %v935 = vunpack.c.l.b16 %v603
    %v936 = vunpack.c.h.b16 %v603
    %v937 = vunpack.c.l.b16 %v604
    %v938 = vunpack.c.h.b16 %v604
    %v939 = vunpack.c.l.b16 %v605
    %v940 = vunpack.c.h.b16 %v605
    %v941 = vunpack.c.l.b16 %v606
    %v942 = vunpack.c.h.b16 %v606
    %v943 = vunpack.c.l.b16 %v607
    %v944 = vunpack.c.h.b16 %v607
    %v945 = vunpack.c.l.b16 %v608
    %v946 = vunpack.c.h.b16 %v608
    %v947 = vunpack.c.l.b16 %v609
    %v948 = vunpack.c.h.b16 %v609
    %v949 = vunpack.c.l.b16 %v610
    %v950 = vunpack.c.h.b16 %v610
    %v951 = vunpack.c.l.b16 %v611
    %v952 = vunpack.c.h.b16 %v611
    %v953 = vunpack.c.l.b16 %v612
    %v954 = vunpack.c.h.b16 %v612
    %v955 = vunpack.c.l.b16 %v613
    %v956 = vunpack.c.h.b16 %v613
    %v957 = vunpack.c.l.b16 %v614
    %v958 = vunpack.c.h.b16 %v614
    %v959 = vunpack.c.l.b16 %v615
    %v960 = vunpack.c.h.b16 %v615
    %v961 = vunpack.c.l.b16 %v616
    %v962 = vunpack.c.h.b16 %v616
    %v963 = vunpack.c.l.b16 %v617
    %v964 = vunpack.c.h.b16 %v617
    %v965 = vunpack.c.l.b16 %v618
    %v966 = vunpack.c.h.b16 %v618
    %v967 = vunpack.c.l.b16 %v619
    %v968 = vunpack.c.h.b16 %v619
    %v969 = vunpack.c.l.b16 %v620
    %v970 = vunpack.c.h.b16 %v620
    %v971 = vunpack.c.l.b16 %v621
    %v972 = vunpack.c.h.b16 %v621
    %v973 = vunpack.c.l.b16 %v622
    %v974 = vunpack.c.h.b16 %v622
    %v975 = vunpack.c.l.b16 %v623
    %v976 = vunpack.c.h.b16 %v623
    %v977 = vunpack.c.l.b16 %v624
    %v978 = vunpack.c.h.b16 %v624
    %v979 = vunpack.c.l.b16 %v625
    %v980 = vunpack.c.h.b16 %v625
    %v981 = vunpack.c.l.b16 %v626
    %v982 = vunpack.c.h.b16 %v626
    %v983 = vunpack.c.l.b16 %v627
    %v984 = vunpack.c.h.b16 %v627
    %v985 = vunpack.c.l.b16 %v628
    %v986 = vunpack.c.h.b16 %v628
    %v987 = vunpack.c.l.b16 %v629
    %v988 = vunpack.c.h.b16 %v629
    %v989 = vunpack.c.l.b16 %v630
    %v990 = vunpack.c.h.b16 %v630
    %v991 = vunpack.c.l.b16 %v631
    %v992 = vunpack.c.h.b16 %v631
    %v993 = vunpack.c.l.b16 %v632
    %v994 = vunpack.c.h.b16 %v632
    %v995 = vunpack.c.l.b16 %v633
    %v996 = vunpack.c.h.b16 %v633
    %v997 = vunpack.c.l.b16 %v634
    %v998 = vunpack.c.h.b16 %v634
    %v999 = vunpack.c.l.b16 %v635
    %v1000 = vunpack.c.h.b16 %v635
    %v1001 = vunpack.c.l.b16 %v636
    %v1002 = vunpack.c.h.b16 %v636
    %v1003 = vunpack.c.l.b16 %v637
    %v1004 = vunpack.c.h.b16 %v637
    %v1005 = vunpack.c.l.b16 %v638
    %v1006 = vunpack.c.h.b16 %v638
    %v1007 = vunpack.c.l.b16 %v639
    %v1008 = vunpack.c.h.b16 %v639
    %v1009 = vunpack.c.l.b16 %v640
    %v1010 = vunpack.c.h.b16 %v640
    %v1011 = vunpack.c.l.b16 %v641
    %v1012 = vunpack.c.h.b16 %v641
    %v1013 = vunpack.c.l.b16 %v642
    %v1014 = vunpack.c.h.b16 %v642
    %v1015 = vunpack.c.l.b16 %v643
    %v1016 = vunpack.c.h.b16 %v643
    %v1017 = vunpack.c.l.b16 %v644
    %v1018 = vunpack.c.h.b16 %v644
    %v1019 = vunpack.c.l.b16 %v645
    %v1020 = vunpack.c.h.b16 %v645
    %v1021 = vunpack.c.l.b16 %v646
    %v1022 = vunpack.c.h.b16 %v646
    %v1023 = vunpack.c.l.b16 %v647
    %v1024 = vunpack.c.h.b16 %v647
    %v1025 = vunpack.c.l.b16 %v648
    %v1026 = vunpack.c.h.b16 %v648
    %v1027 = vunpack.c.l.b16 %v649
    %v1028 = vunpack.c.h.b16 %v649
    %v1029 = vunpack.c.l.b16 %v650
    %v1030 = vunpack.c.h.b16 %v650
    %v1031 = vunpack.c.l.b16 %v651
    %v1032 = vunpack.c.h.b16 %v651
    %v1033 = vunpack.c.l.b16 %v652
    %v1034 = vunpack.c.h.b16 %v652
    %v1035 = vunpack.c.l.b16 %v653
    %v1036 = vunpack.c.h.b16 %v653
    %v1037 = vunpack.c.l.b16 %v654
    %v1038 = vunpack.c.h.b16 %v654
    %v1039 = vpack.c.b16 %v791, %v783
    %v1040 = vpack.c.b16 %v792, %v784
    %v1041 = vpack.c.b16 %v793, %v785
    %v1042 = vpack.c.b16 %v794, %v786
    %v1043 = vpack.c.b16 %v795, %v787
    %v1044 = vpack.c.b16 %v796, %v788
    %v1045 = vpack.c.b16 %v797, %v789
    %v1046 = vpack.c.b16 %v798, %v790
    %v1047 = vpack.c.b16 %v807, %v799
    %v1048 = vpack.c.b16 %v808, %v800
    %v1049 = vpack.c.b16 %v809, %v801
    %v1050 = vpack.c.b16 %v810, %v802
    %v1051 = vpack.c.b16 %v811, %v803
    %v1052 = vpack.c.b16 %v812, %v804
    %v1053 = vpack.c.b16 %v813, %v805
    %v1054 = vpack.c.b16 %v814, %v806
    %v1055 = vpack.c.b16 %v823, %v815
    %v1056 = vpack.c.b16 %v824, %v816
    %v1057 = vpack.c.b16 %v825, %v817
    %v1058 = vpack.c.b16 %v826, %v818
    %v1059 = vpack.c.b16 %v827, %v819
    %v1060 = vpack.c.b16 %v828, %v820
    %v1061 = vpack.c.b16 %v829, %v821
    %v1062 = vpack.c.b16 %v830, %v822
    %v1063 = vpack.c.b16 %v839, %v831
    %v1064 = vpack.c.b16 %v840, %v832
    %v1065 = vpack.c.b16 %v841, %v833
    %v1066 = vpack.c.b16 %v842, %v834
    %v1067 = vpack.c.b16 %v843, %v835
    %v1068 = vpack.c.b16 %v844, %v836
    %v1069 = vpack.c.b16 %v845, %v837
    %v1070 = vpack.c.b16 %v846, %v838
    %v1071 = vpack.c.b16 %v855, %v847
    %v1072 = vpack.c.b16 %v856, %v848
    %v1073 = vpack.c.b16 %v857, %v849
    %v1074 = vpack.c.b16 %v858, %v850
    %v1075 = vpack.c.b16 %v859, %v851
    %v1076 = vpack.c.b16 %v860, %v852
    %v1077 = vpack.c.b16 %v861, %v853
    %v1078 = vpack.c.b16 %v862, %v854
    %v1079 = vpack.c.b16 %v871, %v863
    %v1080 = vpack.c.b16 %v872, %v864
    %v1081 = vpack.c.b16 %v873, %v865
    %v1082 = vpack.c.b16 %v874, %v866
    %v1083 = vpack.c.b16 %v875, %v867
    %v1084 = vpack.c.b16 %v876, %v868
    %v1085 = vpack.c.b16 %v877, %v869
    %v1086 = vpack.c.b16 %v878, %v870
    %v1087 = vpack.c.b16 %v887, %v879
    %v1088 = vpack.c.b16 %v888, %v880
    %v1089 = vpack.c.b16 %v889, %v881
    %v1090 = vpack.c.b16 %v890, %v882
    %v1091 = vpack.c.b16 %v891, %v883
    %v1092 = vpack.c.b16 %v892, %v884
    %v1093 = vpack.c.b16 %v893, %v885
    %v1094 = vpack.c.b16 %v894, %v886
    %v1095 = vpack.c.b16 %v903, %v895
    %v1096 = vpack.c.b16 %v904, %v896
    %v1097 = vpack.c.b16 %v905, %v897
    %v1098 = vpack.c.b16 %v906, %v898
    %v1099 = vpack.c.b16 %v907, %v899
    %v1100 = vpack.c.b16 %v908, %v900
    %v1101 = vpack.c.b16 %v909, %v901
    %v1102 = vpack.c.b16 %v910, %v902
    %v1103 = vpack.c.b16 %v919, %v911
    %v1104 = vpack.c.b16 %v920, %v912
    %v1105 = vpack.c.b16 %v921, %v913
    %v1106 = vpack.c.b16 %v922, %v914
    %v1107 = vpack.c.b16 %v923, %v915
    %v1108 = vpack.c.b16 %v924, %v916
    %v1109 = vpack.c.b16 %v925, %v917
    %v1110 = vpack.c.b16 %v926, %v918
    %v1111 = vpack.c.b16 %v935, %v927
    %v1112 = vpack.c.b16 %v936, %v928
    %v1113 = vpack.c.b16 %v937, %v929
    %v1114 = vpack.c.b16 %v938, %v930
    %v1115 = vpack.c.b16 %v939, %v931
    %v1116 = vpack.c.b16 %v940, %v932
    %v1117 = vpack.c.b16 %v941, %v933
    %v1118 = vpack.c.b16 %v942, %v934
    %v1119 = vpack.c.b16 %v951, %v943
    %v1120 = vpack.c.b16 %v952, %v944
    %v1121 = vpack.c.b16 %v953, %v945
    %v1122 = vpack.c.b16 %v954, %v946
    %v1123 = vpack.c.b16 %v955, %v947
    %v1124 = vpack.c.b16 %v956, %v948
    %v1125 = vpack.c.b16 %v957, %v949
    %v1126 = vpack.c.b16 %v958, %v950
    %v1127 = vpack.c.b16 %v967, %v959
    %v1128 = vpack.c.b16 %v968, %v960
    %v1129 = vpack.c.b16 %v969, %v961
    %v1130 = vpack.c.b16 %v970, %v962
    %v1131 = vpack.c.b16 %v971, %v963
    %v1132 = vpack.c.b16 %v972, %v964
    %v1133 = vpack.c.b16 %v973, %v965
    %v1134 = vpack.c.b16 %v974, %v966
    %v1135 = vpack.c.b16 %v983, %v975
    %v1136 = vpack.c.b16 %v984, %v976
    %v1137 = vpack.c.b16 %v985, %v977
    %v1138 = vpack.c.b16 %v986, %v978
    %v1139 = vpack.c.b16 %v987, %v979
    %v1140 = vpack.c.b16 %v988, %v980
    %v1141 = vpack.c.b16 %v989, %v981
    %v1142 = vpack.c.b16 %v990, %v982
    %v1143 = vpack.c.b16 %v999, %v991
    %v1144 = vpack.c.b16 %v1000, %v992
    %v1145 = vpack.c.b16 %v1001, %v993
    %v1146 = vpack.c.b16 %v1002, %v994
    %v1147 = vpack.c.b16 %v1003, %v995
    %v1148 = vpack.c.b16 %v1004, %v996
    %v1149 = vpack.c.b16 %v1005, %v997
    %v1150 = vpack.c.b16 %v1006, %v998
    %v1151 = vpack.c.b16 %v1015, %v1007
    %v1152 = vpack.c.b16 %v1016, %v1008
    %v1153 = vpack.c.b16 %v1017, %v1009
    %v1154 = vpack.c.b16 %v1018, %v1010
    %v1155 = vpack.c.b16 %v1019, %v1011
    %v1156 = vpack.c.b16 %v1020, %v1012
    %v1157 = vpack.c.b16 %v1021, %v1013
    %v1158 = vpack.c.b16 %v1022, %v1014
    %v1159 = vpack.c.b16 %v1031, %v1023
    %v1160 = vpack.c.b16 %v1032, %v1024
    %v1161 = vpack.c.b16 %v1033, %v1025
    %v1162 = vpack.c.b16 %v1034, %v1026
    %v1163 = vpack.c.b16 %v1035, %v1027
    %v1164 = vpack.c.b16 %v1036, %v1028
    %v1165 = vpack.c.b16 %v1037, %v1029
    %v1166 = vpack.c.b16 %v1038, %v1030
    %1295 = vmatprep.subr.bf16.mxu0 %v1040
    %1296 = vmatpush1.bf16.msra.mxu0 %v1039
    %1297 = vmatprep.subr.bf16.mxu0 %v1048
    %1298 = vmatpush1.bf16.msra.mxu0 %v1047
    %1299 = vmatprep.subr.bf16.mxu0 %v1056
    %1300 = vmatpush1.bf16.msra.mxu0 %v1055
    %1301 = vmatprep.subr.bf16.mxu0 %v1064
    %1302 = vmatpush1.bf16.msra.mxu0 %v1063
    %1303 = vmatprep.subr.bf16.mxu0 %v1072
    %1304 = vmatpush1.bf16.msra.mxu0 %v1071
    %1305 = vmatprep.subr.bf16.mxu0 %v1080
    %1306 = vmatpush1.bf16.msra.mxu0 %v1079
    %1307 = vmatprep.subr.bf16.mxu0 %v1088
    %1308 = vmatpush1.bf16.msra.mxu0 %v1087
    %1309 = vmatprep.subr.bf16.mxu0 %v1096
    %1310 = vmatpush1.bf16.msra.mxu0 %v1095
    %1311 = vmatprep.subr.bf16.mxu0 %v1104
    %1312 = vmatpush1.bf16.msra.mxu0 %v1103
    %1313 = vmatprep.subr.bf16.mxu0 %v1112
    %1314 = vmatpush1.bf16.msra.mxu0 %v1111
    %1315 = vmatprep.subr.bf16.mxu0 %v1120
    %1316 = vmatpush1.bf16.msra.mxu0 %v1119
    %1317 = vmatprep.subr.bf16.mxu0 %v1128
    %1318 = vmatpush1.bf16.msra.mxu0 %v1127
    %1319 = vmatprep.subr.bf16.mxu0 %v1136
    %1320 = vmatpush1.bf16.msra.mxu0 %v1135
    %1321 = vmatprep.subr.bf16.mxu0 %v1144
    %1322 = vmatpush1.bf16.msra.mxu0 %v1143
    %1323 = vmatprep.subr.bf16.mxu0 %v1152
    %1324 = vmatpush1.bf16.msra.mxu0 %v1151
    %1325 = vmatprep.subr.bf16.mxu0 %v1160
    %1326 = vmatpush1.bf16.msra.mxu0 %v1159
    %1327 = vmatprep.mubr.bf16.mxu0 0
    %1328 = vmatmul.mubr.bf16.gmra.mrb[0].mxu0 0
    %v1329 = vpop.f32.mrb[0].mxu0
    %v1330 = vadd.f32 0.0, %v1329
    %v1331 = vpop.f32.mrb[0].mxu0
    %v1332 = vadd.f32 0.0, %v1331
    %v1333 = vpop.f32.mrb[0].mxu0
    %v1334 = vpop.f32.mrb[0].mxu0
    %1335 = vdwg.mxu0
    %1336 = vmatprep.subr.bf16.mxu0 %v1042
    %1337 = vmatpush1.bf16.msra.mxu0 %v1041
    %1338 = vmatprep.subr.bf16.mxu0 %v1050
    %1339 = vmatpush1.bf16.msra.mxu0 %v1049
    %1340 = vmatprep.subr.bf16.mxu0 %v1058
    %1341 = vmatpush1.bf16.msra.mxu0 %v1057
    %1342 = vmatprep.subr.bf16.mxu0 %v1066
    %1343 = vmatpush1.bf16.msra.mxu0 %v1065
    %1344 = vmatprep.subr.bf16.mxu0 %v1074
    %1345 = vmatpush1.bf16.msra.mxu0 %v1073
    %1346 = vmatprep.subr.bf16.mxu0 %v1082
    %1347 = vmatpush1.bf16.msra.mxu0 %v1081
    %1348 = vmatprep.subr.bf16.mxu0 %v1090
    %1349 = vmatpush1.bf16.msra.mxu0 %v1089
    %1350 = vmatprep.subr.bf16.mxu0 %v1098
    %1351 = vmatpush1.bf16.msra.mxu0 %v1097
    %1352 = vmatprep.subr.bf16.mxu0 %v1106
    %1353 = vmatpush1.bf16.msra.mxu0 %v1105
    %1354 = vmatprep.subr.bf16.mxu0 %v1114
    %1355 = vmatpush1.bf16.msra.mxu0 %v1113
    %1356 = vmatprep.subr.bf16.mxu0 %v1122
    %1357 = vmatpush1.bf16.msra.mxu0 %v1121
    %1358 = vmatprep.subr.bf16.mxu0 %v1130
    %1359 = vmatpush1.bf16.msra.mxu0 %v1129
    %1360 = vmatprep.subr.bf16.mxu0 %v1138
    %1361 = vmatpush1.bf16.msra.mxu0 %v1137
    %1362 = vmatprep.subr.bf16.mxu0 %v1146
    %1363 = vmatpush1.bf16.msra.mxu0 %v1145
    %1364 = vmatprep.subr.bf16.mxu0 %v1154
    %1365 = vmatpush1.bf16.msra.mxu0 %v1153
    %1366 = vmatprep.subr.bf16.mxu0 %v1162
    %1367 = vmatpush1.bf16.msra.mxu0 %v1161
    %1368 = vmatprep.mubr.bf16.mxu0 0
    %1369 = vmatmul.mubr.bf16.gmra.mrb[0].mxu0 0
    %v1370 = vpop.f32.mrb[0].mxu0
    %v1371 = vadd.f32 0.0, %v1370
    %v1372 = vpop.f32.mrb[0].mxu0
    %v1373 = vadd.f32 0.0, %v1372
    %v1374 = vpop.f32.mrb[0].mxu0
    %v1375 = vpop.f32.mrb[0].mxu0
    %1376 = vdwg.mxu0
    %1377 = vmatprep.subr.bf16.mxu0 %v1044
    %1378 = vmatpush1.bf16.msra.mxu0 %v1043
    %1379 = vmatprep.subr.bf16.mxu0 %v1052
    %1380 = vmatpush1.bf16.msra.mxu0 %v1051
    %1381 = vmatprep.subr.bf16.mxu0 %v1060
    %1382 = vmatpush1.bf16.msra.mxu0 %v1059
    %1383 = vmatprep.subr.bf16.mxu0 %v1068
    %1384 = vmatpush1.bf16.msra.mxu0 %v1067
    %1385 = vmatprep.subr.bf16.mxu0 %v1076
    %1386 = vmatpush1.bf16.msra.mxu0 %v1075
    %1387 = vmatprep.subr.bf16.mxu0 %v1084
    %1388 = vmatpush1.bf16.msra.mxu0 %v1083
    %1389 = vmatprep.subr.bf16.mxu0 %v1092
    %1390 = vmatpush1.bf16.msra.mxu0 %v1091
    %1391 = vmatprep.subr.bf16.mxu0 %v1100
    %1392 = vmatpush1.bf16.msra.mxu0 %v1099
    %1393 = vmatprep.subr.bf16.mxu0 %v1108
    %1394 = vmatpush1.bf16.msra.mxu0 %v1107
    %1395 = vmatprep.subr.bf16.mxu0 %v1116
    %1396 = vmatpush1.bf16.msra.mxu0 %v1115
    %1397 = vmatprep.subr.bf16.mxu0 %v1124
    %1398 = vmatpush1.bf16.msra.mxu0 %v1123
    %1399 = vmatprep.subr.bf16.mxu0 %v1132
    %1400 = vmatpush1.bf16.msra.mxu0 %v1131
    %1401 = vmatprep.subr.bf16.mxu0 %v1140
    %1402 = vmatpush1.bf16.msra.mxu0 %v1139
    %1403 = vmatprep.subr.bf16.mxu0 %v1148
    %1404 = vmatpush1.bf16.msra.mxu0 %v1147
    %1405 = vmatprep.subr.bf16.mxu0 %v1156
    %1406 = vmatpush1.bf16.msra.mxu0 %v1155
    %1407 = vmatprep.subr.bf16.mxu0 %v1164
    %1408 = vmatpush1.bf16.msra.mxu0 %v1163
    %1409 = vmatprep.mubr.bf16.mxu0 0
    %1410 = vmatmul.mubr.bf16.gmra.mrb[0].mxu0 0
    %v1411 = vpop.f32.mrb[0].mxu0
    %v1412 = vadd.f32 0.0, %v1411
    %v1413 = vpop.f32.mrb[0].mxu0
    %v1414 = vadd.f32 0.0, %v1413
    %v1415 = vpop.f32.mrb[0].mxu0
    %v1416 = vpop.f32.mrb[0].mxu0
    %1417 = vdwg.mxu0
    %1418 = vmatprep.subr.bf16.mxu0 %v1046
    %1419 = vmatpush1.bf16.msra.mxu0 %v1045
    %1420 = vmatprep.subr.bf16.mxu0 %v1054
    %1421 = vmatpush1.bf16.msra.mxu0 %v1053
    %1422 = vmatprep.subr.bf16.mxu0 %v1062
    %1423 = vmatpush1.bf16.msra.mxu0 %v1061
    %1424 = vmatprep.subr.bf16.mxu0 %v1070
    %1425 = vmatpush1.bf16.msra.mxu0 %v1069
    %1426 = vmatprep.subr.bf16.mxu0 %v1078
    %1427 = vmatpush1.bf16.msra.mxu0 %v1077
    %1428 = vmatprep.subr.bf16.mxu0 %v1086
    %1429 = vmatpush1.bf16.msra.mxu0 %v1085
    %1430 = vmatprep.subr.bf16.mxu0 %v1094
    %1431 = vmatpush1.bf16.msra.mxu0 %v1093
    %1432 = vmatprep.subr.bf16.mxu0 %v1102
    %1433 = vmatpush1.bf16.msra.mxu0 %v1101
    %1434 = vmatprep.subr.bf16.mxu0 %v1110
    %1435 = vmatpush1.bf16.msra.mxu0 %v1109
    %1436 = vmatprep.subr.bf16.mxu0 %v1118
    %1437 = vmatpush1.bf16.msra.mxu0 %v1117
    %1438 = vmatprep.subr.bf16.mxu0 %v1126
    %1439 = vmatpush1.bf16.msra.mxu0 %v1125
    %1440 = vmatprep.subr.bf16.mxu0 %v1134
    %1441 = vmatpush1.bf16.msra.mxu0 %v1133
    %1442 = vmatprep.subr.bf16.mxu0 %v1142
    %1443 = vmatpush1.bf16.msra.mxu0 %v1141
    %1444 = vmatprep.subr.bf16.mxu0 %v1150
    %1445 = vmatpush1.bf16.msra.mxu0 %v1149
    %1446 = vmatprep.subr.bf16.mxu0 %v1158
    %1447 = vmatpush1.bf16.msra.mxu0 %v1157
    %1448 = vmatprep.subr.bf16.mxu0 %v1166
    %1449 = vmatpush1.bf16.msra.mxu0 %v1165
    %1450 = vmatprep.mubr.bf16.mxu0 0
    %1451 = vmatmul.mubr.bf16.gmra.mrb[0].mxu0 0
    %v1452 = vpop.f32.mrb[0].mxu0
    %v1453 = vadd.f32 0.0, %v1452
    %v1454 = vpop.f32.mrb[0].mxu0
    %v1455 = vadd.f32 0.0, %v1454
    %v1456 = vpop.f32.mrb[0].mxu0
    %v1457 = vpop.f32.mrb[0].mxu0
    %1458 = vdwg.mxu0
    %v1459 = vadd.f32 %v270, %v1330
    %v1460 = vadd.f32 %v272, %v1332
    %v1461 = vadd.f32 %v343, %v1371
    %v1462 = vadd.f32 %v345, %v1373
    %v1463 = vadd.f32 %v416, %v1412
    %v1464 = vadd.f32 %v418, %v1414
    %v1465 = vadd.f32 %v489, %v1453
    %v1466 = vadd.f32 %v491, %v1455
    %v1467 = vxor.u32 %v1459, 2147483648
    %v1468 = vxor.u32 %v1460, 2147483648
    %v1469 = vmul.f32 %v1467, 1.442695
    %v1470 = vpow.pop %v1469
    %v1471 = vmul.f32 %v1468, 1.442695
    %v1472 = vpow.pop %v1471
    %v1473 = vadd.f32 %v1470, 1.0
    %v1474 = vadd.f32 %v1472, 1.0
    %v1475 = vrcp.pop %v1473
    %v1476 = vmul.f32 1.0, %v1475
    %v1477 = vrcp.pop %v1474
    %v1478 = vmul.f32 1.0, %v1477
    %v1479 = vxor.u32 %v1461, 2147483648
    %v1480 = vxor.u32 %v1462, 2147483648
    %v1481 = vmul.f32 %v1479, 1.442695
    %v1482 = vpow.pop %v1481
    %v1483 = vmul.f32 %v1480, 1.442695
    %v1484 = vpow.pop %v1483
    %v1485 = vadd.f32 %v1482, 1.0
    %v1486 = vadd.f32 %v1484, 1.0
    %v1487 = vrcp.pop %v1485
    %v1488 = vmul.f32 1.0, %v1487
    %v1489 = vrcp.pop %v1486
    %v1490 = vmul.f32 1.0, %v1489
    %v1491 = vtanh.pop %v1463
    %v1492 = vtanh.pop %v1464
    %v1493 = vxor.u32 %v1465, 2147483648
    %v1494 = vxor.u32 %v1466, 2147483648
    %v1495 = vmul.f32 %v1493, 1.442695
    %v1496 = vpow.pop %v1495
    %v1497 = vmul.f32 %v1494, 1.442695
    %v1498 = vpow.pop %v1497
    %v1499 = vadd.f32 %v1496, 1.0
    %v1500 = vadd.f32 %v1498, 1.0
    %v1501 = vrcp.pop %v1499
    %v1502 = vmul.f32 1.0, %v1501
    %v1503 = vrcp.pop %v1500
    %v1504 = vmul.f32 1.0, %v1503
    %v1505 = vmul.f32 %v1488, 0.0
    %v1506 = vmul.f32 %v1490, 0.0
    %v1507 = vmul.f32 %v1476, %v1491
    %v1508 = vmul.f32 %v1478, %v1492
    %v1509 = vadd.f32 %v1505, %v1507
    %v1510 = vadd.f32 %v1506, %v1508
    %v1511 = vtanh.pop %v1509
    %v1512 = vtanh.pop %v1510
    %v1513 = vmul.f32 %v1502, %v1511
    %v1514 = vmul.f32 %v1504, %v1512
    %v1515 = vpack.c.bf16 %v1513, %v1513
    %v1516 = vpack.c.bf16 %v1514, %v1514
    %1517 = vmatprep.subr.bf16.mxu0 %v1040
    %1518 = vmatpush1.bf16.msra.mxu0 %v1039
    %1519 = vmatprep.subr.bf16.mxu0 %v1048
    %1520 = vmatpush1.bf16.msra.mxu0 %v1047
    %1521 = vmatprep.subr.bf16.mxu0 %v1056
    %1522 = vmatpush1.bf16.msra.mxu0 %v1055
    %1523 = vmatprep.subr.bf16.mxu0 %v1064
    %1524 = vmatpush1.bf16.msra.mxu0 %v1063
    %1525 = vmatprep.subr.bf16.mxu0 %v1072
    %1526 = vmatpush1.bf16.msra.mxu0 %v1071
    %1527 = vmatprep.subr.bf16.mxu0 %v1080
    %1528 = vmatpush1.bf16.msra.mxu0 %v1079
    %1529 = vmatprep.subr.bf16.mxu0 %v1088
    %1530 = vmatpush1.bf16.msra.mxu0 %v1087
    %1531 = vmatprep.subr.bf16.mxu0 %v1096
    %1532 = vmatpush1.bf16.msra.mxu0 %v1095
    %1533 = vmatprep.subr.bf16.mxu0 %v1104
    %1534 = vmatpush1.bf16.msra.mxu0 %v1103
    %1535 = vmatprep.subr.bf16.mxu0 %v1112
    %1536 = vmatpush1.bf16.msra.mxu0 %v1111
    %1537 = vmatprep.subr.bf16.mxu0 %v1120
    %1538 = vmatpush1.bf16.msra.mxu0 %v1119
    %1539 = vmatprep.subr.bf16.mxu0 %v1128
    %1540 = vmatpush1.bf16.msra.mxu0 %v1127
    %1541 = vmatprep.subr.bf16.mxu0 %v1136
    %1542 = vmatpush1.bf16.msra.mxu0 %v1135
    %1543 = vmatprep.subr.bf16.mxu0 %v1144
    %1544 = vmatpush1.bf16.msra.mxu0 %v1143
    %1545 = vmatprep.subr.bf16.mxu0 %v1152
    %1546 = vmatpush1.bf16.msra.mxu0 %v1151
    %1547 = vmatprep.subr.bf16.mxu0 %v1160
    %1548 = vmatpush1.bf16.msra.mxu0 %v1159
    %1549 = vmatprep.mubr.bf16.mxu0 %v1516
    %1550 = vmatmul.mubr.bf16.gmra.mrb[0].mxu0 %v1515
    %v1551 = vpop.f32.mrb[0].mxu0
    %v1552 = vadd.f32 0.0, %v1551
    %v1553 = vpop.f32.mrb[0].mxu0
    %v1554 = vadd.f32 0.0, %v1553
    %v1555 = vpop.f32.mrb[0].mxu0
    %v1556 = vpop.f32.mrb[0].mxu0
    %1557 = vdwg.mxu0
    %1558 = vmatprep.subr.bf16.mxu0 %v1042
    %1559 = vmatpush1.bf16.msra.mxu0 %v1041
    %1560 = vmatprep.subr.bf16.mxu0 %v1050
    %1561 = vmatpush1.bf16.msra.mxu0 %v1049
    %1562 = vmatprep.subr.bf16.mxu0 %v1058
    %1563 = vmatpush1.bf16.msra.mxu0 %v1057
    %1564 = vmatprep.subr.bf16.mxu0 %v1066
    %1565 = vmatpush1.bf16.msra.mxu0 %v1065
    %1566 = vmatprep.subr.bf16.mxu0 %v1074
    %1567 = vmatpush1.bf16.msra.mxu0 %v1073
    %1568 = vmatprep.subr.bf16.mxu0 %v1082
    %1569 = vmatpush1.bf16.msra.mxu0 %v1081
    %1570 = vmatprep.subr.bf16.mxu0 %v1090
    %1571 = vmatpush1.bf16.msra.mxu0 %v1089
    %1572 = vmatprep.subr.bf16.mxu0 %v1098
    %1573 = vmatpush1.bf16.msra.mxu0 %v1097
    %1574 = vmatprep.subr.bf16.mxu0 %v1106
    %1575 = vmatpush1.bf16.msra.mxu0 %v1105
    %1576 = vmatprep.subr.bf16.mxu0 %v1114
    %1577 = vmatpush1.bf16.msra.mxu0 %v1113
    %1578 = vmatprep.subr.bf16.mxu0 %v1122
    %1579 = vmatpush1.bf16.msra.mxu0 %v1121
    %1580 = vmatprep.subr.bf16.mxu0 %v1130
    %1581 = vmatpush1.bf16.msra.mxu0 %v1129
    %1582 = vmatprep.subr.bf16.mxu0 %v1138
    %1583 = vmatpush1.bf16.msra.mxu0 %v1137
    %1584 = vmatprep.subr.bf16.mxu0 %v1146
    %1585 = vmatpush1.bf16.msra.mxu0 %v1145
    %1586 = vmatprep.subr.bf16.mxu0 %v1154
    %1587 = vmatpush1.bf16.msra.mxu0 %v1153
    %1588 = vmatprep.subr.bf16.mxu0 %v1162
    %1589 = vmatpush1.bf16.msra.mxu0 %v1161
    %1590 = vmatprep.mubr.bf16.mxu0 %v1516
    %1591 = vmatmul.mubr.bf16.gmra.mrb[0].mxu0 %v1515
    %v1592 = vpop.f32.mrb[0].mxu0
    %v1593 = vadd.f32 0.0, %v1592
    %v1594 = vpop.f32.mrb[0].mxu0
    %v1595 = vadd.f32 0.0, %v1594
    %v1596 = vpop.f32.mrb[0].mxu0
    %v1597 = vpop.f32.mrb[0].mxu0
    %1598 = vdwg.mxu0
    %1599 = vmatprep.subr.bf16.mxu0 %v1044
    %1600 = vmatpush1.bf16.msra.mxu0 %v1043
    %1601 = vmatprep.subr.bf16.mxu0 %v1052
    %1602 = vmatpush1.bf16.msra.mxu0 %v1051
    %1603 = vmatprep.subr.bf16.mxu0 %v1060
    %1604 = vmatpush1.bf16.msra.mxu0 %v1059
    %1605 = vmatprep.subr.bf16.mxu0 %v1068
    %1606 = vmatpush1.bf16.msra.mxu0 %v1067
    %1607 = vmatprep.subr.bf16.mxu0 %v1076
    %1608 = vmatpush1.bf16.msra.mxu0 %v1075
    %1609 = vmatprep.subr.bf16.mxu0 %v1084
    %1610 = vmatpush1.bf16.msra.mxu0 %v1083
    %1611 = vmatprep.subr.bf16.mxu0 %v1092
    %1612 = vmatpush1.bf16.msra.mxu0 %v1091
    %1613 = vmatprep.subr.bf16.mxu0 %v1100
    %1614 = vmatpush1.bf16.msra.mxu0 %v1099
    %1615 = vmatprep.subr.bf16.mxu0 %v1108
    %1616 = vmatpush1.bf16.msra.mxu0 %v1107
    %1617 = vmatprep.subr.bf16.mxu0 %v1116
    %1618 = vmatpush1.bf16.msra.mxu0 %v1115
    %1619 = vmatprep.subr.bf16.mxu0 %v1124
    %1620 = vmatpush1.bf16.msra.mxu0 %v1123
    %1621 = vmatprep.subr.bf16.mxu0 %v1132
    %1622 = vmatpush1.bf16.msra.mxu0 %v1131
    %1623 = vmatprep.subr.bf16.mxu0 %v1140
    %1624 = vmatpush1.bf16.msra.mxu0 %v1139
    %1625 = vmatprep.subr.bf16.mxu0 %v1148
    %1626 = vmatpush1.bf16.msra.mxu0 %v1147
    %1627 = vmatprep.subr.bf16.mxu0 %v1156
    %1628 = vmatpush1.bf16.msra.mxu0 %v1155
    %1629 = vmatprep.subr.bf16.mxu0 %v1164
    %1630 = vmatpush1.bf16.msra.mxu0 %v1163
    %1631 = vmatprep.mubr.bf16.mxu0 %v1516
    %1632 = vmatmul.mubr.bf16.gmra.mrb[0].mxu0 %v1515
    %v1633 = vpop.f32.mrb[0].mxu0
    %v1634 = vadd.f32 0.0, %v1633
    %v1635 = vpop.f32.mrb[0].mxu0
    %v1636 = vadd.f32 0.0, %v1635
    %v1637 = vpop.f32.mrb[0].mxu0
    %v1638 = vpop.f32.mrb[0].mxu0
    %1639 = vdwg.mxu0
    %1640 = vmatprep.subr.bf16.mxu0 %v1046
    %1641 = vmatpush1.bf16.msra.mxu0 %v1045
    %1642 = vmatprep.subr.bf16.mxu0 %v1054
    %1643 = vmatpush1.bf16.msra.mxu0 %v1053
    %1644 = vmatprep.subr.bf16.mxu0 %v1062
    %1645 = vmatpush1.bf16.msra.mxu0 %v1061
    %1646 = vmatprep.subr.bf16.mxu0 %v1070
    %1647 = vmatpush1.bf16.msra.mxu0 %v1069
    %1648 = vmatprep.subr.bf16.mxu0 %v1078
    %1649 = vmatpush1.bf16.msra.mxu0 %v1077
    %1650 = vmatprep.subr.bf16.mxu0 %v1086
    %1651 = vmatpush1.bf16.msra.mxu0 %v1085
    %1652 = vmatprep.subr.bf16.mxu0 %v1094
    %1653 = vmatpush1.bf16.msra.mxu0 %v1093
    %1654 = vmatprep.subr.bf16.mxu0 %v1102
    %1655 = vmatpush1.bf16.msra.mxu0 %v1101
    %1656 = vmatprep.subr.bf16.mxu0 %v1110
    %1657 = vmatpush1.bf16.msra.mxu0 %v1109
    %1658 = vmatprep.subr.bf16.mxu0 %v1118
    %1659 = vmatpush1.bf16.msra.mxu0 %v1117
    %1660 = vmatprep.subr.bf16.mxu0 %v1126
    %1661 = vmatpush1.bf16.msra.mxu0 %v1125
    %1662 = vmatprep.subr.bf16.mxu0 %v1134
    %1663 = vmatpush1.bf16.msra.mxu0 %v1133
    %1664 = vmatprep.subr.bf16.mxu0 %v1142
    %1665 = vmatpush1.bf16.msra.mxu0 %v1141
    %1666 = vmatprep.subr.bf16.mxu0 %v1150
    %1667 = vmatpush1.bf16.msra.mxu0 %v1149
    %1668 = vmatprep.subr.bf16.mxu0 %v1158
    %1669 = vmatpush1.bf16.msra.mxu0 %v1157
    %1670 = vmatprep.subr.bf16.mxu0 %v1166
    %1671 = vmatpush1.bf16.msra.mxu0 %v1165
    %1672 = vmatprep.mubr.bf16.mxu0 %v1516
    %1673 = vmatmul.mubr.bf16.gmra.mrb[0].mxu0 %v1515
    %v1674 = vpop.f32.mrb[0].mxu0
    %v1675 = vadd.f32 0.0, %v1674
    %v1676 = vpop.f32.mrb[0].mxu0
    %v1677 = vadd.f32 0.0, %v1676
    %v1678 = vpop.f32.mrb[0].mxu0
    %v1679 = vpop.f32.mrb[0].mxu0
    %1680 = vdwg.mxu0
    %v1681 = vadd.f32 %v274, %v1552
    %v1682 = vadd.f32 %v276, %v1554
    %v1683 = vadd.f32 %v347, %v1593
    %v1684 = vadd.f32 %v349, %v1595
    %v1685 = vadd.f32 %v420, %v1634
    %v1686 = vadd.f32 %v422, %v1636
    %v1687 = vadd.f32 %v493, %v1675
    %v1688 = vadd.f32 %v495, %v1677
    %v1689 = vxor.u32 %v1681, 2147483648
    %v1690 = vxor.u32 %v1682, 2147483648
    %v1691 = vmul.f32 %v1689, 1.442695
    %v1692 = vpow.pop %v1691
    %v1693 = vmul.f32 %v1690, 1.442695
    %v1694 = vpow.pop %v1693
    %v1695 = vadd.f32 %v1692, 1.0
    %v1696 = vadd.f32 %v1694, 1.0
    %v1697 = vrcp.pop %v1695
    %v1698 = vmul.f32 1.0, %v1697
    %v1699 = vrcp.pop %v1696
    %v1700 = vmul.f32 1.0, %v1699
    %v1701 = vxor.u32 %v1683, 2147483648
    %v1702 = vxor.u32 %v1684, 2147483648
    %v1703 = vmul.f32 %v1701, 1.442695
    %v1704 = vpow.pop %v1703
    %v1705 = vmul.f32 %v1702, 1.442695
    %v1706 = vpow.pop %v1705
    %v1707 = vadd.f32 %v1704, 1.0
    %v1708 = vadd.f32 %v1706, 1.0
    %v1709 = vrcp.pop %v1707
    %v1710 = vmul.f32 1.0, %v1709
    %v1711 = vrcp.pop %v1708
    %v1712 = vmul.f32 1.0, %v1711
    %v1713 = vtanh.pop %v1685
    %v1714 = vtanh.pop %v1686
    %v1715 = vxor.u32 %v1687, 2147483648
    %v1716 = vxor.u32 %v1688, 2147483648
    %v1717 = vmul.f32 %v1715, 1.442695
    %v1718 = vpow.pop %v1717
    %v1719 = vmul.f32 %v1716, 1.442695
    %v1720 = vpow.pop %v1719
    %v1721 = vadd.f32 %v1718, 1.0
    %v1722 = vadd.f32 %v1720, 1.0
    %v1723 = vrcp.pop %v1721
    %v1724 = vmul.f32 1.0, %v1723
    %v1725 = vrcp.pop %v1722
    %v1726 = vmul.f32 1.0, %v1725
    %v1727 = vmul.f32 %v1710, %v1509
    %v1728 = vmul.f32 %v1712, %v1510
    %v1729 = vmul.f32 %v1698, %v1713
    %v1730 = vmul.f32 %v1700, %v1714
    %v1731 = vadd.f32 %v1727, %v1729
    %v1732 = vadd.f32 %v1728, %v1730
    %v1733 = vtanh.pop %v1731
    %v1734 = vtanh.pop %v1732
    %v1735 = vmul.f32 %v1724, %v1733
    %v1736 = vmul.f32 %v1726, %v1734
    %v1737 = vpack.c.bf16 %v1735, %v1735
    %v1738 = vpack.c.bf16 %v1736, %v1736
    %1739 = vmatprep.subr.bf16.mxu0 %v1040
    %1740 = vmatpush1.bf16.msra.mxu0 %v1039
    %1741 = vmatprep.subr.bf16.mxu0 %v1048
    %1742 = vmatpush1.bf16.msra.mxu0 %v1047
    %1743 = vmatprep.subr.bf16.mxu0 %v1056
    %1744 = vmatpush1.bf16.msra.mxu0 %v1055
    %1745 = vmatprep.subr.bf16.mxu0 %v1064
    %1746 = vmatpush1.bf16.msra.mxu0 %v1063
    %1747 = vmatprep.subr.bf16.mxu0 %v1072
    %1748 = vmatpush1.bf16.msra.mxu0 %v1071
    %1749 = vmatprep.subr.bf16.mxu0 %v1080
    %1750 = vmatpush1.bf16.msra.mxu0 %v1079
    %1751 = vmatprep.subr.bf16.mxu0 %v1088
    %1752 = vmatpush1.bf16.msra.mxu0 %v1087
    %1753 = vmatprep.subr.bf16.mxu0 %v1096
    %1754 = vmatpush1.bf16.msra.mxu0 %v1095
    %1755 = vmatprep.subr.bf16.mxu0 %v1104
    %1756 = vmatpush1.bf16.msra.mxu0 %v1103
    %1757 = vmatprep.subr.bf16.mxu0 %v1112
    %1758 = vmatpush1.bf16.msra.mxu0 %v1111
    %1759 = vmatprep.subr.bf16.mxu0 %v1120
    %1760 = vmatpush1.bf16.msra.mxu0 %v1119
    %1761 = vmatprep.subr.bf16.mxu0 %v1128
    %1762 = vmatpush1.bf16.msra.mxu0 %v1127
    %1763 = vmatprep.subr.bf16.mxu0 %v1136
    %1764 = vmatpush1.bf16.msra.mxu0 %v1135
    %1765 = vmatprep.subr.bf16.mxu0 %v1144
    %1766 = vmatpush1.bf16.msra.mxu0 %v1143
    %1767 = vmatprep.subr.bf16.mxu0 %v1152
    %1768 = vmatpush1.bf16.msra.mxu0 %v1151
    %1769 = vmatprep.subr.bf16.mxu0 %v1160
    %1770 = vmatpush1.bf16.msra.mxu0 %v1159
    %1771 = vmatprep.mubr.bf16.mxu0 %v1738
    %1772 = vmatmul.mubr.bf16.gmra.mrb[0].mxu0 %v1737
    %v1773 = vpop.f32.mrb[0].mxu0
    %v1774 = vadd.f32 0.0, %v1773
    %v1775 = vpop.f32.mrb[0].mxu0
    %v1776 = vadd.f32 0.0, %v1775
    %v1777 = vpop.f32.mrb[0].mxu0
    %v1778 = vpop.f32.mrb[0].mxu0
    %1779 = vdwg.mxu0
    %1780 = vmatprep.subr.bf16.mxu0 %v1042
    %1781 = vmatpush1.bf16.msra.mxu0 %v1041
    %1782 = vmatprep.subr.bf16.mxu0 %v1050
    %1783 = vmatpush1.bf16.msra.mxu0 %v1049
    %1784 = vmatprep.subr.bf16.mxu0 %v1058
    %1785 = vmatpush1.bf16.msra.mxu0 %v1057
    %1786 = vmatprep.subr.bf16.mxu0 %v1066
    %1787 = vmatpush1.bf16.msra.mxu0 %v1065
    %1788 = vmatprep.subr.bf16.mxu0 %v1074
    %1789 = vmatpush1.bf16.msra.mxu0 %v1073
    %1790 = vmatprep.subr.bf16.mxu0 %v1082
    %1791 = vmatpush1.bf16.msra.mxu0 %v1081
    %1792 = vmatprep.subr.bf16.mxu0 %v1090
    %1793 = vmatpush1.bf16.msra.mxu0 %v1089
    %1794 = vmatprep.subr.bf16.mxu0 %v1098
    %1795 = vmatpush1.bf16.msra.mxu0 %v1097
    %1796 = vmatprep.subr.bf16.mxu0 %v1106
    %1797 = vmatpush1.bf16.msra.mxu0 %v1105
    %1798 = vmatprep.subr.bf16.mxu0 %v1114
    %1799 = vmatpush1.bf16.msra.mxu0 %v1113
    %1800 = vmatprep.subr.bf16.mxu0 %v1122
    %1801 = vmatpush1.bf16.msra.mxu0 %v1121
    %1802 = vmatprep.subr.bf16.mxu0 %v1130
    %1803 = vmatpush1.bf16.msra.mxu0 %v1129
    %1804 = vmatprep.subr.bf16.mxu0 %v1138
    %1805 = vmatpush1.bf16.msra.mxu0 %v1137
    %1806 = vmatprep.subr.bf16.mxu0 %v1146
    %1807 = vmatpush1.bf16.msra.mxu0 %v1145
    %1808 = vmatprep.subr.bf16.mxu0 %v1154
    %1809 = vmatpush1.bf16.msra.mxu0 %v1153
    %1810 = vmatprep.subr.bf16.mxu0 %v1162
    %1811 = vmatpush1.bf16.msra.mxu0 %v1161
    %1812 = vmatprep.mubr.bf16.mxu0 %v1738
    %1813 = vmatmul.mubr.bf16.gmra.mrb[0].mxu0 %v1737
    %v1814 = vpop.f32.mrb[0].mxu0
    %v1815 = vadd.f32 0.0, %v1814
    %v1816 = vpop.f32.mrb[0].mxu0
    %v1817 = vadd.f32 0.0, %v1816
    %v1818 = vpop.f32.mrb[0].mxu0
    %v1819 = vpop.f32.mrb[0].mxu0
    %1820 = vdwg.mxu0
    %1821 = vmatprep.subr.bf16.mxu0 %v1044
    %1822 = vmatpush1.bf16.msra.mxu0 %v1043
    %1823 = vmatprep.subr.bf16.mxu0 %v1052
    %1824 = vmatpush1.bf16.msra.mxu0 %v1051
    %1825 = vmatprep.subr.bf16.mxu0 %v1060
    %1826 = vmatpush1.bf16.msra.mxu0 %v1059
    %1827 = vmatprep.subr.bf16.mxu0 %v1068
    %1828 = vmatpush1.bf16.msra.mxu0 %v1067
    %1829 = vmatprep.subr.bf16.mxu0 %v1076
    %1830 = vmatpush1.bf16.msra.mxu0 %v1075
    %1831 = vmatprep.subr.bf16.mxu0 %v1084
    %1832 = vmatpush1.bf16.msra.mxu0 %v1083
    %1833 = vmatprep.subr.bf16.mxu0 %v1092
    %1834 = vmatpush1.bf16.msra.mxu0 %v1091
    %1835 = vmatprep.subr.bf16.mxu0 %v1100
    %1836 = vmatpush1.bf16.msra.mxu0 %v1099
    %1837 = vmatprep.subr.bf16.mxu0 %v1108
    %1838 = vmatpush1.bf16.msra.mxu0 %v1107
    %1839 = vmatprep.subr.bf16.mxu0 %v1116
    %1840 = vmatpush1.bf16.msra.mxu0 %v1115
    %1841 = vmatprep.subr.bf16.mxu0 %v1124
    %1842 = vmatpush1.bf16.msra.mxu0 %v1123
    %1843 = vmatprep.subr.bf16.mxu0 %v1132
    %1844 = vmatpush1.bf16.msra.mxu0 %v1131
    %1845 = vmatprep.subr.bf16.mxu0 %v1140
    %1846 = vmatpush1.bf16.msra.mxu0 %v1139
    %1847 = vmatprep.subr.bf16.mxu0 %v1148
    %1848 = vmatpush1.bf16.msra.mxu0 %v1147
    %1849 = vmatprep.subr.bf16.mxu0 %v1156
    %1850 = vmatpush1.bf16.msra.mxu0 %v1155
    %1851 = vmatprep.subr.bf16.mxu0 %v1164
    %1852 = vmatpush1.bf16.msra.mxu0 %v1163
    %1853 = vmatprep.mubr.bf16.mxu0 %v1738
    %1854 = vmatmul.mubr.bf16.gmra.mrb[0].mxu0 %v1737
    %v1855 = vpop.f32.mrb[0].mxu0
    %v1856 = vadd.f32 0.0, %v1855
    %v1857 = vpop.f32.mrb[0].mxu0
    %v1858 = vadd.f32 0.0, %v1857
    %v1859 = vpop.f32.mrb[0].mxu0
    %v1860 = vpop.f32.mrb[0].mxu0
    %1861 = vdwg.mxu0
    %1862 = vmatprep.subr.bf16.mxu0 %v1046
    %1863 = vmatpush1.bf16.msra.mxu0 %v1045
    %1864 = vmatprep.subr.bf16.mxu0 %v1054
    %1865 = vmatpush1.bf16.msra.mxu0 %v1053
    %1866 = vmatprep.subr.bf16.mxu0 %v1062
    %1867 = vmatpush1.bf16.msra.mxu0 %v1061
    %1868 = vmatprep.subr.bf16.mxu0 %v1070
    %1869 = vmatpush1.bf16.msra.mxu0 %v1069
    %1870 = vmatprep.subr.bf16.mxu0 %v1078
    %1871 = vmatpush1.bf16.msra.mxu0 %v1077
    %1872 = vmatprep.subr.bf16.mxu0 %v1086
    %1873 = vmatpush1.bf16.msra.mxu0 %v1085
    %1874 = vmatprep.subr.bf16.mxu0 %v1094
    %1875 = vmatpush1.bf16.msra.mxu0 %v1093
    %1876 = vmatprep.subr.bf16.mxu0 %v1102
    %1877 = vmatpush1.bf16.msra.mxu0 %v1101
    %1878 = vmatprep.subr.bf16.mxu0 %v1110
    %1879 = vmatpush1.bf16.msra.mxu0 %v1109
    %1880 = vmatprep.subr.bf16.mxu0 %v1118
    %1881 = vmatpush1.bf16.msra.mxu0 %v1117
    %1882 = vmatprep.subr.bf16.mxu0 %v1126
    %1883 = vmatpush1.bf16.msra.mxu0 %v1125
    %1884 = vmatprep.subr.bf16.mxu0 %v1134
    %1885 = vmatpush1.bf16.msra.mxu0 %v1133
    %1886 = vmatprep.subr.bf16.mxu0 %v1142
    %1887 = vmatpush1.bf16.msra.mxu0 %v1141
    %1888 = vmatprep.subr.bf16.mxu0 %v1150
    %1889 = vmatpush1.bf16.msra.mxu0 %v1149
    %1890 = vmatprep.subr.bf16.mxu0 %v1158
    %1891 = vmatpush1.bf16.msra.mxu0 %v1157
    %1892 = vmatprep.subr.bf16.mxu0 %v1166
    %1893 = vmatpush1.bf16.msra.mxu0 %v1165
    %1894 = vmatprep.mubr.bf16.mxu0 %v1738
    %1895 = vmatmul.mubr.bf16.gmra.mrb[0].mxu0 %v1737
    %v1896 = vpop.f32.mrb[0].mxu0
    %v1897 = vadd.f32 0.0, %v1896
    %v1898 = vpop.f32.mrb[0].mxu0
    %v1899 = vadd.f32 0.0, %v1898
    %v1900 = vpop.f32.mrb[0].mxu0
    %v1901 = vpop.f32.mrb[0].mxu0
    %1902 = vdwg.mxu0
    %v1903 = vadd.f32 %v280, %v1774
    %v1904 = vadd.f32 %v282, %v1776
    %v1905 = vadd.f32 %v353, %v1815
    %v1906 = vadd.f32 %v355, %v1817
    %v1907 = vadd.f32 %v426, %v1856
    %v1908 = vadd.f32 %v428, %v1858
    %v1909 = vadd.f32 %v499, %v1897
    %v1910 = vadd.f32 %v501, %v1899
    %v1911 = vxor.u32 %v1903, 2147483648
    %v1912 = vxor.u32 %v1904, 2147483648
    %v1913 = vmul.f32 %v1911, 1.442695
    %v1914 = vpow.pop %v1913
    %v1915 = vmul.f32 %v1912, 1.442695
    %v1916 = vpow.pop %v1915
    %v1917 = vadd.f32 %v1914, 1.0
    %v1918 = vadd.f32 %v1916, 1.0
    %v1919 = vrcp.pop %v1917
    %v1920 = vmul.f32 1.0, %v1919
    %v1921 = vrcp.pop %v1918
    %v1922 = vmul.f32 1.0, %v1921
    %v1923 = vxor.u32 %v1905, 2147483648
    %v1924 = vxor.u32 %v1906, 2147483648
    %v1925 = vmul.f32 %v1923, 1.442695
    %v1926 = vpow.pop %v1925
    %v1927 = vmul.f32 %v1924, 1.442695
    %v1928 = vpow.pop %v1927
    %v1929 = vadd.f32 %v1926, 1.0
    %v1930 = vadd.f32 %v1928, 1.0
    %v1931 = vrcp.pop %v1929
    %v1932 = vmul.f32 1.0, %v1931
    %v1933 = vrcp.pop %v1930
    %v1934 = vmul.f32 1.0, %v1933
    %v1935 = vtanh.pop %v1907
    %v1936 = vtanh.pop %v1908
    %v1937 = vxor.u32 %v1909, 2147483648
    %v1938 = vxor.u32 %v1910, 2147483648
    %v1939 = vmul.f32 %v1937, 1.442695
    %v1940 = vpow.pop %v1939
    %v1941 = vmul.f32 %v1938, 1.442695
    %v1942 = vpow.pop %v1941
    %v1943 = vadd.f32 %v1940, 1.0
    %v1944 = vadd.f32 %v1942, 1.0
    %v1945 = vrcp.pop %v1943
    %v1946 = vmul.f32 1.0, %v1945
    %v1947 = vrcp.pop %v1944
    %v1948 = vmul.f32 1.0, %v1947
    %v1949 = vmul.f32 %v1932, %v1731
    %v1950 = vmul.f32 %v1934, %v1732
    %v1951 = vmul.f32 %v1920, %v1935
    %v1952 = vmul.f32 %v1922, %v1936
    %v1953 = vadd.f32 %v1949, %v1951
    %v1954 = vadd.f32 %v1950, %v1952
    %v1955 = vtanh.pop %v1953
    %v1956 = vtanh.pop %v1954
    %v1957 = vmul.f32 %v1946, %v1955
    %v1958 = vmul.f32 %v1948, %v1956
    %v1959 = vpack.c.bf16 %v1957, %v1957
    %v1960 = vpack.c.bf16 %v1958, %v1958
    %1961 = vmatprep.subr.bf16.mxu0 %v1040
    %1962 = vmatpush1.bf16.msra.mxu0 %v1039
    %1963 = vmatprep.subr.bf16.mxu0 %v1048
    %1964 = vmatpush1.bf16.msra.mxu0 %v1047
    %1965 = vmatprep.subr.bf16.mxu0 %v1056
    %1966 = vmatpush1.bf16.msra.mxu0 %v1055
    %1967 = vmatprep.subr.bf16.mxu0 %v1064
    %1968 = vmatpush1.bf16.msra.mxu0 %v1063
    %1969 = vmatprep.subr.bf16.mxu0 %v1072
    %1970 = vmatpush1.bf16.msra.mxu0 %v1071
    %1971 = vmatprep.subr.bf16.mxu0 %v1080
    %1972 = vmatpush1.bf16.msra.mxu0 %v1079
    %1973 = vmatprep.subr.bf16.mxu0 %v1088
    %1974 = vmatpush1.bf16.msra.mxu0 %v1087
    %1975 = vmatprep.subr.bf16.mxu0 %v1096
    %1976 = vmatpush1.bf16.msra.mxu0 %v1095
    %1977 = vmatprep.subr.bf16.mxu0 %v1104
    %1978 = vmatpush1.bf16.msra.mxu0 %v1103
    %1979 = vmatprep.subr.bf16.mxu0 %v1112
    %1980 = vmatpush1.bf16.msra.mxu0 %v1111
    %1981 = vmatprep.subr.bf16.mxu0 %v1120
    %1982 = vmatpush1.bf16.msra.mxu0 %v1119
    %1983 = vmatprep.subr.bf16.mxu0 %v1128
    %1984 = vmatpush1.bf16.msra.mxu0 %v1127
    %1985 = vmatprep.subr.bf16.mxu0 %v1136
    %1986 = vmatpush1.bf16.msra.mxu0 %v1135
    %1987 = vmatprep.subr.bf16.mxu0 %v1144
    %1988 = vmatpush1.bf16.msra.mxu0 %v1143
    %1989 = vmatprep.subr.bf16.mxu0 %v1152
    %1990 = vmatpush1.bf16.msra.mxu0 %v1151
    %1991 = vmatprep.subr.bf16.mxu0 %v1160
    %1992 = vmatpush1.bf16.msra.mxu0 %v1159
    %1993 = vmatprep.mubr.bf16.mxu0 %v1960
    %1994 = vmatmul.mubr.bf16.gmra.mrb[0].mxu0 %v1959
    %v1995 = vpop.f32.mrb[0].mxu0
    %v1996 = vadd.f32 0.0, %v1995
    %v1997 = vpop.f32.mrb[0].mxu0
    %v1998 = vadd.f32 0.0, %v1997
    %v1999 = vpop.f32.mrb[0].mxu0
    %v2000 = vpop.f32.mrb[0].mxu0
    %2001 = vdwg.mxu0
    %2002 = vmatprep.subr.bf16.mxu0 %v1042
    %2003 = vmatpush1.bf16.msra.mxu0 %v1041
    %2004 = vmatprep.subr.bf16.mxu0 %v1050
    %2005 = vmatpush1.bf16.msra.mxu0 %v1049
    %2006 = vmatprep.subr.bf16.mxu0 %v1058
    %2007 = vmatpush1.bf16.msra.mxu0 %v1057
    %2008 = vmatprep.subr.bf16.mxu0 %v1066
    %2009 = vmatpush1.bf16.msra.mxu0 %v1065
    %2010 = vmatprep.subr.bf16.mxu0 %v1074
    %2011 = vmatpush1.bf16.msra.mxu0 %v1073
    %2012 = vmatprep.subr.bf16.mxu0 %v1082
    %2013 = vmatpush1.bf16.msra.mxu0 %v1081
    %2014 = vmatprep.subr.bf16.mxu0 %v1090
    %2015 = vmatpush1.bf16.msra.mxu0 %v1089
    %2016 = vmatprep.subr.bf16.mxu0 %v1098
    %2017 = vmatpush1.bf16.msra.mxu0 %v1097
    %2018 = vmatprep.subr.bf16.mxu0 %v1106
    %2019 = vmatpush1.bf16.msra.mxu0 %v1105
    %2020 = vmatprep.subr.bf16.mxu0 %v1114
    %2021 = vmatpush1.bf16.msra.mxu0 %v1113
    %2022 = vmatprep.subr.bf16.mxu0 %v1122
    %2023 = vmatpush1.bf16.msra.mxu0 %v1121
    %2024 = vmatprep.subr.bf16.mxu0 %v1130
    %2025 = vmatpush1.bf16.msra.mxu0 %v1129
    %2026 = vmatprep.subr.bf16.mxu0 %v1138
    %2027 = vmatpush1.bf16.msra.mxu0 %v1137
    %2028 = vmatprep.subr.bf16.mxu0 %v1146
    %2029 = vmatpush1.bf16.msra.mxu0 %v1145
    %2030 = vmatprep.subr.bf16.mxu0 %v1154
    %2031 = vmatpush1.bf16.msra.mxu0 %v1153
    %2032 = vmatprep.subr.bf16.mxu0 %v1162
    %2033 = vmatpush1.bf16.msra.mxu0 %v1161
    %2034 = vmatprep.mubr.bf16.mxu0 %v1960
    %2035 = vmatmul.mubr.bf16.gmra.mrb[0].mxu0 %v1959
    %v2036 = vpop.f32.mrb[0].mxu0
    %v2037 = vadd.f32 0.0, %v2036
    %v2038 = vpop.f32.mrb[0].mxu0
    %v2039 = vadd.f32 0.0, %v2038
    %v2040 = vpop.f32.mrb[0].mxu0
    %v2041 = vpop.f32.mrb[0].mxu0
    %2042 = vdwg.mxu0
    %2043 = vmatprep.subr.bf16.mxu0 %v1044
    %2044 = vmatpush1.bf16.msra.mxu0 %v1043
    %2045 = vmatprep.subr.bf16.mxu0 %v1052
    %2046 = vmatpush1.bf16.msra.mxu0 %v1051
    %2047 = vmatprep.subr.bf16.mxu0 %v1060
    %2048 = vmatpush1.bf16.msra.mxu0 %v1059
    %2049 = vmatprep.subr.bf16.mxu0 %v1068
    %2050 = vmatpush1.bf16.msra.mxu0 %v1067
    %2051 = vmatprep.subr.bf16.mxu0 %v1076
    %2052 = vmatpush1.bf16.msra.mxu0 %v1075
    %2053 = vmatprep.subr.bf16.mxu0 %v1084
    %2054 = vmatpush1.bf16.msra.mxu0 %v1083
    %2055 = vmatprep.subr.bf16.mxu0 %v1092
    %2056 = vmatpush1.bf16.msra.mxu0 %v1091
    %2057 = vmatprep.subr.bf16.mxu0 %v1100
    %2058 = vmatpush1.bf16.msra.mxu0 %v1099
    %2059 = vmatprep.subr.bf16.mxu0 %v1108
    %2060 = vmatpush1.bf16.msra.mxu0 %v1107
    %2061 = vmatprep.subr.bf16.mxu0 %v1116
    %2062 = vmatpush1.bf16.msra.mxu0 %v1115
    %2063 = vmatprep.subr.bf16.mxu0 %v1124
    %2064 = vmatpush1.bf16.msra.mxu0 %v1123
    %2065 = vmatprep.subr.bf16.mxu0 %v1132
    %2066 = vmatpush1.bf16.msra.mxu0 %v1131
    %2067 = vmatprep.subr.bf16.mxu0 %v1140
    %2068 = vmatpush1.bf16.msra.mxu0 %v1139
    %2069 = vmatprep.subr.bf16.mxu0 %v1148
    %2070 = vmatpush1.bf16.msra.mxu0 %v1147
    %2071 = vmatprep.subr.bf16.mxu0 %v1156
    %2072 = vmatpush1.bf16.msra.mxu0 %v1155
    %2073 = vmatprep.subr.bf16.mxu0 %v1164
    %2074 = vmatpush1.bf16.msra.mxu0 %v1163
    %2075 = vmatprep.mubr.bf16.mxu0 %v1960
    %2076 = vmatmul.mubr.bf16.gmra.mrb[0].mxu0 %v1959
    %v2077 = vpop.f32.mrb[0].mxu0
    %v2078 = vadd.f32 0.0, %v2077
    %v2079 = vpop.f32.mrb[0].mxu0
    %v2080 = vadd.f32 0.0, %v2079
    %v2081 = vpop.f32.mrb[0].mxu0
    %v2082 = vpop.f32.mrb[0].mxu0
    %2083 = vdwg.mxu0
    %2084 = vmatprep.subr.bf16.mxu0 %v1046
    %2085 = vmatpush1.bf16.msra.mxu0 %v1045
    %2086 = vmatprep.subr.bf16.mxu0 %v1054
    %2087 = vmatpush1.bf16.msra.mxu0 %v1053
    %2088 = vmatprep.subr.bf16.mxu0 %v1062
    %2089 = vmatpush1.bf16.msra.mxu0 %v1061
    %2090 = vmatprep.subr.bf16.mxu0 %v1070
    %2091 = vmatpush1.bf16.msra.mxu0 %v1069
    %2092 = vmatprep.subr.bf16.mxu0 %v1078
    %2093 = vmatpush1.bf16.msra.mxu0 %v1077
    %2094 = vmatprep.subr.bf16.mxu0 %v1086
    %2095 = vmatpush1.bf16.msra.mxu0 %v1085
    %2096 = vmatprep.subr.bf16.mxu0 %v1094
    %2097 = vmatpush1.bf16.msra.mxu0 %v1093
    %2098 = vmatprep.subr.bf16.mxu0 %v1102
    %2099 = vmatpush1.bf16.msra.mxu0 %v1101
    %2100 = vmatprep.subr.bf16.mxu0 %v1110
    %2101 = vmatpush1.bf16.msra.mxu0 %v1109
    %2102 = vmatprep.subr.bf16.mxu0 %v1118
    %2103 = vmatpush1.bf16.msra.mxu0 %v1117
    %2104 = vmatprep.subr.bf16.mxu0 %v1126
    %2105 = vmatpush1.bf16.msra.mxu0 %v1125
    %2106 = vmatprep.subr.bf16.mxu0 %v1134
    %2107 = vmatpush1.bf16.msra.mxu0 %v1133
    %2108 = vmatprep.subr.bf16.mxu0 %v1142
    %2109 = vmatpush1.bf16.msra.mxu0 %v1141
    %2110 = vmatprep.subr.bf16.mxu0 %v1150
    %2111 = vmatpush1.bf16.msra.mxu0 %v1149
    %2112 = vmatprep.subr.bf16.mxu0 %v1158
    %2113 = vmatpush1.bf16.msra.mxu0 %v1157
    %2114 = vmatprep.subr.bf16.mxu0 %v1166
    %2115 = vmatpush1.bf16.msra.mxu0 %v1165
    %2116 = vmatprep.mubr.bf16.mxu0 %v1960
    %2117 = vmatmul.mubr.bf16.gmra.mrb[0].mxu0 %v1959
    %v2118 = vpop.f32.mrb[0].mxu0
    %v2119 = vadd.f32 0.0, %v2118
    %v2120 = vpop.f32.mrb[0].mxu0
    %v2121 = vadd.f32 0.0, %v2120
    %v2122 = vpop.f32.mrb[0].mxu0
    %v2123 = vpop.f32.mrb[0].mxu0
    %2124 = vdwg.mxu0
    %v2125 = vadd.f32 %v284, %v1996
    %v2126 = vadd.f32 %v286, %v1998
    %v2127 = vadd.f32 %v357, %v2037
    %v2128 = vadd.f32 %v359, %v2039
    %v2129 = vadd.f32 %v430, %v2078
    %v2130 = vadd.f32 %v432, %v2080
    %v2131 = vadd.f32 %v503, %v2119
    %v2132 = vadd.f32 %v505, %v2121
    %v2133 = vxor.u32 %v2125, 2147483648
    %v2134 = vxor.u32 %v2126, 2147483648
    %v2135 = vmul.f32 %v2133, 1.442695
    %v2136 = vpow.pop %v2135
    %v2137 = vmul.f32 %v2134, 1.442695
    %v2138 = vpow.pop %v2137
    %v2139 = vadd.f32 %v2136, 1.0
    %v2140 = vadd.f32 %v2138, 1.0
    %v2141 = vrcp.pop %v2139
    %v2142 = vmul.f32 1.0, %v2141
    %v2143 = vrcp.pop %v2140
    %v2144 = vmul.f32 1.0, %v2143
    %v2145 = vxor.u32 %v2127, 2147483648
    %v2146 = vxor.u32 %v2128, 2147483648
    %v2147 = vmul.f32 %v2145, 1.442695
    %v2148 = vpow.pop %v2147
    %v2149 = vmul.f32 %v2146, 1.442695
    %v2150 = vpow.pop %v2149
    %v2151 = vadd.f32 %v2148, 1.0
    %v2152 = vadd.f32 %v2150, 1.0
    %v2153 = vrcp.pop %v2151
    %v2154 = vmul.f32 1.0, %v2153
    %v2155 = vrcp.pop %v2152
    %v2156 = vmul.f32 1.0, %v2155
    %v2157 = vtanh.pop %v2129
    %v2158 = vtanh.pop %v2130
    %v2159 = vxor.u32 %v2131, 2147483648
    %v2160 = vxor.u32 %v2132, 2147483648
    %v2161 = vmul.f32 %v2159, 1.442695
    %v2162 = vpow.pop %v2161
    %v2163 = vmul.f32 %v2160, 1.442695
    %v2164 = vpow.pop %v2163
    %v2165 = vadd.f32 %v2162, 1.0
    %v2166 = vadd.f32 %v2164, 1.0
    %v2167 = vrcp.pop %v2165
    %v2168 = vmul.f32 1.0, %v2167
    %v2169 = vrcp.pop %v2166
    %v2170 = vmul.f32 1.0, %v2169
    %v2171 = vmul.f32 %v2154, %v1953
    %v2172 = vmul.f32 %v2156, %v1954
    %v2173 = vmul.f32 %v2142, %v2157
    %v2174 = vmul.f32 %v2144, %v2158
    %v2175 = vadd.f32 %v2171, %v2173
    %v2176 = vadd.f32 %v2172, %v2174
    %v2177 = vtanh.pop %v2175
    %v2178 = vtanh.pop %v2176
    %v2179 = vmul.f32 %v2168, %v2177
    %v2180 = vmul.f32 %v2170, %v2178
    %v2181 = vpack.c.bf16 %v2179, %v2179
    %v2182 = vpack.c.bf16 %v2180, %v2180
    %2183 = vmatprep.subr.bf16.mxu0 %v1040
    %2184 = vmatpush1.bf16.msra.mxu0 %v1039
    %2185 = vmatprep.subr.bf16.mxu0 %v1048
    %2186 = vmatpush1.bf16.msra.mxu0 %v1047
    %2187 = vmatprep.subr.bf16.mxu0 %v1056
    %2188 = vmatpush1.bf16.msra.mxu0 %v1055
    %2189 = vmatprep.subr.bf16.mxu0 %v1064
    %2190 = vmatpush1.bf16.msra.mxu0 %v1063
    %2191 = vmatprep.subr.bf16.mxu0 %v1072
    %2192 = vmatpush1.bf16.msra.mxu0 %v1071
    %2193 = vmatprep.subr.bf16.mxu0 %v1080
    %2194 = vmatpush1.bf16.msra.mxu0 %v1079
    %2195 = vmatprep.subr.bf16.mxu0 %v1088
    %2196 = vmatpush1.bf16.msra.mxu0 %v1087
    %2197 = vmatprep.subr.bf16.mxu0 %v1096
    %2198 = vmatpush1.bf16.msra.mxu0 %v1095
    %2199 = vmatprep.subr.bf16.mxu0 %v1104
    %2200 = vmatpush1.bf16.msra.mxu0 %v1103
    %2201 = vmatprep.subr.bf16.mxu0 %v1112
    %2202 = vmatpush1.bf16.msra.mxu0 %v1111
    %2203 = vmatprep.subr.bf16.mxu0 %v1120
    %2204 = vmatpush1.bf16.msra.mxu0 %v1119
    %2205 = vmatprep.subr.bf16.mxu0 %v1128
    %2206 = vmatpush1.bf16.msra.mxu0 %v1127
    %2207 = vmatprep.subr.bf16.mxu0 %v1136
    %2208 = vmatpush1.bf16.msra.mxu0 %v1135
    %2209 = vmatprep.subr.bf16.mxu0 %v1144
    %2210 = vmatpush1.bf16.msra.mxu0 %v1143
    %2211 = vmatprep.subr.bf16.mxu0 %v1152
    %2212 = vmatpush1.bf16.msra.mxu0 %v1151
    %2213 = vmatprep.subr.bf16.mxu0 %v1160
    %2214 = vmatpush1.bf16.msra.mxu0 %v1159
    %2215 = vmatprep.mubr.bf16.mxu0 %v2182
    %2216 = vmatmul.mubr.bf16.gmra.mrb[0].mxu0 %v2181
    %v2217 = vpop.f32.mrb[0].mxu0
    %v2218 = vadd.f32 0.0, %v2217
    %v2219 = vpop.f32.mrb[0].mxu0
    %v2220 = vadd.f32 0.0, %v2219
    %v2221 = vpop.f32.mrb[0].mxu0
    %v2222 = vpop.f32.mrb[0].mxu0
    %2223 = vdwg.mxu0
    %2224 = vmatprep.subr.bf16.mxu0 %v1042
    %2225 = vmatpush1.bf16.msra.mxu0 %v1041
    %2226 = vmatprep.subr.bf16.mxu0 %v1050
    %2227 = vmatpush1.bf16.msra.mxu0 %v1049
    %2228 = vmatprep.subr.bf16.mxu0 %v1058
    %2229 = vmatpush1.bf16.msra.mxu0 %v1057
    %2230 = vmatprep.subr.bf16.mxu0 %v1066
    %2231 = vmatpush1.bf16.msra.mxu0 %v1065
    %2232 = vmatprep.subr.bf16.mxu0 %v1074
    %2233 = vmatpush1.bf16.msra.mxu0 %v1073
    %2234 = vmatprep.subr.bf16.mxu0 %v1082
    %2235 = vmatpush1.bf16.msra.mxu0 %v1081
    %2236 = vmatprep.subr.bf16.mxu0 %v1090
    %2237 = vmatpush1.bf16.msra.mxu0 %v1089
    %2238 = vmatprep.subr.bf16.mxu0 %v1098
    %2239 = vmatpush1.bf16.msra.mxu0 %v1097
    %2240 = vmatprep.subr.bf16.mxu0 %v1106
    %2241 = vmatpush1.bf16.msra.mxu0 %v1105
    %2242 = vmatprep.subr.bf16.mxu0 %v1114
    %2243 = vmatpush1.bf16.msra.mxu0 %v1113
    %2244 = vmatprep.subr.bf16.mxu0 %v1122
    %2245 = vmatpush1.bf16.msra.mxu0 %v1121
    %2246 = vmatprep.subr.bf16.mxu0 %v1130
    %2247 = vmatpush1.bf16.msra.mxu0 %v1129
    %2248 = vmatprep.subr.bf16.mxu0 %v1138
    %2249 = vmatpush1.bf16.msra.mxu0 %v1137
    %2250 = vmatprep.subr.bf16.mxu0 %v1146
    %2251 = vmatpush1.bf16.msra.mxu0 %v1145
    %2252 = vmatprep.subr.bf16.mxu0 %v1154
    %2253 = vmatpush1.bf16.msra.mxu0 %v1153
    %2254 = vmatprep.subr.bf16.mxu0 %v1162
    %2255 = vmatpush1.bf16.msra.mxu0 %v1161
    %2256 = vmatprep.mubr.bf16.mxu0 %v2182
    %2257 = vmatmul.mubr.bf16.gmra.mrb[0].mxu0 %v2181
    %v2258 = vpop.f32.mrb[0].mxu0
    %v2259 = vadd.f32 0.0, %v2258
    %v2260 = vpop.f32.mrb[0].mxu0
    %v2261 = vadd.f32 0.0, %v2260
    %v2262 = vpop.f32.mrb[0].mxu0
    %v2263 = vpop.f32.mrb[0].mxu0
    %2264 = vdwg.mxu0
    %2265 = vmatprep.subr.bf16.mxu0 %v1044
    %2266 = vmatpush1.bf16.msra.mxu0 %v1043
    %2267 = vmatprep.subr.bf16.mxu0 %v1052
    %2268 = vmatpush1.bf16.msra.mxu0 %v1051
    %2269 = vmatprep.subr.bf16.mxu0 %v1060
    %2270 = vmatpush1.bf16.msra.mxu0 %v1059
    %2271 = vmatprep.subr.bf16.mxu0 %v1068
    %2272 = vmatpush1.bf16.msra.mxu0 %v1067
    %2273 = vmatprep.subr.bf16.mxu0 %v1076
    %2274 = vmatpush1.bf16.msra.mxu0 %v1075
    %2275 = vmatprep.subr.bf16.mxu0 %v1084
    %2276 = vmatpush1.bf16.msra.mxu0 %v1083
    %2277 = vmatprep.subr.bf16.mxu0 %v1092
    %2278 = vmatpush1.bf16.msra.mxu0 %v1091
    %2279 = vmatprep.subr.bf16.mxu0 %v1100
    %2280 = vmatpush1.bf16.msra.mxu0 %v1099
    %2281 = vmatprep.subr.bf16.mxu0 %v1108
    %2282 = vmatpush1.bf16.msra.mxu0 %v1107
    %2283 = vmatprep.subr.bf16.mxu0 %v1116
    %2284 = vmatpush1.bf16.msra.mxu0 %v1115
    %2285 = vmatprep.subr.bf16.mxu0 %v1124
    %2286 = vmatpush1.bf16.msra.mxu0 %v1123
    %2287 = vmatprep.subr.bf16.mxu0 %v1132
    %2288 = vmatpush1.bf16.msra.mxu0 %v1131
    %2289 = vmatprep.subr.bf16.mxu0 %v1140
    %2290 = vmatpush1.bf16.msra.mxu0 %v1139
    %2291 = vmatprep.subr.bf16.mxu0 %v1148
    %2292 = vmatpush1.bf16.msra.mxu0 %v1147
    %2293 = vmatprep.subr.bf16.mxu0 %v1156
    %2294 = vmatpush1.bf16.msra.mxu0 %v1155
    %2295 = vmatprep.subr.bf16.mxu0 %v1164
    %2296 = vmatpush1.bf16.msra.mxu0 %v1163
    %2297 = vmatprep.mubr.bf16.mxu0 %v2182
    %2298 = vmatmul.mubr.bf16.gmra.mrb[0].mxu0 %v2181
    %v2299 = vpop.f32.mrb[0].mxu0
    %v2300 = vadd.f32 0.0, %v2299
    %v2301 = vpop.f32.mrb[0].mxu0
    %v2302 = vadd.f32 0.0, %v2301
    %v2303 = vpop.f32.mrb[0].mxu0
    %v2304 = vpop.f32.mrb[0].mxu0
    %2305 = vdwg.mxu0
    %2306 = vmatprep.subr.bf16.mxu0 %v1046
    %2307 = vmatpush1.bf16.msra.mxu0 %v1045
    %2308 = vmatprep.subr.bf16.mxu0 %v1054
    %2309 = vmatpush1.bf16.msra.mxu0 %v1053
    %2310 = vmatprep.subr.bf16.mxu0 %v1062
    %2311 = vmatpush1.bf16.msra.mxu0 %v1061
    %2312 = vmatprep.subr.bf16.mxu0 %v1070
    %2313 = vmatpush1.bf16.msra.mxu0 %v1069
    %2314 = vmatprep.subr.bf16.mxu0 %v1078
    %2315 = vmatpush1.bf16.msra.mxu0 %v1077
    %2316 = vmatprep.subr.bf16.mxu0 %v1086
    %2317 = vmatpush1.bf16.msra.mxu0 %v1085
    %2318 = vmatprep.subr.bf16.mxu0 %v1094
    %2319 = vmatpush1.bf16.msra.mxu0 %v1093
    %2320 = vmatprep.subr.bf16.mxu0 %v1102
    %2321 = vmatpush1.bf16.msra.mxu0 %v1101
    %2322 = vmatprep.subr.bf16.mxu0 %v1110
    %2323 = vmatpush1.bf16.msra.mxu0 %v1109
    %2324 = vmatprep.subr.bf16.mxu0 %v1118
    %2325 = vmatpush1.bf16.msra.mxu0 %v1117
    %2326 = vmatprep.subr.bf16.mxu0 %v1126
    %2327 = vmatpush1.bf16.msra.mxu0 %v1125
    %2328 = vmatprep.subr.bf16.mxu0 %v1134
    %2329 = vmatpush1.bf16.msra.mxu0 %v1133
    %2330 = vmatprep.subr.bf16.mxu0 %v1142
    %2331 = vmatpush1.bf16.msra.mxu0 %v1141
    %2332 = vmatprep.subr.bf16.mxu0 %v1150
    %2333 = vmatpush1.bf16.msra.mxu0 %v1149
    %2334 = vmatprep.subr.bf16.mxu0 %v1158
    %2335 = vmatpush1.bf16.msra.mxu0 %v1157
    %2336 = vmatprep.subr.bf16.mxu0 %v1166
    %2337 = vmatpush1.bf16.msra.mxu0 %v1165
    %2338 = vmatprep.mubr.bf16.mxu0 %v2182
    %2339 = vmatmul.mubr.bf16.gmra.mrb[0].mxu0 %v2181
    %v2340 = vpop.f32.mrb[0].mxu0
    %v2341 = vadd.f32 0.0, %v2340
    %v2342 = vpop.f32.mrb[0].mxu0
    %v2343 = vadd.f32 0.0, %v2342
    %v2344 = vpop.f32.mrb[0].mxu0
    %v2345 = vpop.f32.mrb[0].mxu0
    %2346 = vdwg.mxu0
    %v2347 = vadd.f32 %v290, %v2218
    %v2348 = vadd.f32 %v292, %v2220
    %v2349 = vadd.f32 %v363, %v2259
    %v2350 = vadd.f32 %v365, %v2261
    %v2351 = vadd.f32 %v436, %v2300
    %v2352 = vadd.f32 %v438, %v2302
    %v2353 = vadd.f32 %v509, %v2341
    %v2354 = vadd.f32 %v511, %v2343
    %v2355 = vxor.u32 %v2347, 2147483648
    %v2356 = vxor.u32 %v2348, 2147483648
    %v2357 = vmul.f32 %v2355, 1.442695
    %v2358 = vpow.pop %v2357
    %v2359 = vmul.f32 %v2356, 1.442695
    %v2360 = vpow.pop %v2359
    %v2361 = vadd.f32 %v2358, 1.0
    %v2362 = vadd.f32 %v2360, 1.0
    %v2363 = vrcp.pop %v2361
    %v2364 = vmul.f32 1.0, %v2363
    %v2365 = vrcp.pop %v2362
    %v2366 = vmul.f32 1.0, %v2365
    %v2367 = vxor.u32 %v2349, 2147483648
    %v2368 = vxor.u32 %v2350, 2147483648
    %v2369 = vmul.f32 %v2367, 1.442695
    %v2370 = vpow.pop %v2369
    %v2371 = vmul.f32 %v2368, 1.442695
    %v2372 = vpow.pop %v2371
    %v2373 = vadd.f32 %v2370, 1.0
    %v2374 = vadd.f32 %v2372, 1.0
    %v2375 = vrcp.pop %v2373
    %v2376 = vmul.f32 1.0, %v2375
    %v2377 = vrcp.pop %v2374
    %v2378 = vmul.f32 1.0, %v2377
    %v2379 = vtanh.pop %v2351
    %v2380 = vtanh.pop %v2352
    %v2381 = vxor.u32 %v2353, 2147483648
    %v2382 = vxor.u32 %v2354, 2147483648
    %v2383 = vmul.f32 %v2381, 1.442695
    %v2384 = vpow.pop %v2383
    %v2385 = vmul.f32 %v2382, 1.442695
    %v2386 = vpow.pop %v2385
    %v2387 = vadd.f32 %v2384, 1.0
    %v2388 = vadd.f32 %v2386, 1.0
    %v2389 = vrcp.pop %v2387
    %v2390 = vmul.f32 1.0, %v2389
    %v2391 = vrcp.pop %v2388
    %v2392 = vmul.f32 1.0, %v2391
    %v2393 = vmul.f32 %v2376, %v2175
    %v2394 = vmul.f32 %v2378, %v2176
    %v2395 = vmul.f32 %v2364, %v2379
    %v2396 = vmul.f32 %v2366, %v2380
    %v2397 = vadd.f32 %v2393, %v2395
    %v2398 = vadd.f32 %v2394, %v2396
    %v2399 = vtanh.pop %v2397
    %v2400 = vtanh.pop %v2398
    %v2401 = vmul.f32 %v2390, %v2399
    %v2402 = vmul.f32 %v2392, %v2400
    %v2403 = vpack.c.bf16 %v2401, %v2401
    %v2404 = vpack.c.bf16 %v2402, %v2402
    %2405 = vmatprep.subr.bf16.mxu0 %v1040
    %2406 = vmatpush1.bf16.msra.mxu0 %v1039
    %2407 = vmatprep.subr.bf16.mxu0 %v1048
    %2408 = vmatpush1.bf16.msra.mxu0 %v1047
    %2409 = vmatprep.subr.bf16.mxu0 %v1056
    %2410 = vmatpush1.bf16.msra.mxu0 %v1055
    %2411 = vmatprep.subr.bf16.mxu0 %v1064
    %2412 = vmatpush1.bf16.msra.mxu0 %v1063
    %2413 = vmatprep.subr.bf16.mxu0 %v1072
    %2414 = vmatpush1.bf16.msra.mxu0 %v1071
    %2415 = vmatprep.subr.bf16.mxu0 %v1080
    %2416 = vmatpush1.bf16.msra.mxu0 %v1079
    %2417 = vmatprep.subr.bf16.mxu0 %v1088
    %2418 = vmatpush1.bf16.msra.mxu0 %v1087
    %2419 = vmatprep.subr.bf16.mxu0 %v1096
    %2420 = vmatpush1.bf16.msra.mxu0 %v1095
    %2421 = vmatprep.subr.bf16.mxu0 %v1104
    %2422 = vmatpush1.bf16.msra.mxu0 %v1103
    %2423 = vmatprep.subr.bf16.mxu0 %v1112
    %2424 = vmatpush1.bf16.msra.mxu0 %v1111
    %2425 = vmatprep.subr.bf16.mxu0 %v1120
    %2426 = vmatpush1.bf16.msra.mxu0 %v1119
    %2427 = vmatprep.subr.bf16.mxu0 %v1128
    %2428 = vmatpush1.bf16.msra.mxu0 %v1127
    %2429 = vmatprep.subr.bf16.mxu0 %v1136
    %2430 = vmatpush1.bf16.msra.mxu0 %v1135
    %2431 = vmatprep.subr.bf16.mxu0 %v1144
    %2432 = vmatpush1.bf16.msra.mxu0 %v1143
    %2433 = vmatprep.subr.bf16.mxu0 %v1152
    %2434 = vmatpush1.bf16.msra.mxu0 %v1151
    %2435 = vmatprep.subr.bf16.mxu0 %v1160
    %2436 = vmatpush1.bf16.msra.mxu0 %v1159
    %2437 = vmatprep.mubr.bf16.mxu0 %v2404
    %2438 = vmatmul.mubr.bf16.gmra.mrb[0].mxu0 %v2403
    %v2439 = vpop.f32.mrb[0].mxu0
    %v2440 = vadd.f32 0.0, %v2439
    %v2441 = vpop.f32.mrb[0].mxu0
    %v2442 = vadd.f32 0.0, %v2441
    %v2443 = vpop.f32.mrb[0].mxu0
    %v2444 = vpop.f32.mrb[0].mxu0
    %2445 = vdwg.mxu0
    %2446 = vmatprep.subr.bf16.mxu0 %v1042
    %2447 = vmatpush1.bf16.msra.mxu0 %v1041
    %2448 = vmatprep.subr.bf16.mxu0 %v1050
    %2449 = vmatpush1.bf16.msra.mxu0 %v1049
    %2450 = vmatprep.subr.bf16.mxu0 %v1058
    %2451 = vmatpush1.bf16.msra.mxu0 %v1057
    %2452 = vmatprep.subr.bf16.mxu0 %v1066
    %2453 = vmatpush1.bf16.msra.mxu0 %v1065
    %2454 = vmatprep.subr.bf16.mxu0 %v1074
    %2455 = vmatpush1.bf16.msra.mxu0 %v1073
    %2456 = vmatprep.subr.bf16.mxu0 %v1082
    %2457 = vmatpush1.bf16.msra.mxu0 %v1081
    %2458 = vmatprep.subr.bf16.mxu0 %v1090
    %2459 = vmatpush1.bf16.msra.mxu0 %v1089
    %2460 = vmatprep.subr.bf16.mxu0 %v1098
    %2461 = vmatpush1.bf16.msra.mxu0 %v1097
    %2462 = vmatprep.subr.bf16.mxu0 %v1106
    %2463 = vmatpush1.bf16.msra.mxu0 %v1105
    %2464 = vmatprep.subr.bf16.mxu0 %v1114
    %2465 = vmatpush1.bf16.msra.mxu0 %v1113
    %2466 = vmatprep.subr.bf16.mxu0 %v1122
    %2467 = vmatpush1.bf16.msra.mxu0 %v1121
    %2468 = vmatprep.subr.bf16.mxu0 %v1130
    %2469 = vmatpush1.bf16.msra.mxu0 %v1129
    %2470 = vmatprep.subr.bf16.mxu0 %v1138
    %2471 = vmatpush1.bf16.msra.mxu0 %v1137
    %2472 = vmatprep.subr.bf16.mxu0 %v1146
    %2473 = vmatpush1.bf16.msra.mxu0 %v1145
    %2474 = vmatprep.subr.bf16.mxu0 %v1154
    %2475 = vmatpush1.bf16.msra.mxu0 %v1153
    %2476 = vmatprep.subr.bf16.mxu0 %v1162
    %2477 = vmatpush1.bf16.msra.mxu0 %v1161
    %2478 = vmatprep.mubr.bf16.mxu0 %v2404
    %2479 = vmatmul.mubr.bf16.gmra.mrb[0].mxu0 %v2403
    %v2480 = vpop.f32.mrb[0].mxu0
    %v2481 = vadd.f32 0.0, %v2480
    %v2482 = vpop.f32.mrb[0].mxu0
    %v2483 = vadd.f32 0.0, %v2482
    %v2484 = vpop.f32.mrb[0].mxu0
    %v2485 = vpop.f32.mrb[0].mxu0
    %2486 = vdwg.mxu0
    %2487 = vmatprep.subr.bf16.mxu0 %v1044
    %2488 = vmatpush1.bf16.msra.mxu0 %v1043
    %2489 = vmatprep.subr.bf16.mxu0 %v1052
    %2490 = vmatpush1.bf16.msra.mxu0 %v1051
    %2491 = vmatprep.subr.bf16.mxu0 %v1060
    %2492 = vmatpush1.bf16.msra.mxu0 %v1059
    %2493 = vmatprep.subr.bf16.mxu0 %v1068
    %2494 = vmatpush1.bf16.msra.mxu0 %v1067
    %2495 = vmatprep.subr.bf16.mxu0 %v1076
    %2496 = vmatpush1.bf16.msra.mxu0 %v1075
    %2497 = vmatprep.subr.bf16.mxu0 %v1084
    %2498 = vmatpush1.bf16.msra.mxu0 %v1083
    %2499 = vmatprep.subr.bf16.mxu0 %v1092
    %2500 = vmatpush1.bf16.msra.mxu0 %v1091
    %2501 = vmatprep.subr.bf16.mxu0 %v1100
    %2502 = vmatpush1.bf16.msra.mxu0 %v1099
    %2503 = vmatprep.subr.bf16.mxu0 %v1108
    %2504 = vmatpush1.bf16.msra.mxu0 %v1107
    %2505 = vmatprep.subr.bf16.mxu0 %v1116
    %2506 = vmatpush1.bf16.msra.mxu0 %v1115
    %2507 = vmatprep.subr.bf16.mxu0 %v1124
    %2508 = vmatpush1.bf16.msra.mxu0 %v1123
    %2509 = vmatprep.subr.bf16.mxu0 %v1132
    %2510 = vmatpush1.bf16.msra.mxu0 %v1131
    %2511 = vmatprep.subr.bf16.mxu0 %v1140
    %2512 = vmatpush1.bf16.msra.mxu0 %v1139
    %2513 = vmatprep.subr.bf16.mxu0 %v1148
    %2514 = vmatpush1.bf16.msra.mxu0 %v1147
    %2515 = vmatprep.subr.bf16.mxu0 %v1156
    %2516 = vmatpush1.bf16.msra.mxu0 %v1155
    %2517 = vmatprep.subr.bf16.mxu0 %v1164
    %2518 = vmatpush1.bf16.msra.mxu0 %v1163
    %2519 = vmatprep.mubr.bf16.mxu0 %v2404
    %2520 = vmatmul.mubr.bf16.gmra.mrb[0].mxu0 %v2403
    %v2521 = vpop.f32.mrb[0].mxu0
    %v2522 = vadd.f32 0.0, %v2521
    %v2523 = vpop.f32.mrb[0].mxu0
    %v2524 = vadd.f32 0.0, %v2523
    %v2525 = vpop.f32.mrb[0].mxu0
    %v2526 = vpop.f32.mrb[0].mxu0
    %2527 = vdwg.mxu0
    %2528 = vmatprep.subr.bf16.mxu0 %v1046
    %2529 = vmatpush1.bf16.msra.mxu0 %v1045
    %2530 = vmatprep.subr.bf16.mxu0 %v1054
    %2531 = vmatpush1.bf16.msra.mxu0 %v1053
    %2532 = vmatprep.subr.bf16.mxu0 %v1062
    %2533 = vmatpush1.bf16.msra.mxu0 %v1061
    %2534 = vmatprep.subr.bf16.mxu0 %v1070
    %2535 = vmatpush1.bf16.msra.mxu0 %v1069
    %2536 = vmatprep.subr.bf16.mxu0 %v1078
    %2537 = vmatpush1.bf16.msra.mxu0 %v1077
    %2538 = vmatprep.subr.bf16.mxu0 %v1086
    %2539 = vmatpush1.bf16.msra.mxu0 %v1085
    %2540 = vmatprep.subr.bf16.mxu0 %v1094
    %2541 = vmatpush1.bf16.msra.mxu0 %v1093
    %2542 = vmatprep.subr.bf16.mxu0 %v1102
    %2543 = vmatpush1.bf16.msra.mxu0 %v1101
    %2544 = vmatprep.subr.bf16.mxu0 %v1110
    %2545 = vmatpush1.bf16.msra.mxu0 %v1109
    %2546 = vmatprep.subr.bf16.mxu0 %v1118
    %2547 = vmatpush1.bf16.msra.mxu0 %v1117
    %2548 = vmatprep.subr.bf16.mxu0 %v1126
    %2549 = vmatpush1.bf16.msra.mxu0 %v1125
    %2550 = vmatprep.subr.bf16.mxu0 %v1134
    %2551 = vmatpush1.bf16.msra.mxu0 %v1133
    %2552 = vmatprep.subr.bf16.mxu0 %v1142
    %2553 = vmatpush1.bf16.msra.mxu0 %v1141
    %2554 = vmatprep.subr.bf16.mxu0 %v1150
    %2555 = vmatpush1.bf16.msra.mxu0 %v1149
    %2556 = vmatprep.subr.bf16.mxu0 %v1158
    %2557 = vmatpush1.bf16.msra.mxu0 %v1157
    %2558 = vmatprep.subr.bf16.mxu0 %v1166
    %2559 = vmatpush1.bf16.msra.mxu0 %v1165
    %2560 = vmatprep.mubr.bf16.mxu0 %v2404
    %2561 = vmatmul.mubr.bf16.gmra.mrb[0].mxu0 %v2403
    %v2562 = vpop.f32.mrb[0].mxu0
    %v2563 = vadd.f32 0.0, %v2562
    %v2564 = vpop.f32.mrb[0].mxu0
    %v2565 = vadd.f32 0.0, %v2564
    %v2566 = vpop.f32.mrb[0].mxu0
    %v2567 = vpop.f32.mrb[0].mxu0
    %2568 = vdwg.mxu0
    %v2569 = vadd.f32 %v294, %v2440
    %v2570 = vadd.f32 %v296, %v2442
    %v2571 = vadd.f32 %v367, %v2481
    %v2572 = vadd.f32 %v369, %v2483
    %v2573 = vadd.f32 %v440, %v2522
    %v2574 = vadd.f32 %v442, %v2524
    %v2575 = vadd.f32 %v513, %v2563
    %v2576 = vadd.f32 %v515, %v2565
    %v2577 = vxor.u32 %v2569, 2147483648
    %v2578 = vxor.u32 %v2570, 2147483648
    %v2579 = vmul.f32 %v2577, 1.442695
    %v2580 = vpow.pop %v2579
    %v2581 = vmul.f32 %v2578, 1.442695
    %v2582 = vpow.pop %v2581
    %v2583 = vadd.f32 %v2580, 1.0
    %v2584 = vadd.f32 %v2582, 1.0
    %v2585 = vrcp.pop %v2583
    %v2586 = vmul.f32 1.0, %v2585
    %v2587 = vrcp.pop %v2584
    %v2588 = vmul.f32 1.0, %v2587
    %v2589 = vxor.u32 %v2571, 2147483648
    %v2590 = vxor.u32 %v2572, 2147483648
    %v2591 = vmul.f32 %v2589, 1.442695
    %v2592 = vpow.pop %v2591
    %v2593 = vmul.f32 %v2590, 1.442695
    %v2594 = vpow.pop %v2593
    %v2595 = vadd.f32 %v2592, 1.0
    %v2596 = vadd.f32 %v2594, 1.0
    %v2597 = vrcp.pop %v2595
    %v2598 = vmul.f32 1.0, %v2597
    %v2599 = vrcp.pop %v2596
    %v2600 = vmul.f32 1.0, %v2599
    %v2601 = vtanh.pop %v2573
    %v2602 = vtanh.pop %v2574
    %v2603 = vxor.u32 %v2575, 2147483648
    %v2604 = vxor.u32 %v2576, 2147483648
    %v2605 = vmul.f32 %v2603, 1.442695
    %v2606 = vpow.pop %v2605
    %v2607 = vmul.f32 %v2604, 1.442695
    %v2608 = vpow.pop %v2607
    %v2609 = vadd.f32 %v2606, 1.0
    %v2610 = vadd.f32 %v2608, 1.0
    %v2611 = vrcp.pop %v2609
    %v2612 = vmul.f32 1.0, %v2611
    %v2613 = vrcp.pop %v2610
    %v2614 = vmul.f32 1.0, %v2613
    %v2615 = vmul.f32 %v2598, %v2397
    %v2616 = vmul.f32 %v2600, %v2398
    %v2617 = vmul.f32 %v2586, %v2601
    %v2618 = vmul.f32 %v2588, %v2602
    %v2619 = vadd.f32 %v2615, %v2617
    %v2620 = vadd.f32 %v2616, %v2618
    %v2621 = vtanh.pop %v2619
    %v2622 = vtanh.pop %v2620
    %v2623 = vmul.f32 %v2612, %v2621
    %v2624 = vmul.f32 %v2614, %v2622
    %v2625 = vpack.c.bf16 %v2623, %v2623
    %v2626 = vpack.c.bf16 %v2624, %v2624
    %2627 = vmatprep.subr.bf16.mxu0 %v1040
    %2628 = vmatpush1.bf16.msra.mxu0 %v1039
    %2629 = vmatprep.subr.bf16.mxu0 %v1048
    %2630 = vmatpush1.bf16.msra.mxu0 %v1047
    %2631 = vmatprep.subr.bf16.mxu0 %v1056
    %2632 = vmatpush1.bf16.msra.mxu0 %v1055
    %2633 = vmatprep.subr.bf16.mxu0 %v1064
    %2634 = vmatpush1.bf16.msra.mxu0 %v1063
    %2635 = vmatprep.subr.bf16.mxu0 %v1072
    %2636 = vmatpush1.bf16.msra.mxu0 %v1071
    %2637 = vmatprep.subr.bf16.mxu0 %v1080
    %2638 = vmatpush1.bf16.msra.mxu0 %v1079
    %2639 = vmatprep.subr.bf16.mxu0 %v1088
    %2640 = vmatpush1.bf16.msra.mxu0 %v1087
    %2641 = vmatprep.subr.bf16.mxu0 %v1096
    %2642 = vmatpush1.bf16.msra.mxu0 %v1095
    %2643 = vmatprep.subr.bf16.mxu0 %v1104
    %2644 = vmatpush1.bf16.msra.mxu0 %v1103
    %2645 = vmatprep.subr.bf16.mxu0 %v1112
    %2646 = vmatpush1.bf16.msra.mxu0 %v1111
    %2647 = vmatprep.subr.bf16.mxu0 %v1120
    %2648 = vmatpush1.bf16.msra.mxu0 %v1119
    %2649 = vmatprep.subr.bf16.mxu0 %v1128
    %2650 = vmatpush1.bf16.msra.mxu0 %v1127
    %2651 = vmatprep.subr.bf16.mxu0 %v1136
    %2652 = vmatpush1.bf16.msra.mxu0 %v1135
    %2653 = vmatprep.subr.bf16.mxu0 %v1144
    %2654 = vmatpush1.bf16.msra.mxu0 %v1143
    %2655 = vmatprep.subr.bf16.mxu0 %v1152
    %2656 = vmatpush1.bf16.msra.mxu0 %v1151
    %2657 = vmatprep.subr.bf16.mxu0 %v1160
    %2658 = vmatpush1.bf16.msra.mxu0 %v1159
    %2659 = vmatprep.mubr.bf16.mxu0 %v2626
    %2660 = vmatmul.mubr.bf16.gmra.mrb[0].mxu0 %v2625
    %v2661 = vpop.f32.mrb[0].mxu0
    %v2662 = vadd.f32 0.0, %v2661
    %v2663 = vpop.f32.mrb[0].mxu0
    %v2664 = vadd.f32 0.0, %v2663
    %v2665 = vpop.f32.mrb[0].mxu0
    %v2666 = vpop.f32.mrb[0].mxu0
    %2667 = vdwg.mxu0
    %2668 = vmatprep.subr.bf16.mxu0 %v1042
    %2669 = vmatpush1.bf16.msra.mxu0 %v1041
    %2670 = vmatprep.subr.bf16.mxu0 %v1050
    %2671 = vmatpush1.bf16.msra.mxu0 %v1049
    %2672 = vmatprep.subr.bf16.mxu0 %v1058
    %2673 = vmatpush1.bf16.msra.mxu0 %v1057
    %2674 = vmatprep.subr.bf16.mxu0 %v1066
    %2675 = vmatpush1.bf16.msra.mxu0 %v1065
    %2676 = vmatprep.subr.bf16.mxu0 %v1074
    %2677 = vmatpush1.bf16.msra.mxu0 %v1073
    %2678 = vmatprep.subr.bf16.mxu0 %v1082
    %2679 = vmatpush1.bf16.msra.mxu0 %v1081
    %2680 = vmatprep.subr.bf16.mxu0 %v1090
    %2681 = vmatpush1.bf16.msra.mxu0 %v1089
    %2682 = vmatprep.subr.bf16.mxu0 %v1098
    %2683 = vmatpush1.bf16.msra.mxu0 %v1097
    %2684 = vmatprep.subr.bf16.mxu0 %v1106
    %2685 = vmatpush1.bf16.msra.mxu0 %v1105
    %2686 = vmatprep.subr.bf16.mxu0 %v1114
    %2687 = vmatpush1.bf16.msra.mxu0 %v1113
    %2688 = vmatprep.subr.bf16.mxu0 %v1122
    %2689 = vmatpush1.bf16.msra.mxu0 %v1121
    %2690 = vmatprep.subr.bf16.mxu0 %v1130
    %2691 = vmatpush1.bf16.msra.mxu0 %v1129
    %2692 = vmatprep.subr.bf16.mxu0 %v1138
    %2693 = vmatpush1.bf16.msra.mxu0 %v1137
    %2694 = vmatprep.subr.bf16.mxu0 %v1146
    %2695 = vmatpush1.bf16.msra.mxu0 %v1145
    %2696 = vmatprep.subr.bf16.mxu0 %v1154
    %2697 = vmatpush1.bf16.msra.mxu0 %v1153
    %2698 = vmatprep.subr.bf16.mxu0 %v1162
    %2699 = vmatpush1.bf16.msra.mxu0 %v1161
    %2700 = vmatprep.mubr.bf16.mxu0 %v2626
    %2701 = vmatmul.mubr.bf16.gmra.mrb[0].mxu0 %v2625
    %v2702 = vpop.f32.mrb[0].mxu0
    %v2703 = vadd.f32 0.0, %v2702
    %v2704 = vpop.f32.mrb[0].mxu0
    %v2705 = vadd.f32 0.0, %v2704
    %v2706 = vpop.f32.mrb[0].mxu0
    %v2707 = vpop.f32.mrb[0].mxu0
    %2708 = vdwg.mxu0
    %2709 = vmatprep.subr.bf16.mxu0 %v1044
    %2710 = vmatpush1.bf16.msra.mxu0 %v1043
    %2711 = vmatprep.subr.bf16.mxu0 %v1052
    %2712 = vmatpush1.bf16.msra.mxu0 %v1051
    %2713 = vmatprep.subr.bf16.mxu0 %v1060
    %2714 = vmatpush1.bf16.msra.mxu0 %v1059
    %2715 = vmatprep.subr.bf16.mxu0 %v1068
    %2716 = vmatpush1.bf16.msra.mxu0 %v1067
    %2717 = vmatprep.subr.bf16.mxu0 %v1076
    %2718 = vmatpush1.bf16.msra.mxu0 %v1075
    %2719 = vmatprep.subr.bf16.mxu0 %v1084
    %2720 = vmatpush1.bf16.msra.mxu0 %v1083
    %2721 = vmatprep.subr.bf16.mxu0 %v1092
    %2722 = vmatpush1.bf16.msra.mxu0 %v1091
    %2723 = vmatprep.subr.bf16.mxu0 %v1100
    %2724 = vmatpush1.bf16.msra.mxu0 %v1099
    %2725 = vmatprep.subr.bf16.mxu0 %v1108
    %2726 = vmatpush1.bf16.msra.mxu0 %v1107
    %2727 = vmatprep.subr.bf16.mxu0 %v1116
    %2728 = vmatpush1.bf16.msra.mxu0 %v1115
    %2729 = vmatprep.subr.bf16.mxu0 %v1124
    %2730 = vmatpush1.bf16.msra.mxu0 %v1123
    %2731 = vmatprep.subr.bf16.mxu0 %v1132
    %2732 = vmatpush1.bf16.msra.mxu0 %v1131
    %2733 = vmatprep.subr.bf16.mxu0 %v1140
    %2734 = vmatpush1.bf16.msra.mxu0 %v1139
    %2735 = vmatprep.subr.bf16.mxu0 %v1148
    %2736 = vmatpush1.bf16.msra.mxu0 %v1147
    %2737 = vmatprep.subr.bf16.mxu0 %v1156
    %2738 = vmatpush1.bf16.msra.mxu0 %v1155
    %2739 = vmatprep.subr.bf16.mxu0 %v1164
    %2740 = vmatpush1.bf16.msra.mxu0 %v1163
    %2741 = vmatprep.mubr.bf16.mxu0 %v2626
    %2742 = vmatmul.mubr.bf16.gmra.mrb[0].mxu0 %v2625
    %v2743 = vpop.f32.mrb[0].mxu0
    %v2744 = vadd.f32 0.0, %v2743
    %v2745 = vpop.f32.mrb[0].mxu0
    %v2746 = vadd.f32 0.0, %v2745
    %v2747 = vpop.f32.mrb[0].mxu0
    %v2748 = vpop.f32.mrb[0].mxu0
    %2749 = vdwg.mxu0
    %2750 = vmatprep.subr.bf16.mxu0 %v1046
    %2751 = vmatpush1.bf16.msra.mxu0 %v1045
    %2752 = vmatprep.subr.bf16.mxu0 %v1054
    %2753 = vmatpush1.bf16.msra.mxu0 %v1053
    %2754 = vmatprep.subr.bf16.mxu0 %v1062
    %2755 = vmatpush1.bf16.msra.mxu0 %v1061
    %2756 = vmatprep.subr.bf16.mxu0 %v1070
    %2757 = vmatpush1.bf16.msra.mxu0 %v1069
    %2758 = vmatprep.subr.bf16.mxu0 %v1078
    %2759 = vmatpush1.bf16.msra.mxu0 %v1077
    %2760 = vmatprep.subr.bf16.mxu0 %v1086
    %2761 = vmatpush1.bf16.msra.mxu0 %v1085
    %2762 = vmatprep.subr.bf16.mxu0 %v1094
    %2763 = vmatpush1.bf16.msra.mxu0 %v1093
    %2764 = vmatprep.subr.bf16.mxu0 %v1102
    %2765 = vmatpush1.bf16.msra.mxu0 %v1101
    %2766 = vmatprep.subr.bf16.mxu0 %v1110
    %2767 = vmatpush1.bf16.msra.mxu0 %v1109
    %2768 = vmatprep.subr.bf16.mxu0 %v1118
    %2769 = vmatpush1.bf16.msra.mxu0 %v1117
    %2770 = vmatprep.subr.bf16.mxu0 %v1126
    %2771 = vmatpush1.bf16.msra.mxu0 %v1125
    %2772 = vmatprep.subr.bf16.mxu0 %v1134
    %2773 = vmatpush1.bf16.msra.mxu0 %v1133
    %2774 = vmatprep.subr.bf16.mxu0 %v1142
    %2775 = vmatpush1.bf16.msra.mxu0 %v1141
    %2776 = vmatprep.subr.bf16.mxu0 %v1150
    %2777 = vmatpush1.bf16.msra.mxu0 %v1149
    %2778 = vmatprep.subr.bf16.mxu0 %v1158
    %2779 = vmatpush1.bf16.msra.mxu0 %v1157
    %2780 = vmatprep.subr.bf16.mxu0 %v1166
    %2781 = vmatpush1.bf16.msra.mxu0 %v1165
    %2782 = vmatprep.mubr.bf16.mxu0 %v2626
    %2783 = vmatmul.mubr.bf16.gmra.mrb[0].mxu0 %v2625
    %v2784 = vpop.f32.mrb[0].mxu0
    %v2785 = vadd.f32 0.0, %v2784
    %v2786 = vpop.f32.mrb[0].mxu0
    %v2787 = vadd.f32 0.0, %v2786
    %v2788 = vpop.f32.mrb[0].mxu0
    %v2789 = vpop.f32.mrb[0].mxu0
    %2790 = vdwg.mxu0
    %v2791 = vadd.f32 %v300, %v2662
    %v2792 = vadd.f32 %v302, %v2664
    %v2793 = vadd.f32 %v373, %v2703
    %v2794 = vadd.f32 %v375, %v2705
    %v2795 = vadd.f32 %v446, %v2744
    %v2796 = vadd.f32 %v448, %v2746
    %v2797 = vadd.f32 %v519, %v2785
    %v2798 = vadd.f32 %v521, %v2787
    %v2799 = vxor.u32 %v2791, 2147483648
    %v2800 = vxor.u32 %v2792, 2147483648
    %v2801 = vmul.f32 %v2799, 1.442695
    %v2802 = vpow.pop %v2801
    %v2803 = vmul.f32 %v2800, 1.442695
    %v2804 = vpow.pop %v2803
    %v2805 = vadd.f32 %v2802, 1.0
    %v2806 = vadd.f32 %v2804, 1.0
    %v2807 = vrcp.pop %v2805
    %v2808 = vmul.f32 1.0, %v2807
    %v2809 = vrcp.pop %v2806
    %v2810 = vmul.f32 1.0, %v2809
    %v2811 = vxor.u32 %v2793, 2147483648
    %v2812 = vxor.u32 %v2794, 2147483648
    %v2813 = vmul.f32 %v2811, 1.442695
    %v2814 = vpow.pop %v2813
    %v2815 = vmul.f32 %v2812, 1.442695
    %v2816 = vpow.pop %v2815
    %v2817 = vadd.f32 %v2814, 1.0
    %v2818 = vadd.f32 %v2816, 1.0
    %v2819 = vrcp.pop %v2817
    %v2820 = vmul.f32 1.0, %v2819
    %v2821 = vrcp.pop %v2818
    %v2822 = vmul.f32 1.0, %v2821
    %v2823 = vtanh.pop %v2795
    %v2824 = vtanh.pop %v2796
    %v2825 = vxor.u32 %v2797, 2147483648
    %v2826 = vxor.u32 %v2798, 2147483648
    %v2827 = vmul.f32 %v2825, 1.442695
    %v2828 = vpow.pop %v2827
    %v2829 = vmul.f32 %v2826, 1.442695
    %v2830 = vpow.pop %v2829
    %v2831 = vadd.f32 %v2828, 1.0
    %v2832 = vadd.f32 %v2830, 1.0
    %v2833 = vrcp.pop %v2831
    %v2834 = vmul.f32 1.0, %v2833
    %v2835 = vrcp.pop %v2832
    %v2836 = vmul.f32 1.0, %v2835
    %v2837 = vmul.f32 %v2820, %v2619
    %v2838 = vmul.f32 %v2822, %v2620
    %v2839 = vmul.f32 %v2808, %v2823
    %v2840 = vmul.f32 %v2810, %v2824
    %v2841 = vadd.f32 %v2837, %v2839
    %v2842 = vadd.f32 %v2838, %v2840
    %v2843 = vtanh.pop %v2841
    %v2844 = vtanh.pop %v2842
    %v2845 = vmul.f32 %v2834, %v2843
    %v2846 = vmul.f32 %v2836, %v2844
    %v2847 = vpack.c.bf16 %v2845, %v2845
    %v2848 = vpack.c.bf16 %v2846, %v2846
    %2849 = vmatprep.subr.bf16.mxu0 %v1040
    %2850 = vmatpush1.bf16.msra.mxu0 %v1039
    %2851 = vmatprep.subr.bf16.mxu0 %v1048
    %2852 = vmatpush1.bf16.msra.mxu0 %v1047
    %2853 = vmatprep.subr.bf16.mxu0 %v1056
    %2854 = vmatpush1.bf16.msra.mxu0 %v1055
    %2855 = vmatprep.subr.bf16.mxu0 %v1064
    %2856 = vmatpush1.bf16.msra.mxu0 %v1063
    %2857 = vmatprep.subr.bf16.mxu0 %v1072
    %2858 = vmatpush1.bf16.msra.mxu0 %v1071
    %2859 = vmatprep.subr.bf16.mxu0 %v1080
    %2860 = vmatpush1.bf16.msra.mxu0 %v1079
    %2861 = vmatprep.subr.bf16.mxu0 %v1088
    %2862 = vmatpush1.bf16.msra.mxu0 %v1087
    %2863 = vmatprep.subr.bf16.mxu0 %v1096
    %2864 = vmatpush1.bf16.msra.mxu0 %v1095
    %2865 = vmatprep.subr.bf16.mxu0 %v1104
    %2866 = vmatpush1.bf16.msra.mxu0 %v1103
    %2867 = vmatprep.subr.bf16.mxu0 %v1112
    %2868 = vmatpush1.bf16.msra.mxu0 %v1111
    %2869 = vmatprep.subr.bf16.mxu0 %v1120
    %2870 = vmatpush1.bf16.msra.mxu0 %v1119
    %2871 = vmatprep.subr.bf16.mxu0 %v1128
    %2872 = vmatpush1.bf16.msra.mxu0 %v1127
    %2873 = vmatprep.subr.bf16.mxu0 %v1136
    %2874 = vmatpush1.bf16.msra.mxu0 %v1135
    %2875 = vmatprep.subr.bf16.mxu0 %v1144
    %2876 = vmatpush1.bf16.msra.mxu0 %v1143
    %2877 = vmatprep.subr.bf16.mxu0 %v1152
    %2878 = vmatpush1.bf16.msra.mxu0 %v1151
    %2879 = vmatprep.subr.bf16.mxu0 %v1160
    %2880 = vmatpush1.bf16.msra.mxu0 %v1159
    %2881 = vmatprep.mubr.bf16.mxu0 %v2848
    %2882 = vmatmul.mubr.bf16.gmra.mrb[0].mxu0 %v2847
    %v2883 = vpop.f32.mrb[0].mxu0
    %v2884 = vadd.f32 0.0, %v2883
    %v2885 = vpop.f32.mrb[0].mxu0
    %v2886 = vadd.f32 0.0, %v2885
    %v2887 = vpop.f32.mrb[0].mxu0
    %v2888 = vpop.f32.mrb[0].mxu0
    %2889 = vdwg.mxu0
    %2890 = vmatprep.subr.bf16.mxu0 %v1042
    %2891 = vmatpush1.bf16.msra.mxu0 %v1041
    %2892 = vmatprep.subr.bf16.mxu0 %v1050
    %2893 = vmatpush1.bf16.msra.mxu0 %v1049
    %2894 = vmatprep.subr.bf16.mxu0 %v1058
    %2895 = vmatpush1.bf16.msra.mxu0 %v1057
    %2896 = vmatprep.subr.bf16.mxu0 %v1066
    %2897 = vmatpush1.bf16.msra.mxu0 %v1065
    %2898 = vmatprep.subr.bf16.mxu0 %v1074
    %2899 = vmatpush1.bf16.msra.mxu0 %v1073
    %2900 = vmatprep.subr.bf16.mxu0 %v1082
    %2901 = vmatpush1.bf16.msra.mxu0 %v1081
    %2902 = vmatprep.subr.bf16.mxu0 %v1090
    %2903 = vmatpush1.bf16.msra.mxu0 %v1089
    %2904 = vmatprep.subr.bf16.mxu0 %v1098
    %2905 = vmatpush1.bf16.msra.mxu0 %v1097
    %2906 = vmatprep.subr.bf16.mxu0 %v1106
    %2907 = vmatpush1.bf16.msra.mxu0 %v1105
    %2908 = vmatprep.subr.bf16.mxu0 %v1114
    %2909 = vmatpush1.bf16.msra.mxu0 %v1113
    %2910 = vmatprep.subr.bf16.mxu0 %v1122
    %2911 = vmatpush1.bf16.msra.mxu0 %v1121
    %2912 = vmatprep.subr.bf16.mxu0 %v1130
    %2913 = vmatpush1.bf16.msra.mxu0 %v1129
    %2914 = vmatprep.subr.bf16.mxu0 %v1138
    %2915 = vmatpush1.bf16.msra.mxu0 %v1137
    %2916 = vmatprep.subr.bf16.mxu0 %v1146
    %2917 = vmatpush1.bf16.msra.mxu0 %v1145
    %2918 = vmatprep.subr.bf16.mxu0 %v1154
    %2919 = vmatpush1.bf16.msra.mxu0 %v1153
    %2920 = vmatprep.subr.bf16.mxu0 %v1162
    %2921 = vmatpush1.bf16.msra.mxu0 %v1161
    %2922 = vmatprep.mubr.bf16.mxu0 %v2848
    %2923 = vmatmul.mubr.bf16.gmra.mrb[0].mxu0 %v2847
    %v2924 = vpop.f32.mrb[0].mxu0
    %v2925 = vadd.f32 0.0, %v2924
    %v2926 = vpop.f32.mrb[0].mxu0
    %v2927 = vadd.f32 0.0, %v2926
    %v2928 = vpop.f32.mrb[0].mxu0
    %v2929 = vpop.f32.mrb[0].mxu0
    %2930 = vdwg.mxu0
    %2931 = vmatprep.subr.bf16.mxu0 %v1044
    %2932 = vmatpush1.bf16.msra.mxu0 %v1043
    %2933 = vmatprep.subr.bf16.mxu0 %v1052
    %2934 = vmatpush1.bf16.msra.mxu0 %v1051
    %2935 = vmatprep.subr.bf16.mxu0 %v1060
    %2936 = vmatpush1.bf16.msra.mxu0 %v1059
    %2937 = vmatprep.subr.bf16.mxu0 %v1068
    %2938 = vmatpush1.bf16.msra.mxu0 %v1067
    %2939 = vmatprep.subr.bf16.mxu0 %v1076
    %2940 = vmatpush1.bf16.msra.mxu0 %v1075
    %2941 = vmatprep.subr.bf16.mxu0 %v1084
    %2942 = vmatpush1.bf16.msra.mxu0 %v1083
    %2943 = vmatprep.subr.bf16.mxu0 %v1092
    %2944 = vmatpush1.bf16.msra.mxu0 %v1091
    %2945 = vmatprep.subr.bf16.mxu0 %v1100
    %2946 = vmatpush1.bf16.msra.mxu0 %v1099
    %2947 = vmatprep.subr.bf16.mxu0 %v1108
    %2948 = vmatpush1.bf16.msra.mxu0 %v1107
    %2949 = vmatprep.subr.bf16.mxu0 %v1116
    %2950 = vmatpush1.bf16.msra.mxu0 %v1115
    %2951 = vmatprep.subr.bf16.mxu0 %v1124
    %2952 = vmatpush1.bf16.msra.mxu0 %v1123
    %2953 = vmatprep.subr.bf16.mxu0 %v1132
    %2954 = vmatpush1.bf16.msra.mxu0 %v1131
    %2955 = vmatprep.subr.bf16.mxu0 %v1140
    %2956 = vmatpush1.bf16.msra.mxu0 %v1139
    %2957 = vmatprep.subr.bf16.mxu0 %v1148
    %2958 = vmatpush1.bf16.msra.mxu0 %v1147
    %2959 = vmatprep.subr.bf16.mxu0 %v1156
    %2960 = vmatpush1.bf16.msra.mxu0 %v1155
    %2961 = vmatprep.subr.bf16.mxu0 %v1164
    %2962 = vmatpush1.bf16.msra.mxu0 %v1163
    %2963 = vmatprep.mubr.bf16.mxu0 %v2848
    %2964 = vmatmul.mubr.bf16.gmra.mrb[0].mxu0 %v2847
    %v2965 = vpop.f32.mrb[0].mxu0
    %v2966 = vadd.f32 0.0, %v2965
    %v2967 = vpop.f32.mrb[0].mxu0
    %v2968 = vadd.f32 0.0, %v2967
    %v2969 = vpop.f32.mrb[0].mxu0
    %v2970 = vpop.f32.mrb[0].mxu0
    %2971 = vdwg.mxu0
    %2972 = vmatprep.subr.bf16.mxu0 %v1046
    %2973 = vmatpush1.bf16.msra.mxu0 %v1045
    %2974 = vmatprep.subr.bf16.mxu0 %v1054
    %2975 = vmatpush1.bf16.msra.mxu0 %v1053
    %2976 = vmatprep.subr.bf16.mxu0 %v1062
    %2977 = vmatpush1.bf16.msra.mxu0 %v1061
    %2978 = vmatprep.subr.bf16.mxu0 %v1070
    %2979 = vmatpush1.bf16.msra.mxu0 %v1069
    %2980 = vmatprep.subr.bf16.mxu0 %v1078
    %2981 = vmatpush1.bf16.msra.mxu0 %v1077
    %2982 = vmatprep.subr.bf16.mxu0 %v1086
    %2983 = vmatpush1.bf16.msra.mxu0 %v1085
    %2984 = vmatprep.subr.bf16.mxu0 %v1094
    %2985 = vmatpush1.bf16.msra.mxu0 %v1093
    %2986 = vmatprep.subr.bf16.mxu0 %v1102
    %2987 = vmatpush1.bf16.msra.mxu0 %v1101
    %2988 = vmatprep.subr.bf16.mxu0 %v1110
    %2989 = vmatpush1.bf16.msra.mxu0 %v1109
    %2990 = vmatprep.subr.bf16.mxu0 %v1118
    %2991 = vmatpush1.bf16.msra.mxu0 %v1117
    %2992 = vmatprep.subr.bf16.mxu0 %v1126
    %2993 = vmatpush1.bf16.msra.mxu0 %v1125
    %2994 = vmatprep.subr.bf16.mxu0 %v1134
    %2995 = vmatpush1.bf16.msra.mxu0 %v1133
    %2996 = vmatprep.subr.bf16.mxu0 %v1142
    %2997 = vmatpush1.bf16.msra.mxu0 %v1141
    %2998 = vmatprep.subr.bf16.mxu0 %v1150
    %2999 = vmatpush1.bf16.msra.mxu0 %v1149
    %3000 = vmatprep.subr.bf16.mxu0 %v1158
    %3001 = vmatpush1.bf16.msra.mxu0 %v1157
    %3002 = vmatprep.subr.bf16.mxu0 %v1166
    %3003 = vmatpush1.bf16.msra.mxu0 %v1165
    %3004 = vmatprep.mubr.bf16.mxu0 %v2848
    %3005 = vmatmul.mubr.bf16.gmra.mrb[0].mxu0 %v2847
    %v3006 = vpop.f32.mrb[0].mxu0
    %v3007 = vadd.f32 0.0, %v3006
    %v3008 = vpop.f32.mrb[0].mxu0
    %v3009 = vadd.f32 0.0, %v3008
    %v3010 = vpop.f32.mrb[0].mxu0
    %v3011 = vpop.f32.mrb[0].mxu0
    %3012 = vdwg.mxu0
    %v3013 = vadd.f32 %v304, %v2884
    %v3014 = vadd.f32 %v306, %v2886
    %v3015 = vadd.f32 %v377, %v2925
    %v3016 = vadd.f32 %v379, %v2927
    %v3017 = vadd.f32 %v450, %v2966
    %v3018 = vadd.f32 %v452, %v2968
    %v3019 = vadd.f32 %v523, %v3007
    %v3020 = vadd.f32 %v525, %v3009
    %v3021 = vxor.u32 %v3013, 2147483648
    %v3022 = vxor.u32 %v3014, 2147483648
    %v3023 = vmul.f32 %v3021, 1.442695
    %v3024 = vpow.pop %v3023
    %v3025 = vmul.f32 %v3022, 1.442695
    %v3026 = vpow.pop %v3025
    %v3027 = vadd.f32 %v3024, 1.0
    %v3028 = vadd.f32 %v3026, 1.0
    %v3029 = vrcp.pop %v3027
    %v3030 = vmul.f32 1.0, %v3029
    %v3031 = vrcp.pop %v3028
    %v3032 = vmul.f32 1.0, %v3031
    %v3033 = vxor.u32 %v3015, 2147483648
    %v3034 = vxor.u32 %v3016, 2147483648
    %v3035 = vmul.f32 %v3033, 1.442695
    %v3036 = vpow.pop %v3035
    %v3037 = vmul.f32 %v3034, 1.442695
    %v3038 = vpow.pop %v3037
    %v3039 = vadd.f32 %v3036, 1.0
    %v3040 = vadd.f32 %v3038, 1.0
    %v3041 = vrcp.pop %v3039
    %v3042 = vmul.f32 1.0, %v3041
    %v3043 = vrcp.pop %v3040
    %v3044 = vmul.f32 1.0, %v3043
    %v3045 = vtanh.pop %v3017
    %v3046 = vtanh.pop %v3018
    %v3047 = vxor.u32 %v3019, 2147483648
    %v3048 = vxor.u32 %v3020, 2147483648
    %v3049 = vmul.f32 %v3047, 1.442695
    %v3050 = vpow.pop %v3049
    %v3051 = vmul.f32 %v3048, 1.442695
    %v3052 = vpow.pop %v3051
    %v3053 = vadd.f32 %v3050, 1.0
    %v3054 = vadd.f32 %v3052, 1.0
    %v3055 = vrcp.pop %v3053
    %v3056 = vmul.f32 1.0, %v3055
    %v3057 = vrcp.pop %v3054
    %v3058 = vmul.f32 1.0, %v3057
    %v3059 = vmul.f32 %v3042, %v2841
    %v3060 = vmul.f32 %v3044, %v2842
    %v3061 = vmul.f32 %v3030, %v3045
    %v3062 = vmul.f32 %v3032, %v3046
    %v3063 = vadd.f32 %v3059, %v3061
    %v3064 = vadd.f32 %v3060, %v3062
    %v3065 = vtanh.pop %v3063
    %v3066 = vtanh.pop %v3064
    %v3067 = vmul.f32 %v3056, %v3065
    %v3068 = vmul.f32 %v3058, %v3066
    %s3069 = smul.u32 4, 32
    %s3070 = smul.u32 %s3069, 6
    %s3071 = sshll.u32 %s3070, 4
    %3072 = dma.done [#allocation4], %s3071
    %s3073 = smul.u32 %s3069, 2
    %s3074 = sshll.u32 %s3073, 4
    %3075 = dma.done %s69, %s3074
    %v3076 = vpack.c.bf16 %v3067, %v3067
    %v3077 = vpack.c.bf16 %v3068, %v3068
    %v3078 = vld [vmem:[#allocation2] sm:$0xff]
    %v3079 = vld [vmem:[#allocation2 + $0x8] sm:$0xff]
    %v3080 = vld [vmem:[#allocation2 + $0x10] sm:$0xff]
    %v3081 = vld [vmem:[#allocation2 + $0x18] sm:$0xff]
    %v3082 = vld [vmem:[#allocation2 + $0x20] sm:$0xff]
    %v3083 = vld [vmem:[#allocation2 + $0x28] sm:$0xff]
    %v3084 = vld [vmem:[#allocation2 + $0x30] sm:$0xff]
    %v3085 = vld [vmem:[#allocation2 + $0x38] sm:$0xff]
    %v3086 = vld [vmem:[#allocation2 + $0x40] sm:$0xff]
    %v3087 = vld [vmem:[#allocation2 + $0x48] sm:$0xff]
    %v3088 = vld [vmem:[#allocation2 + $0x50] sm:$0xff]
    %v3089 = vld [vmem:[#allocation2 + $0x58] sm:$0xff]
    %v3090 = vld [vmem:[#allocation2 + $0x60] sm:$0xff]
    %v3091 = vld [vmem:[#allocation2 + $0x68] sm:$0xff]
    %v3092 = vld [vmem:[#allocation2 + $0x70] sm:$0xff]
    %v3093 = vld [vmem:[#allocation2 + $0x78] sm:$0xff]
    %v3094 = vld [vmem:[#allocation2 + $0x80] sm:$0xff]
    %v3095 = vld [vmem:[#allocation2 + $0x88] sm:$0xff]
    %v3096 = vld [vmem:[#allocation2 + $0x90] sm:$0xff]
    %v3097 = vld [vmem:[#allocation2 + $0x98] sm:$0xff]
    %v3098 = vld [vmem:[#allocation2 + $0xa0] sm:$0xff]
    %v3099 = vld [vmem:[#allocation2 + $0xa8] sm:$0xff]
    %v3100 = vld [vmem:[#allocation2 + $0xb0] sm:$0xff]
    %v3101 = vld [vmem:[#allocation2 + $0xb8] sm:$0xff]
    %v3102 = vld [vmem:[#allocation2 + $0xc0] sm:$0xff]
    %v3103 = vld [vmem:[#allocation2 + $0xc8] sm:$0xff]
    %v3104 = vld [vmem:[#allocation2 + $0xd0] sm:$0xff]
    %v3105 = vld [vmem:[#allocation2 + $0xd8] sm:$0xff]
    %v3106 = vld [vmem:[#allocation2 + $0xe0] sm:$0xff]
    %v3107 = vld [vmem:[#allocation2 + $0xe8] sm:$0xff]
    %v3108 = vld [vmem:[#allocation2 + $0xf0] sm:$0xff]
    %v3109 = vld [vmem:[#allocation2 + $0xf8] sm:$0xff]
    %v3110 = vld [vmem:[#allocation2 + $0x100] sm:$0xff]
    %v3111 = vld [vmem:[#allocation2 + $0x108] sm:$0xff]
    %v3112 = vld [vmem:[#allocation2 + $0x110] sm:$0xff]
    %v3113 = vld [vmem:[#allocation2 + $0x118] sm:$0xff]
    %v3114 = vld [vmem:[#allocation2 + $0x120] sm:$0xff]
    %v3115 = vld [vmem:[#allocation2 + $0x128] sm:$0xff]
    %v3116 = vld [vmem:[#allocation2 + $0x130] sm:$0xff]
    %v3117 = vld [vmem:[#allocation2 + $0x138] sm:$0xff]
    %v3118 = vld [vmem:[#allocation2 + $0x140] sm:$0xff]
    %v3119 = vld [vmem:[#allocation2 + $0x148] sm:$0xff]
    %v3120 = vld [vmem:[#allocation2 + $0x150] sm:$0xff]
    %v3121 = vld [vmem:[#allocation2 + $0x158] sm:$0xff]
    %v3122 = vld [vmem:[#allocation2 + $0x160] sm:$0xff]
    %v3123 = vld [vmem:[#allocation2 + $0x168] sm:$0xff]
    %v3124 = vld [vmem:[#allocation2 + $0x170] sm:$0xff]
    %v3125 = vld [vmem:[#allocation2 + $0x178] sm:$0xff]
    %v3126 = vld [vmem:[#allocation2 + $0x180] sm:$0xff]
    %v3127 = vld [vmem:[#allocation2 + $0x188] sm:$0xff]
    %v3128 = vld [vmem:[#allocation2 + $0x190] sm:$0xff]
    %v3129 = vld [vmem:[#allocation2 + $0x198] sm:$0xff]
    %v3130 = vld [vmem:[#allocation2 + $0x1a0] sm:$0xff]
    %v3131 = vld [vmem:[#allocation2 + $0x1a8] sm:$0xff]
    %v3132 = vld [vmem:[#allocation2 + $0x1b0] sm:$0xff]
    %v3133 = vld [vmem:[#allocation2 + $0x1b8] sm:$0xff]
    %v3134 = vld [vmem:[#allocation2 + $0x1c0] sm:$0xff]
    %v3135 = vld [vmem:[#allocation2 + $0x1c8] sm:$0xff]
    %v3136 = vld [vmem:[#allocation2 + $0x1d0] sm:$0xff]
    %v3137 = vld [vmem:[#allocation2 + $0x1d8] sm:$0xff]
    %v3138 = vld [vmem:[#allocation2 + $0x1e0] sm:$0xff]
    %v3139 = vld [vmem:[#allocation2 + $0x1e8] sm:$0xff]
    %v3140 = vld [vmem:[#allocation2 + $0x1f0] sm:$0xff]
    %v3141 = vld [vmem:[#allocation2 + $0x1f8] sm:$0xff]
    %v3142 = vld [vmem:[#allocation2 + $0x200] sm:$0xff]
    %v3143 = vld [vmem:[#allocation2 + $0x208] sm:$0xff]
    %v3144 = vld [vmem:[#allocation2 + $0x210] sm:$0xff]
    %v3145 = vld [vmem:[#allocation2 + $0x218] sm:$0xff]
    %v3146 = vld [vmem:[#allocation2 + $0x220] sm:$0xff]
    %v3147 = vld [vmem:[#allocation2 + $0x228] sm:$0xff]
    %v3148 = vld [vmem:[#allocation2 + $0x230] sm:$0xff]
    %v3149 = vld [vmem:[#allocation2 + $0x238] sm:$0xff]
    %v3150 = vld [vmem:[#allocation2 + $0x240] sm:$0xff]
    %v3151 = vld [vmem:[#allocation2 + $0x248] sm:$0xff]
    %v3152 = vld [vmem:[#allocation2 + $0x250] sm:$0xff]
    %v3153 = vld [vmem:[#allocation2 + $0x258] sm:$0xff]
    %v3154 = vld [vmem:[#allocation2 + $0x260] sm:$0xff]
    %v3155 = vld [vmem:[#allocation2 + $0x268] sm:$0xff]
    %v3156 = vld [vmem:[#allocation2 + $0x270] sm:$0xff]
    %v3157 = vld [vmem:[#allocation2 + $0x278] sm:$0xff]
    %v3158 = vld [vmem:[#allocation2 + $0x280] sm:$0xff]
    %v3159 = vld [vmem:[#allocation2 + $0x288] sm:$0xff]
    %v3160 = vld [vmem:[#allocation2 + $0x290] sm:$0xff]
    %v3161 = vld [vmem:[#allocation2 + $0x298] sm:$0xff]
    %v3162 = vld [vmem:[#allocation2 + $0x2a0] sm:$0xff]
    %v3163 = vld [vmem:[#allocation2 + $0x2a8] sm:$0xff]
    %v3164 = vld [vmem:[#allocation2 + $0x2b0] sm:$0xff]
    %v3165 = vld [vmem:[#allocation2 + $0x2b8] sm:$0xff]
    %v3166 = vld [vmem:[#allocation2 + $0x2c0] sm:$0xff]
    %v3167 = vld [vmem:[#allocation2 + $0x2c8] sm:$0xff]
    %v3168 = vld [vmem:[#allocation2 + $0x2d0] sm:$0xff]
    %v3169 = vld [vmem:[#allocation2 + $0x2d8] sm:$0xff]
    %v3170 = vld [vmem:[#allocation2 + $0x2e0] sm:$0xff]
    %v3171 = vld [vmem:[#allocation2 + $0x2e8] sm:$0xff]
    %v3172 = vld [vmem:[#allocation2 + $0x2f0] sm:$0xff]
    %v3173 = vld [vmem:[#allocation2 + $0x2f8] sm:$0xff]
    %3174 = vmatprep.subr.bf16.mxu0 %v3079
    %3175 = vmatpush1.bf16.msra.mxu0 %v3078
    %3176 = vmatprep.subr.bf16.mxu0 %v3085
    %3177 = vmatpush1.bf16.msra.mxu0 %v3084
    %3178 = vmatprep.subr.bf16.mxu0 %v3091
    %3179 = vmatpush1.bf16.msra.mxu0 %v3090
    %3180 = vmatprep.subr.bf16.mxu0 %v3097
    %3181 = vmatpush1.bf16.msra.mxu0 %v3096
    %3182 = vmatprep.subr.bf16.mxu0 %v3103
    %3183 = vmatpush1.bf16.msra.mxu0 %v3102
    %3184 = vmatprep.subr.bf16.mxu0 %v3109
    %3185 = vmatpush1.bf16.msra.mxu0 %v3108
    %3186 = vmatprep.subr.bf16.mxu0 %v3115
    %3187 = vmatpush1.bf16.msra.mxu0 %v3114
    %3188 = vmatprep.subr.bf16.mxu0 %v3121
    %3189 = vmatpush1.bf16.msra.mxu0 %v3120
    %3190 = vmatprep.subr.bf16.mxu0 %v3127
    %3191 = vmatpush1.bf16.msra.mxu0 %v3126
    %3192 = vmatprep.subr.bf16.mxu0 %v3133
    %3193 = vmatpush1.bf16.msra.mxu0 %v3132
    %3194 = vmatprep.subr.bf16.mxu0 %v3139
    %3195 = vmatpush1.bf16.msra.mxu0 %v3138
    %3196 = vmatprep.subr.bf16.mxu0 %v3145
    %3197 = vmatpush1.bf16.msra.mxu0 %v3144
    %3198 = vmatprep.subr.bf16.mxu0 %v3151
    %3199 = vmatpush1.bf16.msra.mxu0 %v3150
    %3200 = vmatprep.subr.bf16.mxu0 %v3157
    %3201 = vmatpush1.bf16.msra.mxu0 %v3156
    %3202 = vmatprep.subr.bf16.mxu0 %v3163
    %3203 = vmatpush1.bf16.msra.mxu0 %v3162
    %3204 = vmatprep.subr.bf16.mxu0 %v3169
    %3205 = vmatpush1.bf16.msra.mxu0 %v3168
    %3206 = vmatprep.mubr.bf16.mxu0 %v3077
    %3207 = vmatmul.mubr.bf16.gmra.mrb[0].mxu0 %v3076
    %v3208 = vpop.f32.mrb[0].mxu0
    %v3209 = vadd.f32 0.0, %v3208
    %v3210 = vpop.f32.mrb[0].mxu0
    %v3211 = vadd.f32 0.0, %v3210
    %v3212 = vpop.f32.mrb[0].mxu0
    %v3213 = vpop.f32.mrb[0].mxu0
    %3214 = vdwg.mxu0
    %3215 = vmatprep.subr.bf16.mxu0 %v3081
    %3216 = vmatpush1.bf16.msra.mxu0 %v3080
    %3217 = vmatprep.subr.bf16.mxu0 %v3087
    %3218 = vmatpush1.bf16.msra.mxu0 %v3086
    %3219 = vmatprep.subr.bf16.mxu0 %v3093
    %3220 = vmatpush1.bf16.msra.mxu0 %v3092
    %3221 = vmatprep.subr.bf16.mxu0 %v3099
    %3222 = vmatpush1.bf16.msra.mxu0 %v3098
    %3223 = vmatprep.subr.bf16.mxu0 %v3105
    %3224 = vmatpush1.bf16.msra.mxu0 %v3104
    %3225 = vmatprep.subr.bf16.mxu0 %v3111
    %3226 = vmatpush1.bf16.msra.mxu0 %v3110
    %3227 = vmatprep.subr.bf16.mxu0 %v3117
    %3228 = vmatpush1.bf16.msra.mxu0 %v3116
    %3229 = vmatprep.subr.bf16.mxu0 %v3123
    %3230 = vmatpush1.bf16.msra.mxu0 %v3122
    %3231 = vmatprep.subr.bf16.mxu0 %v3129
    %3232 = vmatpush1.bf16.msra.mxu0 %v3128
    %3233 = vmatprep.subr.bf16.mxu0 %v3135
    %3234 = vmatpush1.bf16.msra.mxu0 %v3134
    %3235 = vmatprep.subr.bf16.mxu0 %v3141
    %3236 = vmatpush1.bf16.msra.mxu0 %v3140
    %3237 = vmatprep.subr.bf16.mxu0 %v3147
    %3238 = vmatpush1.bf16.msra.mxu0 %v3146
    %3239 = vmatprep.subr.bf16.mxu0 %v3153
    %3240 = vmatpush1.bf16.msra.mxu0 %v3152
    %3241 = vmatprep.subr.bf16.mxu0 %v3159
    %3242 = vmatpush1.bf16.msra.mxu0 %v3158
    %3243 = vmatprep.subr.bf16.mxu0 %v3165
    %3244 = vmatpush1.bf16.msra.mxu0 %v3164
    %3245 = vmatprep.subr.bf16.mxu0 %v3171
    %3246 = vmatpush1.bf16.msra.mxu0 %v3170
    %3247 = vmatprep.mubr.bf16.mxu0 %v3077
    %3248 = vmatmul.mubr.bf16.gmra.mrb[0].mxu0 %v3076
    %v3249 = vpop.f32.mrb[0].mxu0
    %v3250 = vadd.f32 0.0, %v3249
    %v3251 = vpop.f32.mrb[0].mxu0
    %v3252 = vadd.f32 0.0, %v3251
    %v3253 = vpop.f32.mrb[0].mxu0
    %v3254 = vpop.f32.mrb[0].mxu0
    %3255 = vdwg.mxu0
    %3256 = vmatprep.subr.bf16.mxu0 %v3083
    %3257 = vmatpush1.bf16.msra.mxu0 %v3082
    %3258 = vmatprep.subr.bf16.mxu0 %v3089
    %3259 = vmatpush1.bf16.msra.mxu0 %v3088
    %3260 = vmatprep.subr.bf16.mxu0 %v3095
    %3261 = vmatpush1.bf16.msra.mxu0 %v3094
    %3262 = vmatprep.subr.bf16.mxu0 %v3101
    %3263 = vmatpush1.bf16.msra.mxu0 %v3100
    %3264 = vmatprep.subr.bf16.mxu0 %v3107
    %3265 = vmatpush1.bf16.msra.mxu0 %v3106
    %3266 = vmatprep.subr.bf16.mxu0 %v3113
    %3267 = vmatpush1.bf16.msra.mxu0 %v3112
    %3268 = vmatprep.subr.bf16.mxu0 %v3119
    %3269 = vmatpush1.bf16.msra.mxu0 %v3118
    %3270 = vmatprep.subr.bf16.mxu0 %v3125
    %3271 = vmatpush1.bf16.msra.mxu0 %v3124
    %3272 = vmatprep.subr.bf16.mxu0 %v3131
    %3273 = vmatpush1.bf16.msra.mxu0 %v3130
    %3274 = vmatprep.subr.bf16.mxu0 %v3137
    %3275 = vmatpush1.bf16.msra.mxu0 %v3136
    %3276 = vmatprep.subr.bf16.mxu0 %v3143
    %3277 = vmatpush1.bf16.msra.mxu0 %v3142
    %3278 = vmatprep.subr.bf16.mxu0 %v3149
    %3279 = vmatpush1.bf16.msra.mxu0 %v3148
    %3280 = vmatprep.subr.bf16.mxu0 %v3155
    %3281 = vmatpush1.bf16.msra.mxu0 %v3154
    %3282 = vmatprep.subr.bf16.mxu0 %v3161
    %3283 = vmatpush1.bf16.msra.mxu0 %v3160
    %3284 = vmatprep.subr.bf16.mxu0 %v3167
    %3285 = vmatpush1.bf16.msra.mxu0 %v3166
    %3286 = vmatprep.subr.bf16.mxu0 %v3173
    %3287 = vmatpush1.bf16.msra.mxu0 %v3172
    %3288 = vmatprep.mubr.bf16.mxu0 %v3077
    %3289 = vmatmul.mubr.bf16.gmra.mrb[0].mxu0 %v3076
    %v3290 = vpop.f32.mrb[0].mxu0
    %v3291 = vadd.f32 0.0, %v3290
    %v3292 = vpop.f32.mrb[0].mxu0
    %v3293 = vadd.f32 0.0, %v3292
    %v3294 = vpop.f32.mrb[0].mxu0
    %v3295 = vpop.f32.mrb[0].mxu0
    %3296 = vdwg.mxu0
    %3297 = vmatprep.subr.mxu0 %v3252
    %3298 = vmatpush1.xpose.msra.mxu0 %v3250
    %3299 = vmatprep.subr.mxu0 0.0
    %3300 = vmatpush1.xpose.msra.mxu0 0.0
    %3301 = vmatprep.subr.mxu0 0.0
    %3302 = vmatpush1.xpose.msra.mxu0 0.0
    %3303 = vmatprep.subr.mxu0 0.0
    %3304 = vmatpush1.xpose.msra.mxu0 0.0
    %3305 = vmatprep.subr.mxu0 0.0
    %3306 = vmatpush1.xpose.msra.mxu0 0.0
    %3307 = vmatprep.subr.mxu0 0.0
    %3308 = vmatpush1.xpose.msra.mxu0 0.0
    %3309 = vmatprep.subr.mxu0 0.0
    %3310 = vmatpush1.xpose.msra.mxu0 0.0
    %3311 = vmatprep.subr.mxu0 0.0
    %3312 = vmatpush1.xpose.msra.mxu0 0.0
    %3313 = vmatprep.subr.mxu0 0.0
    %3314 = vmatpush1.xpose.msra.mxu0 0.0
    %3315 = vmatprep.subr.mxu0 0.0
    %3316 = vmatpush1.xpose.msra.mxu0 0.0
    %3317 = vmatprep.subr.mxu0 0.0
    %3318 = vmatpush1.xpose.msra.mxu0 0.0
    %3319 = vmatprep.subr.mxu0 0.0
    %3320 = vmatpush1.xpose.msra.mxu0 0.0
    %3321 = vmatprep.subr.mxu0 0.0
    %3322 = vmatpush1.xpose.msra.mxu0 0.0
    %3323 = vmatprep.subr.mxu0 0.0
    %3324 = vmatpush1.xpose.msra.mxu0 0.0
    %3325 = vmatprep.subr.mxu0 0.0
    %3326 = vmatpush1.xpose.msra.mxu0 0.0
    %3327 = vmatprep.subr.mxu0 0.0
    %3328 = vmatpush1.xpose.msra.mxu0 0.0
    %3329 = vmatprep.subr.mxu0 0.0
    %3330 = vmatpush1.xpose.msra.mxu0 0.0
    %3331 = vmatprep.subr.mxu0 0.0
    %3332 = vmatpush1.xpose.msra.mxu0 0.0
    %3333 = vmatprep.subr.mxu0 0.0
    %3334 = vmatpush1.xpose.msra.mxu0 0.0
    %3335 = vmatprep.subr.mxu0 0.0
    %3336 = vmatpush1.xpose.msra.mxu0 0.0
    %3337 = vmatprep.subr.mxu0 0.0
    %3338 = vmatpush1.xpose.msra.mxu0 0.0
    %3339 = vmatprep.subr.mxu0 0.0
    %3340 = vmatpush1.xpose.msra.mxu0 0.0
    %3341 = vmatprep.subr.mxu0 0.0
    %3342 = vmatpush1.xpose.msra.mxu0 0.0
    %3343 = vmatprep.subr.mxu0 0.0
    %3344 = vmatpush1.xpose.msra.mxu0 0.0
    %3345 = vmatprep.subr.mxu0 0.0
    %3346 = vmatpush1.xpose.msra.mxu0 0.0
    %3347 = vmatprep.subr.mxu0 0.0
    %3348 = vmatpush1.xpose.msra.mxu0 0.0
    %3349 = vmatprep.subr.mxu0 0.0
    %3350 = vmatpush1.xpose.msra.mxu0 0.0
    %3351 = vmatprep.subr.mxu0 0.0
    %3352 = vmatpush1.xpose.msra.mxu0 0.0
    %3353 = vmatprep.subr.mxu0 0.0
    %3354 = vmatpush1.xpose.msra.mxu0 0.0
    %3355 = vmatprep.subr.mxu0 0.0
    %3356 = vmatpush1.xpose.msra.mxu0 0.0
    %3357 = vmatprep.subr.mxu0 0.0
    %3358 = vmatpush1.xpose.msra.mxu0 0.0
    %3359 = vmatprep.subr.mxu0 0.0
    %3360 = vmatpush1.xpose.msra.mxu0 0.0
    %3361 = vmatprep.mubr.f32.mxu0 %v3211
    %3362 = vmatmul.mubr.f32.gmra.mrb[0].mxu0 %v3209
    %v3363 = vpop.f32.mrb[0].mxu0
    %v3364 = vadd.f32 0.0, %v3363
    %v3365 = vpop.f32.mrb[0].mxu0
    %3366 = vdwg.mxu0
    %v3367 = vmul.f32 %v3364, 0.0625
    %v3368 = vlaneseq
    %v3369 = vand.u32 %v3368, 127
    %vm3370 = vcmp.lt.s32.totalorder %v3369, 2
    %v3371 = vsel %vm3370, %v3367, -1e+30
    %vm3372 = vcmask 64512
    %v3373 = vsel %vm3372, %v3371, -inf
    %3374 = vmax.xlane.f32.xlu0 %v3373
    %v3375 = vpop.xlane.xlu0 %3374
    %v3376 = vsub.f32 %v3371, %v3375
    %v3377 = vmul.f32 %v3376, 1.442695
    %v3378 = vpow.pop %v3377
    %v3379 = vsel %vm3372, %v3378, 0.0
    %3380 = vadd.xlane.f32.xlu0 %v3379
    %v3381 = vpop.xlane.xlu0 %3380
    %v3382 = vrcp.pop %v3381
    %v3383 = vmul.f32 %v3378, %v3382
    %v3385 = vsel %vm3372, %v3383, 0
    %3387 = vmatprep.subr.mxu0 %v3293
    %3388 = vmatpush1.msra.mxu0 %v3291
    %3389 = vmatprep.subr.mxu0 0.0
    %3390 = vmatpush1.msra.mxu0 0.0
    %3391 = vmatprep.subr.mxu0 0.0
    %3392 = vmatpush1.msra.mxu0 0.0
    %3393 = vmatprep.subr.mxu0 0.0
    %3394 = vmatpush1.msra.mxu0 0.0
    %3395 = vmatprep.subr.mxu0 0.0
    %3396 = vmatpush1.msra.mxu0 0.0
    %3397 = vmatprep.subr.mxu0 0.0
    %3398 = vmatpush1.msra.mxu0 0.0
    %3399 = vmatprep.subr.mxu0 0.0
    %3400 = vmatpush1.msra.mxu0 0.0
    %3401 = vmatprep.subr.mxu0 0.0
    %3402 = vmatpush1.msra.mxu0 0.0
    %3403 = vmatprep.subr.mxu0 0.0
    %3404 = vmatpush1.msra.mxu0 0.0
    %3405 = vmatprep.subr.mxu0 0.0
    %3406 = vmatpush1.msra.mxu0 0.0
    %3407 = vmatprep.subr.mxu0 0.0
    %3408 = vmatpush1.msra.mxu0 0.0
    %3409 = vmatprep.subr.mxu0 0.0
    %3410 = vmatpush1.msra.mxu0 0.0
    %3411 = vmatprep.subr.mxu0 0.0
    %3412 = vmatpush1.msra.mxu0 0.0
    %3413 = vmatprep.subr.mxu0 0.0
    %3414 = vmatpush1.msra.mxu0 0.0
    %3415 = vmatprep.subr.mxu0 0.0
    %3416 = vmatpush1.msra.mxu0 0.0
    %3417 = vmatprep.subr.mxu0 0.0
    %3418 = vmatpush1.msra.mxu0 0.0
    %3419 = vmatprep.subr.mxu0 0.0
    %3420 = vmatpush1.msra.mxu0 0.0
    %3421 = vmatprep.subr.mxu0 0.0
    %3422 = vmatpush1.msra.mxu0 0.0
    %3423 = vmatprep.subr.mxu0 0.0
    %3424 = vmatpush1.msra.mxu0 0.0
    %3425 = vmatprep.subr.mxu0 0.0
    %3426 = vmatpush1.msra.mxu0 0.0
    %3427 = vmatprep.subr.mxu0 0.0
    %3428 = vmatpush1.msra.mxu0 0.0
    %3429 = vmatprep.subr.mxu0 0.0
    %3430 = vmatpush1.msra.mxu0 0.0
    %3431 = vmatprep.subr.mxu0 0.0
    %3432 = vmatpush1.msra.mxu0 0.0
    %3433 = vmatprep.subr.mxu0 0.0
    %3434 = vmatpush1.msra.mxu0 0.0
    %3435 = vmatprep.subr.mxu0 0.0
    %3436 = vmatpush1.msra.mxu0 0.0
    %3437 = vmatprep.subr.mxu0 0.0
    %3438 = vmatpush1.msra.mxu0 0.0
    %3439 = vmatprep.subr.mxu0 0.0
    %3440 = vmatpush1.msra.mxu0 0.0
    %3441 = vmatprep.subr.mxu0 0.0
    %3442 = vmatpush1.msra.mxu0 0.0
    %3443 = vmatprep.subr.mxu0 0.0
    %3444 = vmatpush1.msra.mxu0 0.0
    %3445 = vmatprep.subr.mxu0 0.0
    %3446 = vmatpush1.msra.mxu0 0.0
    %3447 = vmatprep.subr.mxu0 0.0
    %3448 = vmatpush1.msra.mxu0 0.0
    %3449 = vmatprep.subr.mxu0 0.0
    %3450 = vmatpush1.msra.mxu0 0.0
    %3451 = vmatprep.mubr.f32.mxu0 0.0
    %3452 = vmatmul.mubr.f32.gmra.mrb[0].mxu0 %v3385
    %v3453 = vpop.f32.mrb[0].mxu0
    %v3454 = vadd.f32 0.0, %v3453
    %v3455 = vpop.f32.mrb[0].mxu0
    %v3456 = vadd.f32 0.0, %v3455
    %3457 = vdwg.mxu0
    %v3458 = vpack.c.bf16 %v3454, %v3454
    %v3459 = vpack.c.bf16 %v3456, %v3456
    %v3460 = vld [vmem:[#allocation3] sm:$0xff]
    %v3461 = vld [vmem:[#allocation3 + $0x8] sm:$0xff]
    %v3462 = vld [vmem:[#allocation3 + $0x10] sm:$0xff]
    %v3463 = vld [vmem:[#allocation3 + $0x18] sm:$0xff]
    %v3464 = vld [vmem:[#allocation3 + $0x20] sm:$0xff]
    %v3465 = vld [vmem:[#allocation3 + $0x28] sm:$0xff]
    %v3466 = vld [vmem:[#allocation3 + $0x30] sm:$0xff]
    %v3467 = vld [vmem:[#allocation3 + $0x38] sm:$0xff]
    %v3468 = vld [vmem:[#allocation3 + $0x40] sm:$0xff]
    %v3469 = vld [vmem:[#allocation3 + $0x48] sm:$0xff]
    %v3470 = vld [vmem:[#allocation3 + $0x50] sm:$0xff]
    %v3471 = vld [vmem:[#allocation3 + $0x58] sm:$0xff]
    %v3472 = vld [vmem:[#allocation3 + $0x60] sm:$0xff]
    %v3473 = vld [vmem:[#allocation3 + $0x68] sm:$0xff]
    %v3474 = vld [vmem:[#allocation3 + $0x70] sm:$0xff]
    %v3475 = vld [vmem:[#allocation3 + $0x78] sm:$0xff]
    %v3476 = vld [vmem:[#allocation3 + $0x80] sm:$0xff]
    %v3477 = vld [vmem:[#allocation3 + $0x88] sm:$0xff]
    %v3478 = vld [vmem:[#allocation3 + $0x90] sm:$0xff]
    %v3479 = vld [vmem:[#allocation3 + $0x98] sm:$0xff]
    %v3480 = vld [vmem:[#allocation3 + $0xa0] sm:$0xff]
    %v3481 = vld [vmem:[#allocation3 + $0xa8] sm:$0xff]
    %v3482 = vld [vmem:[#allocation3 + $0xb0] sm:$0xff]
    %v3483 = vld [vmem:[#allocation3 + $0xb8] sm:$0xff]
    %v3484 = vld [vmem:[#allocation3 + $0xc0] sm:$0xff]
    %v3485 = vld [vmem:[#allocation3 + $0xc8] sm:$0xff]
    %v3486 = vld [vmem:[#allocation3 + $0xd0] sm:$0xff]
    %v3487 = vld [vmem:[#allocation3 + $0xd8] sm:$0xff]
    %v3488 = vld [vmem:[#allocation3 + $0xe0] sm:$0xff]
    %v3489 = vld [vmem:[#allocation3 + $0xe8] sm:$0xff]
    %v3490 = vld [vmem:[#allocation3 + $0xf0] sm:$0xff]
    %v3491 = vld [vmem:[#allocation3 + $0xf8] sm:$0xff]
    %3492 = vmatprep.subr.bf16.mxu0 %v3461
    %3493 = vmatpush1.bf16.msra.mxu0 %v3460
    %3494 = vmatprep.subr.bf16.mxu0 %v3463
    %3495 = vmatpush1.bf16.msra.mxu0 %v3462
    %3496 = vmatprep.subr.bf16.mxu0 %v3465
    %3497 = vmatpush1.bf16.msra.mxu0 %v3464
    %3498 = vmatprep.subr.bf16.mxu0 %v3467
    %3499 = vmatpush1.bf16.msra.mxu0 %v3466
    %3500 = vmatprep.subr.bf16.mxu0 %v3469
    %3501 = vmatpush1.bf16.msra.mxu0 %v3468
    %3502 = vmatprep.subr.bf16.mxu0 %v3471
    %3503 = vmatpush1.bf16.msra.mxu0 %v3470
    %3504 = vmatprep.subr.bf16.mxu0 %v3473
    %3505 = vmatpush1.bf16.msra.mxu0 %v3472
    %3506 = vmatprep.subr.bf16.mxu0 %v3475
    %3507 = vmatpush1.bf16.msra.mxu0 %v3474
    %3508 = vmatprep.subr.bf16.mxu0 %v3477
    %3509 = vmatpush1.bf16.msra.mxu0 %v3476
    %3510 = vmatprep.subr.bf16.mxu0 %v3479
    %3511 = vmatpush1.bf16.msra.mxu0 %v3478
    %3512 = vmatprep.subr.bf16.mxu0 %v3481
    %3513 = vmatpush1.bf16.msra.mxu0 %v3480
    %3514 = vmatprep.subr.bf16.mxu0 %v3483
    %3515 = vmatpush1.bf16.msra.mxu0 %v3482
    %3516 = vmatprep.subr.bf16.mxu0 %v3485
    %3517 = vmatpush1.bf16.msra.mxu0 %v3484
    %3518 = vmatprep.subr.bf16.mxu0 %v3487
    %3519 = vmatpush1.bf16.msra.mxu0 %v3486
    %3520 = vmatprep.subr.bf16.mxu0 %v3489
    %3521 = vmatpush1.bf16.msra.mxu0 %v3488
    %3522 = vmatprep.subr.bf16.mxu0 %v3491
    %3523 = vmatpush1.bf16.msra.mxu0 %v3490
    %3524 = vmatprep.mubr.bf16.mxu0 %v3459
    %3525 = vmatmul.mubr.bf16.gmra.mrb[0].mxu0 %v3458
    %v3526 = vpop.f32.mrb[0].mxu0
    %v3527 = vadd.f32 0.0, %v3526
    %v3528 = vpop.f32.mrb[0].mxu0
    %v3529 = vadd.f32 0.0, %v3528
    %v3530 = vpop.f32.mrb[0].mxu0
    %v3531 = vpop.f32.mrb[0].mxu0
    %3532 = vdwg.mxu0
    %3533 = vst [vmem:[%s6] sm:$0xff] %v3527
    %3534 = vst [vmem:[%s6 + $0x8] sm:$0xff] %v3529
    // Predicated region
    $region22: #{lstmmodule1_forward.1} parent=1 // pred_check
      _
    $region23: #{lstmmodule1_forward.1} parent=1 // pred_check_branch
      %3536 = sbr.rel (0) target = $region25
    $region24: #{lstmmodule1_forward.1} parent=1 // pred_region
      _
    $region25: #{lstmmodule1_forward.1} parent=1 // pred_fallthru
      _
    // Predicated region
    $region26: #{lstmmodule1_forward.1} parent=1 // pred_check
      _
    $region27: #{lstmmodule1_forward.1} parent=1 // pred_check_branch
      %3538 = sbr.rel (0) target = $region29
    $region28: #{lstmmodule1_forward.1} parent=1 // pred_region
      _
    $region29: #{lstmmodule1_forward.1} parent=1 // pred_fallthru
      _
    %3539 = vsyncpa [#allocation6], 1
  %3540 = vsyncmov [#allocation4]
  %s3541 = vpop.sfrf %3540
  %p3542 = scmp.eq.s32.totalorder %s3541, 0
  %p3543 = pneg %p3542
  %3545 = shalt.err (%p3543)
  %s3546 = scalar_lea.sflag [#allocation4], 1
  %3547 = vsyncmov %s3546
  %s3548 = vpop.sfrf %3547
  %p3549 = scmp.eq.s32.totalorder %s3548, 0
  %p3550 = pneg %p3549
  %3552 = shalt.err (%p3550)

</llo_original>
